<compile_context>
chip_gen: v7x
topology: tpu7x:2x2x1
jax: 0.10.0
libtpu: 0.0.40
codegen_flags: <defaults>
</compile_context>

<pallas_src>
import jax
import jax.numpy as jnp
from jax.experimental import pallas as pl
from jax.experimental.pallas import tpu as pltpu


H1 = 512
H2 = 256
N_PAD = 128  # lane-dense padded width of the final (256 -> 1) layer


def _disc_kernel(x_ref, w1_ref, b1_ref, w2_ref, b2_ref, w3_ref, b3_ref, o_ref):
    x = x_ref[...]                                                   # (TM, D) bf16

    # Layer 1: Linear(D, 512) + LeakyReLU(0.2)   (bf16 MXU, f32 accumulate)
    h1 = jnp.dot(x, w1_ref[...], preferred_element_type=jnp.float32)
    h1 = h1 + b1_ref[...]                                            # (TM, 512) f32
    h1 = jnp.where(h1 > 0, h1, 0.2 * h1)

    # Layer 2: Linear(512, 256) + LeakyReLU(0.2)
    h2 = jnp.dot(h1.astype(jnp.bfloat16), w2_ref[...],
                 preferred_element_type=jnp.float32)
    h2 = h2 + b2_ref[...]                                            # (TM, 256) f32
    h2 = jnp.where(h2 > 0, h2, 0.2 * h2)

    # Layer 3: Linear(256, 128-padded) + Sigmoid (only column 0 is real).
    h3 = jnp.dot(h2.astype(jnp.bfloat16), w3_ref[...],
                 preferred_element_type=jnp.float32)
    h3 = h3 + b3_ref[...]                                            # (TM, 128) f32

    # Numerically stable sigmoid: exp only sees non-positive arguments.
    z = jnp.exp(-jnp.abs(h3))                                        # EUP
    o_ref[...] = jnp.where(h3 >= 0, 1.0, z) / (1.0 + z)              # in [0, 1]


def discriminator_forward(img, params, *, tm=128):
    """img: (B, C, H, W) float32 -> validity: (B, 1) float32."""
    b = img.shape[0]
    x_flat = img.reshape(b, -1)                                      # (B, D)
    d = x_flat.shape[1]
    w1, b1, w2, b2, w3, b3 = params

    # Pad the batch up to a multiple of the MXU-aligned M tile.
    b_pad = pl.cdiv(b, tm) * tm
    if b_pad != b:
        x_flat = jnp.pad(x_flat, ((0, b_pad - b), (0, 0)))

    # bf16 matmul operands (f32 accumulation inside the kernel).
    x_bf = x_flat.astype(jnp.bfloat16)
    w1b = w1.astype(jnp.bfloat16)
    w2b = w2.astype(jnp.bfloat16)

    # Lane-dense final layer: zero-pad (256,1)->(256,128) and (1,1)->(1,128).
    w3p = jnp.zeros((H2, N_PAD), jnp.bfloat16).at[:, :1].set(w3.astype(jnp.bfloat16))
    b3p = jnp.zeros((1, N_PAD), jnp.float32).at[:, :1].set(b3)

    grid = (b_pad // tm,)
    out = pl.pallas_call(
        _disc_kernel,
        out_shape=jax.ShapeDtypeStruct((b_pad, N_PAD), jnp.float32),
        grid=grid,
        in_specs=[
            pl.BlockSpec((tm, d), lambda i: (i, 0)),        # x: varies with batch tile
            pl.BlockSpec((d, H1), lambda i: (0, 0)),        # weights/biases: constant
            pl.BlockSpec((1, H1), lambda i: (0, 0)),        #   block -> loaded once,
            pl.BlockSpec((H1, H2), lambda i: (0, 0)),       #   stay VMEM-resident
            pl.BlockSpec((1, H2), lambda i: (0, 0)),
            pl.BlockSpec((H2, N_PAD), lambda i: (0, 0)),
            pl.BlockSpec((1, N_PAD), lambda i: (0, 0)),
        ],
        out_specs=pl.BlockSpec((tm, N_PAD), lambda i: (i, 0)),
        compiler_params=pltpu.CompilerParams(
            dimension_semantics=("parallel",)),             # v7x: 2 TCs split batch
    )(x_bf, w1b, b1, w2b, b2, w3p, b3p)

    # Strip batch padding and the lane padding of the final layer.
    return out[:b, :1]


def init_params(key, in_dim):
    """Deterministic synthetic parameters (PyTorch-Linear-like uniform init)."""
    dims = [(in_dim, H1), (H1, H2), (H2, 1)]
    params = []
    for (fan_in, fan_out) in dims:
        key, kw, kb = jax.random.split(key, 3)
        bound = 1.0 / jnp.sqrt(fan_in)
        w = jax.random.uniform(kw, (fan_in, fan_out), jnp.float32, -bound, bound)
        bias = jax.random.uniform(kb, (1, fan_out), jnp.float32, -bound, bound)
        params += [w, bias]
    return tuple(params)


if __name__ == "__main__":
    key = jax.random.PRNGKey(0)
    k_img, k_params = jax.random.split(key)

    # Small, module-consistent shapes: batch=2, img_shape=(4, 16, 16) -> D=1024
    B, C, H, W = 2, 4, 16, 16
    img = jax.random.normal(k_img, (B, C, H, W), jnp.float32)
    params = init_params(k_params, C * H * W)

    validity = discriminator_forward(img, params)
    jax.block_until_ready(validity)

    assert validity.shape == (B, 1)
    assert bool(jnp.all((validity >= 0.0) & (validity <= 1.0)))
    print("KERNEL_OK")
</pallas_src>

<mosaic_0001>
module attributes {stable_mosaic.version = 11 : i64} {
  func.func @_disc_kernel(%arg0: i32, %arg1: memref<128x1024xbf16, #tpu.memory_space<vmem>>, %arg2: memref<1024x512xbf16, #tpu.memory_space<vmem>>, %arg3: memref<1x512xf32, #tpu.memory_space<vmem>>, %arg4: memref<512x256xbf16, #tpu.memory_space<vmem>>, %arg5: memref<1x256xf32, #tpu.memory_space<vmem>>, %arg6: memref<256x128xbf16, #tpu.memory_space<vmem>>, %arg7: memref<1x128xf32, #tpu.memory_space<vmem>>, %arg8: memref<128x128xf32, #tpu.memory_space<vmem>>) attributes {dimension_semantics = [#tpu.dimension_semantics<parallel>], iteration_bounds = array<i64: 1>, scalar_prefetch = 0 : i64, scratch_operands = 0 : i64, tpu.core_type = #tpu.core_type<tc>, window_params = [{transform_indices = @transform_0, window_bounds = array<i64: 128, 1024>}, {pipeline_mode = #tpu.pipeline_mode<synchronous>, transform_indices = @transform_1, window_bounds = array<i64: 1024, 512>}, {pipeline_mode = #tpu.pipeline_mode<synchronous>, transform_indices = @transform_2, window_bounds = array<i64: 1, 512>}, {pipeline_mode = #tpu.pipeline_mode<synchronous>, transform_indices = @transform_3, window_bounds = array<i64: 512, 256>}, {pipeline_mode = #tpu.pipeline_mode<synchronous>, transform_indices = @transform_4, window_bounds = array<i64: 1, 256>}, {pipeline_mode = #tpu.pipeline_mode<synchronous>, transform_indices = @transform_5, window_bounds = array<i64: 256, 128>}, {pipeline_mode = #tpu.pipeline_mode<synchronous>, transform_indices = @transform_6, window_bounds = array<i64: 1, 128>}, {transform_indices = @transform_7, window_bounds = array<i64: 128, 128>}]} {
    %c0 = arith.constant 0 : index
    %c0_0 = arith.constant 0 : index
    %0 = vector.load %arg1[%c0, %c0_0] : memref<128x1024xbf16, #tpu.memory_space<vmem>>, vector<128x1024xbf16>
    %c0_1 = arith.constant 0 : index
    %c0_2 = arith.constant 0 : index
    %1 = vector.load %arg2[%c0_1, %c0_2] : memref<1024x512xbf16, #tpu.memory_space<vmem>>, vector<1024x512xbf16>
    %cst = arith.constant dense<0.000000e+00> : vector<128x512xf32>
    %2 = tpu.matmul %0, %1, %cst {dimension_numbers = #tpu.dot_dimension_numbers<[1], [0], [0], [1], [0, 0, 1, 1], [], []>} : vector<128x1024xbf16>, vector<1024x512xbf16>, vector<128x512xf32> -> vector<128x512xf32>
    %c0_3 = arith.constant 0 : index
    %c0_4 = arith.constant 0 : index
    %3 = vector.load %arg3[%c0_3, %c0_4] : memref<1x512xf32, #tpu.memory_space<vmem>>, vector<1x512xf32>
    %4 = vector.broadcast %3 : vector<1x512xf32> to vector<128x512xf32>
    %5 = arith.addf %2, %4 : vector<128x512xf32>
    %cst_5 = arith.constant 0.000000e+00 : f32
    %6 = vector.broadcast %cst_5 : f32 to vector<128x512xf32>
    %7 = arith.cmpf ogt, %5, %6 : vector<128x512xf32>
    %cst_6 = arith.constant 2.000000e-01 : f32
    %8 = vector.broadcast %cst_6 : f32 to vector<128x512xf32>
    %9 = arith.mulf %8, %5 : vector<128x512xf32>
    %10 = arith.select %7, %5, %9 : vector<128x512xi1>, vector<128x512xf32>
    %11 = arith.truncf %10 : vector<128x512xf32> to vector<128x512xbf16>
    %c0_7 = arith.constant 0 : index
    %c0_8 = arith.constant 0 : index
    %12 = vector.load %arg4[%c0_7, %c0_8] : memref<512x256xbf16, #tpu.memory_space<vmem>>, vector<512x256xbf16>
    %cst_9 = arith.constant dense<0.000000e+00> : vector<128x256xf32>
    %13 = tpu.matmul %11, %12, %cst_9 {dimension_numbers = #tpu.dot_dimension_numbers<[1], [0], [0], [1], [0, 0, 1, 1], [], []>} : vector<128x512xbf16>, vector<512x256xbf16>, vector<128x256xf32> -> vector<128x256xf32>
    %c0_10 = arith.constant 0 : index
    %c0_11 = arith.constant 0 : index
    %14 = vector.load %arg5[%c0_10, %c0_11] : memref<1x256xf32, #tpu.memory_space<vmem>>, vector<1x256xf32>
    %15 = vector.broadcast %14 : vector<1x256xf32> to vector<128x256xf32>
    %16 = arith.addf %13, %15 : vector<128x256xf32>
    %cst_12 = arith.constant 0.000000e+00 : f32
    %17 = vector.broadcast %cst_12 : f32 to vector<128x256xf32>
    %18 = arith.cmpf ogt, %16, %17 : vector<128x256xf32>
    %cst_13 = arith.constant 2.000000e-01 : f32
    %19 = vector.broadcast %cst_13 : f32 to vector<128x256xf32>
    %20 = arith.mulf %19, %16 : vector<128x256xf32>
    %21 = arith.select %18, %16, %20 : vector<128x256xi1>, vector<128x256xf32>
    %22 = arith.truncf %21 : vector<128x256xf32> to vector<128x256xbf16>
    %c0_14 = arith.constant 0 : index
    %c0_15 = arith.constant 0 : index
    %23 = vector.load %arg6[%c0_14, %c0_15] : memref<256x128xbf16, #tpu.memory_space<vmem>>, vector<256x128xbf16>
    %cst_16 = arith.constant dense<0.000000e+00> : vector<128x128xf32>
    %24 = tpu.matmul %22, %23, %cst_16 {dimension_numbers = #tpu.dot_dimension_numbers<[1], [0], [0], [1], [0, 0, 1, 1], [], []>} : vector<128x256xbf16>, vector<256x128xbf16>, vector<128x128xf32> -> vector<128x128xf32>
    %c0_17 = arith.constant 0 : index
    %c0_18 = arith.constant 0 : index
    %25 = vector.load %arg7[%c0_17, %c0_18] : memref<1x128xf32, #tpu.memory_space<vmem>>, vector<1x128xf32>
    %26 = vector.broadcast %25 : vector<1x128xf32> to vector<128x128xf32>
    %27 = arith.addf %24, %26 : vector<128x128xf32>
    %28 = math.absf %27 : vector<128x128xf32>
    %cst_19 = arith.constant 0.000000e+00 : f32
    %29 = vector.broadcast %cst_19 : f32 to vector<128x128xf32>
    %30 = arith.subf %29, %28 : vector<128x128xf32>
    %31 = math.exp %30 : vector<128x128xf32>
    %cst_20 = arith.constant 0.000000e+00 : f32
    %32 = vector.broadcast %cst_20 : f32 to vector<128x128xf32>
    %33 = arith.cmpf oge, %27, %32 : vector<128x128xf32>
    %cst_21 = arith.constant 1.000000e+00 : f32
    %34 = vector.broadcast %cst_21 : f32 to vector<128x128xf32>
    %35 = arith.select %33, %34, %31 : vector<128x128xi1>, vector<128x128xf32>
    %cst_22 = arith.constant 1.000000e+00 : f32
    %36 = vector.broadcast %cst_22 : f32 to vector<128x128xf32>
    %37 = arith.addf %36, %31 : vector<128x128xf32>
    %38 = arith.divf %35, %37 : vector<128x128xf32>
    %c0_23 = arith.constant 0 : index
    %c0_24 = arith.constant 0 : index
    %39 = vector.load %arg8[%c0_23, %c0_24] : memref<128x128xf32, #tpu.memory_space<vmem>>, vector<128x128xf32>
    tpu.vector_store %arg8[%c0_23, %c0_24], %38 {strides = array<i32>} : memref<128x128xf32, #tpu.memory_space<vmem>>, vector<128x128xf32>,
    return
  }
  func.func @transform_0(%arg0: i32) -> (i32, i32) {
    %c0_i32 = arith.constant 0 : i32
    %c0_i32_0 = arith.constant 0 : i32
    return %arg0, %c0_i32 : i32, i32
  }
  func.func @transform_1(%arg0: i32) -> (i32, i32) {
    %c0_i32 = arith.constant 0 : i32
    %c0_i32_0 = arith.constant 0 : i32
    %c0_i32_1 = arith.constant 0 : i32
    return %c0_i32, %c0_i32_0 : i32, i32
  }
  func.func @transform_2(%arg0: i32) -> (i32, i32) {
    %c0_i32 = arith.constant 0 : i32
    %c0_i32_0 = arith.constant 0 : i32
    %c0_i32_1 = arith.constant 0 : i32
    return %c0_i32, %c0_i32_0 : i32, i32
  }
  func.func @transform_3(%arg0: i32) -> (i32, i32) {
    %c0_i32 = arith.constant 0 : i32
    %c0_i32_0 = arith.constant 0 : i32
    %c0_i32_1 = arith.constant 0 : i32
    return %c0_i32, %c0_i32_0 : i32, i32
  }
  func.func @transform_4(%arg0: i32) -> (i32, i32) {
    %c0_i32 = arith.constant 0 : i32
    %c0_i32_0 = arith.constant 0 : i32
    %c0_i32_1 = arith.constant 0 : i32
    return %c0_i32, %c0_i32_0 : i32, i32
  }
  func.func @transform_5(%arg0: i32) -> (i32, i32) {
    %c0_i32 = arith.constant 0 : i32
    %c0_i32_0 = arith.constant 0 : i32
    %c0_i32_1 = arith.constant 0 : i32
    return %c0_i32, %c0_i32_0 : i32, i32
  }
  func.func @transform_6(%arg0: i32) -> (i32, i32) {
    %c0_i32 = arith.constant 0 : i32
    %c0_i32_0 = arith.constant 0 : i32
    %c0_i32_1 = arith.constant 0 : i32
    return %c0_i32, %c0_i32_0 : i32, i32
  }
  func.func @transform_7(%arg0: i32) -> (i32, i32) {
    %c0_i32 = arith.constant 0 : i32
    %c0_i32_0 = arith.constant 0 : i32
    return %arg0, %c0_i32 : i32, i32
  }
}

</mosaic_0001>

<llo_original>
// kernel: tpu_custom_call.1
$region0: #{tpu_custom_call.1}
  #allocation0 [shape = 'u32[]', space=smem, size = 0x4, offset = 0x4, fixed_abs, tag = 'smem constant byte address 0x4 - core index']
  #allocation1 [shape = 'u32[144,128]{1,0:T(1,128)}', space=vmem, size = 0x12000, scoped, tag = 'internal scratch']
  %s0 = inlined_call_operand.hbm [shape: bf16[128,1024], index: 0, kind: input, shape index: {}]
  %s1 = inlined_call_operand.hbm [shape: bf16[1024,512], index: 1, kind: input, shape index: {}]
  %s2 = inlined_call_operand.vmem [shape: f32[1,512], index: 2, kind: input, shape index: {}]
  %s3 = inlined_call_operand.hbm [shape: bf16[512,256], index: 3, kind: input, shape index: {}]
  %s4 = inlined_call_operand.vmem [shape: f32[1,256], index: 4, kind: input, shape index: {}]
  %s5 = inlined_call_operand.hbm [shape: bf16[256,128], index: 5, kind: input, shape index: {}]
  %s6 = inlined_call_operand.vmem [shape: f32[1,128], index: 6, kind: input, shape index: {}]
  %s7 = inlined_call_operand.hbm [shape: f32[128,128], index: 7, kind: output, shape index: {}]
  %s8 = sld [smem:[#allocation0]]
  $region54: #{tpu_custom_call.1} parent=0
    _
  %s10 = ssub.s32 1, %s8
  %s11 = scalar_select 0, %s10, %s8
  $region1: #{tpu_custom_call.1} parent=0
    #allocation2 [shape = 'u8[262144]{0}', space=vmem, size = 0x40000, scoped, tag = 'input window, operand 0, single buffered']
    #allocation3 [shape = 's32[1]{0}', space=sflag, size = 0x4, scoped, tag = 'scoped memory for tpu_custom_call.1']
    #allocation4 [shape = 's32[1]{0}', space=sflag, size = 0x4, scoped, tag = 'scoped memory for tpu_custom_call.1']
    #allocation5 [shape = 'u8[1048576]{0}', space=vmem, size = 0x100000, scoped, tag = 'input window, operand 1, single buffered']
    #allocation6 [shape = 's32[1]{0}', space=sflag, size = 0x4, scoped, tag = 'scoped memory for tpu_custom_call.1']
    #allocation7 [shape = 'u8[262144]{0}', space=vmem, size = 0x40000, scoped, tag = 'input window, operand 3, single buffered']
    #allocation8 [shape = 'u8[65536]{0}', space=vmem, size = 0x10000, scoped, tag = 'input window, operand 5, single buffered']
    #allocation9 [shape = 's32[1]{0}', space=sflag, size = 0x4, scoped, tag = 'scoped memory for tpu_custom_call.1']
    #allocation10 [shape = 'u8[65536]{0}', space=vmem, size = 0x10000, scoped, tag = 'output window, operand 0, single buffered']
    %12 = vsyncpa [#allocation3], 0
    %13 = vsyncpa [#allocation6], 0
    %14 = vsyncpa [#allocation9], 0
    %15 = vsyncpa [#allocation4], 0
    // Predicated region
    $region2: #{tpu_custom_call.1} parent=1 // pred_check
      _
    $region3: #{tpu_custom_call.1} parent=1 // pred_check_branch
      %17 = sbr.rel (0) target = $region5
    $region4: #{tpu_custom_call.1} parent=1 // pred_region
      %s19 = ssub.s32 8192, 8192
      %20 = vsyncadd [#allocation3], %s19
      %s21 = sshll.u32 [#allocation2], 4
      %s22 = int_to_ptr.vmem [resolvable:$true] %s21
      %27 = dma.hbm_to_vmem [thread:$0]  %s0, 8192, %s22, [#allocation3], 512, 512, 32
    $region5: #{tpu_custom_call.1} parent=1 // pred_fallthru
      _
    // Predicated region
    $region6: #{tpu_custom_call.1} parent=1 // pred_check
      _
    $region7: #{tpu_custom_call.1} parent=1 // pred_check_branch
      %29 = sbr.rel (0) target = $region9
    $region8: #{tpu_custom_call.1} parent=1 // pred_region
      %s31 = ssub.s32 32768, 32768
      %32 = vsyncadd [#allocation6], %s31
      %s33 = sshll.u32 [#allocation5], 4
      %s34 = int_to_ptr.vmem [resolvable:$true] %s33
      %39 = dma.hbm_to_vmem [thread:$0]  %s1, 32768, %s34, [#allocation6], 256, 256, 16
    $region9: #{tpu_custom_call.1} parent=1 // pred_fallthru
      _
    // Predicated region
    $region10: #{tpu_custom_call.1} parent=1 // pred_check
      _
    $region11: #{tpu_custom_call.1} parent=1 // pred_check_branch
      %41 = sbr.rel (0) target = $region13
    $region12: #{tpu_custom_call.1} parent=1 // pred_region
      _
    $region13: #{tpu_custom_call.1} parent=1 // pred_fallthru
      _
    // Predicated region
    $region14: #{tpu_custom_call.1} parent=1 // pred_check
      _
    $region15: #{tpu_custom_call.1} parent=1 // pred_check_branch
      %43 = sbr.rel (0) target = $region17
    $region16: #{tpu_custom_call.1} parent=1 // pred_region
      %s45 = ssub.s32 8192, 8192
      %46 = vsyncadd [#allocation6], %s45
      %s47 = sshll.u32 [#allocation7], 4
      %s48 = int_to_ptr.vmem [resolvable:$true] %s47
      %53 = dma.hbm_to_vmem [thread:$0]  %s3, 8192, %s48, [#allocation6], 128, 128, 8
    $region17: #{tpu_custom_call.1} parent=1 // pred_fallthru
      _
    // Predicated region
    $region18: #{tpu_custom_call.1} parent=1 // pred_check
      _
    $region19: #{tpu_custom_call.1} parent=1 // pred_check_branch
      %55 = sbr.rel (0) target = $region21
    $region20: #{tpu_custom_call.1} parent=1 // pred_region
      _
    $region21: #{tpu_custom_call.1} parent=1 // pred_fallthru
      _
    // Predicated region
    $region22: #{tpu_custom_call.1} parent=1 // pred_check
      _
    $region23: #{tpu_custom_call.1} parent=1 // pred_check_branch
      %57 = sbr.rel (0) target = $region25
    $region24: #{tpu_custom_call.1} parent=1 // pred_region
      %s59 = ssub.s32 2048, 2048
      %60 = vsyncadd [#allocation9], %s59
      %s61 = sshll.u32 [#allocation8], 4
      %s62 = int_to_ptr.vmem [resolvable:$true] %s61
      %67 = dma.hbm_to_vmem [thread:$0]  %s5, 2048, %s62, [#allocation9], 64, 64, 4
    $region25: #{tpu_custom_call.1} parent=1 // pred_fallthru
      _
    // Predicated region
    $region26: #{tpu_custom_call.1} parent=1 // pred_check
      _
    $region27: #{tpu_custom_call.1} parent=1 // pred_check_branch
      %69 = sbr.rel (0) target = $region29
    $region28: #{tpu_custom_call.1} parent=1 // pred_region
      _
    $region29: #{tpu_custom_call.1} parent=1 // pred_fallthru
      _
    // Predicated region
    $region30: #{tpu_custom_call.1} parent=1 // pred_check
      _
    $region31: #{tpu_custom_call.1} parent=1 // pred_check_branch
      %71 = sbr.rel (0) target = $region33
    $region32: #{tpu_custom_call.1} parent=1 // pred_region
      %72 = dma.done [#allocation3], 8192
    $region33: #{tpu_custom_call.1} parent=1 // pred_fallthru
      _
    // Predicated region
    $region34: #{tpu_custom_call.1} parent=1 // pred_check
      _
    $region35: #{tpu_custom_call.1} parent=1 // pred_check_branch
      %74 = sbr.rel (0) target = $region37
    $region36: #{tpu_custom_call.1} parent=1 // pred_region
      %75 = dma.done [#allocation6], 32768
    $region37: #{tpu_custom_call.1} parent=1 // pred_fallthru
      _
    // Predicated region
    $region38: #{tpu_custom_call.1} parent=1 // pred_check
      _
    $region39: #{tpu_custom_call.1} parent=1 // pred_check_branch
      %77 = sbr.rel (0) target = $region41
    $region40: #{tpu_custom_call.1} parent=1 // pred_region
      %78 = dma.done [#allocation6], 8192
    $region41: #{tpu_custom_call.1} parent=1 // pred_fallthru
      _
    // Predicated region
    $region42: #{tpu_custom_call.1} parent=1 // pred_check
      _
    $region43: #{tpu_custom_call.1} parent=1 // pred_check_branch
      %80 = sbr.rel (0) target = $region45
    $region44: #{tpu_custom_call.1} parent=1 // pred_region
      %81 = dma.done [#allocation9], 2048
    $region45: #{tpu_custom_call.1} parent=1 // pred_fallthru
      _
    %v83 = vld [vmem:[#allocation2] sm:$0xff]
    %v84 = vld [vmem:[#allocation2 + $0x8] sm:$0xff]
    %v85 = vld [vmem:[#allocation2 + $0x10] sm:$0xff]
    %v86 = vld [vmem:[#allocation2 + $0x18] sm:$0xff]
    %v87 = vld [vmem:[#allocation2 + $0x20] sm:$0xff]
    %v88 = vld [vmem:[#allocation2 + $0x28] sm:$0xff]
    %v89 = vld [vmem:[#allocation2 + $0x30] sm:$0xff]
    %v90 = vld [vmem:[#allocation2 + $0x38] sm:$0xff]
    %v91 = vld [vmem:[#allocation2 + $0x40] sm:$0xff]
    %v92 = vld [vmem:[#allocation2 + $0x48] sm:$0xff]
    %v93 = vld [vmem:[#allocation2 + $0x50] sm:$0xff]
    %v94 = vld [vmem:[#allocation2 + $0x58] sm:$0xff]
    %v95 = vld [vmem:[#allocation2 + $0x60] sm:$0xff]
    %v96 = vld [vmem:[#allocation2 + $0x68] sm:$0xff]
    %v97 = vld [vmem:[#allocation2 + $0x70] sm:$0xff]
    %v98 = vld [vmem:[#allocation2 + $0x78] sm:$0xff]
    %v99 = vld [vmem:[#allocation2 + $0x80] sm:$0xff]
    %v100 = vld [vmem:[#allocation2 + $0x88] sm:$0xff]
    %v101 = vld [vmem:[#allocation2 + $0x90] sm:$0xff]
    %v102 = vld [vmem:[#allocation2 + $0x98] sm:$0xff]
    %v103 = vld [vmem:[#allocation2 + $0xa0] sm:$0xff]
    %v104 = vld [vmem:[#allocation2 + $0xa8] sm:$0xff]
    %v105 = vld [vmem:[#allocation2 + $0xb0] sm:$0xff]
    %v106 = vld [vmem:[#allocation2 + $0xb8] sm:$0xff]
    %v107 = vld [vmem:[#allocation2 + $0xc0] sm:$0xff]
    %v108 = vld [vmem:[#allocation2 + $0xc8] sm:$0xff]
    %v109 = vld [vmem:[#allocation2 + $0xd0] sm:$0xff]
    %v110 = vld [vmem:[#allocation2 + $0xd8] sm:$0xff]
    %v111 = vld [vmem:[#allocation2 + $0xe0] sm:$0xff]
    %v112 = vld [vmem:[#allocation2 + $0xe8] sm:$0xff]
    %v113 = vld [vmem:[#allocation2 + $0xf0] sm:$0xff]
    %v114 = vld [vmem:[#allocation2 + $0xf8] sm:$0xff]
    %v115 = vld [vmem:[#allocation2 + $0x100] sm:$0xff]
    %v116 = vld [vmem:[#allocation2 + $0x108] sm:$0xff]
    %v117 = vld [vmem:[#allocation2 + $0x110] sm:$0xff]
    %v118 = vld [vmem:[#allocation2 + $0x118] sm:$0xff]
    %v119 = vld [vmem:[#allocation2 + $0x120] sm:$0xff]
    %v120 = vld [vmem:[#allocation2 + $0x128] sm:$0xff]
    %v121 = vld [vmem:[#allocation2 + $0x130] sm:$0xff]
    %v122 = vld [vmem:[#allocation2 + $0x138] sm:$0xff]
    %v123 = vld [vmem:[#allocation2 + $0x140] sm:$0xff]
    %v124 = vld [vmem:[#allocation2 + $0x148] sm:$0xff]
    %v125 = vld [vmem:[#allocation2 + $0x150] sm:$0xff]
    %v126 = vld [vmem:[#allocation2 + $0x158] sm:$0xff]
    %v127 = vld [vmem:[#allocation2 + $0x160] sm:$0xff]
    %v128 = vld [vmem:[#allocation2 + $0x168] sm:$0xff]
    %v129 = vld [vmem:[#allocation2 + $0x170] sm:$0xff]
    %v130 = vld [vmem:[#allocation2 + $0x178] sm:$0xff]
    %v131 = vld [vmem:[#allocation2 + $0x180] sm:$0xff]
    %v132 = vld [vmem:[#allocation2 + $0x188] sm:$0xff]
    %v133 = vld [vmem:[#allocation2 + $0x190] sm:$0xff]
    %v134 = vld [vmem:[#allocation2 + $0x198] sm:$0xff]
    %v135 = vld [vmem:[#allocation2 + $0x1a0] sm:$0xff]
    %v136 = vld [vmem:[#allocation2 + $0x1a8] sm:$0xff]
    %v137 = vld [vmem:[#allocation2 + $0x1b0] sm:$0xff]
    %v138 = vld [vmem:[#allocation2 + $0x1b8] sm:$0xff]
    %v139 = vld [vmem:[#allocation2 + $0x1c0] sm:$0xff]
    %v140 = vld [vmem:[#allocation2 + $0x1c8] sm:$0xff]
    %v141 = vld [vmem:[#allocation2 + $0x1d0] sm:$0xff]
    %v142 = vld [vmem:[#allocation2 + $0x1d8] sm:$0xff]
    %v143 = vld [vmem:[#allocation2 + $0x1e0] sm:$0xff]
    %v144 = vld [vmem:[#allocation2 + $0x1e8] sm:$0xff]
    %v145 = vld [vmem:[#allocation2 + $0x1f0] sm:$0xff]
    %v146 = vld [vmem:[#allocation2 + $0x1f8] sm:$0xff]
    %v147 = vld [vmem:[#allocation5] sm:$0xff]
    %v148 = vld [vmem:[#allocation5 + $0x8] sm:$0xff]
    %v149 = vld [vmem:[#allocation5 + $0x10] sm:$0xff]
    %v150 = vld [vmem:[#allocation5 + $0x18] sm:$0xff]
    %v151 = vld [vmem:[#allocation5 + $0x20] sm:$0xff]
    %v152 = vld [vmem:[#allocation5 + $0x28] sm:$0xff]
    %v153 = vld [vmem:[#allocation5 + $0x30] sm:$0xff]
    %v154 = vld [vmem:[#allocation5 + $0x38] sm:$0xff]
    %v155 = vld [vmem:[#allocation5 + $0x40] sm:$0xff]
    %v156 = vld [vmem:[#allocation5 + $0x48] sm:$0xff]
    %v157 = vld [vmem:[#allocation5 + $0x50] sm:$0xff]
    %v158 = vld [vmem:[#allocation5 + $0x58] sm:$0xff]
    %v159 = vld [vmem:[#allocation5 + $0x60] sm:$0xff]
    %v160 = vld [vmem:[#allocation5 + $0x68] sm:$0xff]
    %v161 = vld [vmem:[#allocation5 + $0x70] sm:$0xff]
    %v162 = vld [vmem:[#allocation5 + $0x78] sm:$0xff]
    %v163 = vld [vmem:[#allocation5 + $0x80] sm:$0xff]
    %v164 = vld [vmem:[#allocation5 + $0x88] sm:$0xff]
    %v165 = vld [vmem:[#allocation5 + $0x90] sm:$0xff]
    %v166 = vld [vmem:[#allocation5 + $0x98] sm:$0xff]
    %v167 = vld [vmem:[#allocation5 + $0xa0] sm:$0xff]
    %v168 = vld [vmem:[#allocation5 + $0xa8] sm:$0xff]
    %v169 = vld [vmem:[#allocation5 + $0xb0] sm:$0xff]
    %v170 = vld [vmem:[#allocation5 + $0xb8] sm:$0xff]
    %v171 = vld [vmem:[#allocation5 + $0xc0] sm:$0xff]
    %v172 = vld [vmem:[#allocation5 + $0xc8] sm:$0xff]
    %v173 = vld [vmem:[#allocation5 + $0xd0] sm:$0xff]
    %v174 = vld [vmem:[#allocation5 + $0xd8] sm:$0xff]
    %v175 = vld [vmem:[#allocation5 + $0xe0] sm:$0xff]
    %v176 = vld [vmem:[#allocation5 + $0xe8] sm:$0xff]
    %v177 = vld [vmem:[#allocation5 + $0xf0] sm:$0xff]
    %v178 = vld [vmem:[#allocation5 + $0xf8] sm:$0xff]
    %v179 = vld [vmem:[#allocation5 + $0x100] sm:$0xff]
    %v180 = vld [vmem:[#allocation5 + $0x108] sm:$0xff]
    %v181 = vld [vmem:[#allocation5 + $0x110] sm:$0xff]
    %v182 = vld [vmem:[#allocation5 + $0x118] sm:$0xff]
    %v183 = vld [vmem:[#allocation5 + $0x120] sm:$0xff]
    %v184 = vld [vmem:[#allocation5 + $0x128] sm:$0xff]
    %v185 = vld [vmem:[#allocation5 + $0x130] sm:$0xff]
    %v186 = vld [vmem:[#allocation5 + $0x138] sm:$0xff]
    %v187 = vld [vmem:[#allocation5 + $0x140] sm:$0xff]
    %v188 = vld [vmem:[#allocation5 + $0x148] sm:$0xff]
    %v189 = vld [vmem:[#allocation5 + $0x150] sm:$0xff]
    %v190 = vld [vmem:[#allocation5 + $0x158] sm:$0xff]
    %v191 = vld [vmem:[#allocation5 + $0x160] sm:$0xff]
    %v192 = vld [vmem:[#allocation5 + $0x168] sm:$0xff]
    %v193 = vld [vmem:[#allocation5 + $0x170] sm:$0xff]
    %v194 = vld [vmem:[#allocation5 + $0x178] sm:$0xff]
    %v195 = vld [vmem:[#allocation5 + $0x180] sm:$0xff]
    %v196 = vld [vmem:[#allocation5 + $0x188] sm:$0xff]
    %v197 = vld [vmem:[#allocation5 + $0x190] sm:$0xff]
    %v198 = vld [vmem:[#allocation5 + $0x198] sm:$0xff]
    %v199 = vld [vmem:[#allocation5 + $0x1a0] sm:$0xff]
    %v200 = vld [vmem:[#allocation5 + $0x1a8] sm:$0xff]
    %v201 = vld [vmem:[#allocation5 + $0x1b0] sm:$0xff]
    %v202 = vld [vmem:[#allocation5 + $0x1b8] sm:$0xff]
    %v203 = vld [vmem:[#allocation5 + $0x1c0] sm:$0xff]
    %v204 = vld [vmem:[#allocation5 + $0x1c8] sm:$0xff]
    %v205 = vld [vmem:[#allocation5 + $0x1d0] sm:$0xff]
    %v206 = vld [vmem:[#allocation5 + $0x1d8] sm:$0xff]
    %v207 = vld [vmem:[#allocation5 + $0x1e0] sm:$0xff]
    %v208 = vld [vmem:[#allocation5 + $0x1e8] sm:$0xff]
    %v209 = vld [vmem:[#allocation5 + $0x1f0] sm:$0xff]
    %v210 = vld [vmem:[#allocation5 + $0x1f8] sm:$0xff]
    %v211 = vld [vmem:[#allocation5 + $0x200] sm:$0xff]
    %v212 = vld [vmem:[#allocation5 + $0x208] sm:$0xff]
    %v213 = vld [vmem:[#allocation5 + $0x210] sm:$0xff]
    %v214 = vld [vmem:[#allocation5 + $0x218] sm:$0xff]
    %v215 = vld [vmem:[#allocation5 + $0x220] sm:$0xff]
    %v216 = vld [vmem:[#allocation5 + $0x228] sm:$0xff]
    %v217 = vld [vmem:[#allocation5 + $0x230] sm:$0xff]
    %v218 = vld [vmem:[#allocation5 + $0x238] sm:$0xff]
    %v219 = vld [vmem:[#allocation5 + $0x240] sm:$0xff]
    %v220 = vld [vmem:[#allocation5 + $0x248] sm:$0xff]
    %v221 = vld [vmem:[#allocation5 + $0x250] sm:$0xff]
    %v222 = vld [vmem:[#allocation5 + $0x258] sm:$0xff]
    %v223 = vld [vmem:[#allocation5 + $0x260] sm:$0xff]
    %v224 = vld [vmem:[#allocation5 + $0x268] sm:$0xff]
    %v225 = vld [vmem:[#allocation5 + $0x270] sm:$0xff]
    %v226 = vld [vmem:[#allocation5 + $0x278] sm:$0xff]
    %v227 = vld [vmem:[#allocation5 + $0x280] sm:$0xff]
    %v228 = vld [vmem:[#allocation5 + $0x288] sm:$0xff]
    %v229 = vld [vmem:[#allocation5 + $0x290] sm:$0xff]
    %v230 = vld [vmem:[#allocation5 + $0x298] sm:$0xff]
    %v231 = vld [vmem:[#allocation5 + $0x2a0] sm:$0xff]
    %v232 = vld [vmem:[#allocation5 + $0x2a8] sm:$0xff]
    %v233 = vld [vmem:[#allocation5 + $0x2b0] sm:$0xff]
    %v234 = vld [vmem:[#allocation5 + $0x2b8] sm:$0xff]
    %v235 = vld [vmem:[#allocation5 + $0x2c0] sm:$0xff]
    %v236 = vld [vmem:[#allocation5 + $0x2c8] sm:$0xff]
    %v237 = vld [vmem:[#allocation5 + $0x2d0] sm:$0xff]
    %v238 = vld [vmem:[#allocation5 + $0x2d8] sm:$0xff]
    %v239 = vld [vmem:[#allocation5 + $0x2e0] sm:$0xff]
    %v240 = vld [vmem:[#allocation5 + $0x2e8] sm:$0xff]
    %v241 = vld [vmem:[#allocation5 + $0x2f0] sm:$0xff]
    %v242 = vld [vmem:[#allocation5 + $0x2f8] sm:$0xff]
    %v243 = vld [vmem:[#allocation5 + $0x300] sm:$0xff]
    %v244 = vld [vmem:[#allocation5 + $0x308] sm:$0xff]
    %v245 = vld [vmem:[#allocation5 + $0x310] sm:$0xff]
    %v246 = vld [vmem:[#allocation5 + $0x318] sm:$0xff]
    %v247 = vld [vmem:[#allocation5 + $0x320] sm:$0xff]
    %v248 = vld [vmem:[#allocation5 + $0x328] sm:$0xff]
    %v249 = vld [vmem:[#allocation5 + $0x330] sm:$0xff]
    %v250 = vld [vmem:[#allocation5 + $0x338] sm:$0xff]
    %v251 = vld [vmem:[#allocation5 + $0x340] sm:$0xff]
    %v252 = vld [vmem:[#allocation5 + $0x348] sm:$0xff]
    %v253 = vld [vmem:[#allocation5 + $0x350] sm:$0xff]
    %v254 = vld [vmem:[#allocation5 + $0x358] sm:$0xff]
    %v255 = vld [vmem:[#allocation5 + $0x360] sm:$0xff]
    %v256 = vld [vmem:[#allocation5 + $0x368] sm:$0xff]
    %v257 = vld [vmem:[#allocation5 + $0x370] sm:$0xff]
    %v258 = vld [vmem:[#allocation5 + $0x378] sm:$0xff]
    %v259 = vld [vmem:[#allocation5 + $0x380] sm:$0xff]
    %v260 = vld [vmem:[#allocation5 + $0x388] sm:$0xff]
    %v261 = vld [vmem:[#allocation5 + $0x390] sm:$0xff]
    %v262 = vld [vmem:[#allocation5 + $0x398] sm:$0xff]
    %v263 = vld [vmem:[#allocation5 + $0x3a0] sm:$0xff]
    %v264 = vld [vmem:[#allocation5 + $0x3a8] sm:$0xff]
    %v265 = vld [vmem:[#allocation5 + $0x3b0] sm:$0xff]
    %v266 = vld [vmem:[#allocation5 + $0x3b8] sm:$0xff]
    %v267 = vld [vmem:[#allocation5 + $0x3c0] sm:$0xff]
    %v268 = vld [vmem:[#allocation5 + $0x3c8] sm:$0xff]
    %v269 = vld [vmem:[#allocation5 + $0x3d0] sm:$0xff]
    %v270 = vld [vmem:[#allocation5 + $0x3d8] sm:$0xff]
    %v271 = vld [vmem:[#allocation5 + $0x3e0] sm:$0xff]
    %v272 = vld [vmem:[#allocation5 + $0x3e8] sm:$0xff]
    %v273 = vld [vmem:[#allocation5 + $0x3f0] sm:$0xff]
    %v274 = vld [vmem:[#allocation5 + $0x3f8] sm:$0xff]
    %v275 = vld [vmem:[#allocation5 + $0x400] sm:$0xff]
    %v276 = vld [vmem:[#allocation5 + $0x408] sm:$0xff]
    %v277 = vld [vmem:[#allocation5 + $0x410] sm:$0xff]
    %v278 = vld [vmem:[#allocation5 + $0x418] sm:$0xff]
    %v279 = vld [vmem:[#allocation5 + $0x420] sm:$0xff]
    %v280 = vld [vmem:[#allocation5 + $0x428] sm:$0xff]
    %v281 = vld [vmem:[#allocation5 + $0x430] sm:$0xff]
    %v282 = vld [vmem:[#allocation5 + $0x438] sm:$0xff]
    %v283 = vld [vmem:[#allocation5 + $0x440] sm:$0xff]
    %v284 = vld [vmem:[#allocation5 + $0x448] sm:$0xff]
    %v285 = vld [vmem:[#allocation5 + $0x450] sm:$0xff]
    %v286 = vld [vmem:[#allocation5 + $0x458] sm:$0xff]
    %v287 = vld [vmem:[#allocation5 + $0x460] sm:$0xff]
    %v288 = vld [vmem:[#allocation5 + $0x468] sm:$0xff]
    %v289 = vld [vmem:[#allocation5 + $0x470] sm:$0xff]
    %v290 = vld [vmem:[#allocation5 + $0x478] sm:$0xff]
    %v291 = vld [vmem:[#allocation5 + $0x480] sm:$0xff]
    %v292 = vld [vmem:[#allocation5 + $0x488] sm:$0xff]
    %v293 = vld [vmem:[#allocation5 + $0x490] sm:$0xff]
    %v294 = vld [vmem:[#allocation5 + $0x498] sm:$0xff]
    %v295 = vld [vmem:[#allocation5 + $0x4a0] sm:$0xff]
    %v296 = vld [vmem:[#allocation5 + $0x4a8] sm:$0xff]
    %v297 = vld [vmem:[#allocation5 + $0x4b0] sm:$0xff]
    %v298 = vld [vmem:[#allocation5 + $0x4b8] sm:$0xff]
    %v299 = vld [vmem:[#allocation5 + $0x4c0] sm:$0xff]
    %v300 = vld [vmem:[#allocation5 + $0x4c8] sm:$0xff]
    %v301 = vld [vmem:[#allocation5 + $0x4d0] sm:$0xff]
    %v302 = vld [vmem:[#allocation5 + $0x4d8] sm:$0xff]
    %v303 = vld [vmem:[#allocation5 + $0x4e0] sm:$0xff]
    %v304 = vld [vmem:[#allocation5 + $0x4e8] sm:$0xff]
    %v305 = vld [vmem:[#allocation5 + $0x4f0] sm:$0xff]
    %v306 = vld [vmem:[#allocation5 + $0x4f8] sm:$0xff]
    %v307 = vld [vmem:[#allocation5 + $0x500] sm:$0xff]
    %v308 = vld [vmem:[#allocation5 + $0x508] sm:$0xff]
    %v309 = vld [vmem:[#allocation5 + $0x510] sm:$0xff]
    %v310 = vld [vmem:[#allocation5 + $0x518] sm:$0xff]
    %v311 = vld [vmem:[#allocation5 + $0x520] sm:$0xff]
    %v312 = vld [vmem:[#allocation5 + $0x528] sm:$0xff]
    %v313 = vld [vmem:[#allocation5 + $0x530] sm:$0xff]
    %v314 = vld [vmem:[#allocation5 + $0x538] sm:$0xff]
    %v315 = vld [vmem:[#allocation5 + $0x540] sm:$0xff]
    %v316 = vld [vmem:[#allocation5 + $0x548] sm:$0xff]
    %v317 = vld [vmem:[#allocation5 + $0x550] sm:$0xff]
    %v318 = vld [vmem:[#allocation5 + $0x558] sm:$0xff]
    %v319 = vld [vmem:[#allocation5 + $0x560] sm:$0xff]
    %v320 = vld [vmem:[#allocation5 + $0x568] sm:$0xff]
    %v321 = vld [vmem:[#allocation5 + $0x570] sm:$0xff]
    %v322 = vld [vmem:[#allocation5 + $0x578] sm:$0xff]
    %v323 = vld [vmem:[#allocation5 + $0x580] sm:$0xff]
    %v324 = vld [vmem:[#allocation5 + $0x588] sm:$0xff]
    %v325 = vld [vmem:[#allocation5 + $0x590] sm:$0xff]
    %v326 = vld [vmem:[#allocation5 + $0x598] sm:$0xff]
    %v327 = vld [vmem:[#allocation5 + $0x5a0] sm:$0xff]
    %v328 = vld [vmem:[#allocation5 + $0x5a8] sm:$0xff]
    %v329 = vld [vmem:[#allocation5 + $0x5b0] sm:$0xff]
    %v330 = vld [vmem:[#allocation5 + $0x5b8] sm:$0xff]
    %v331 = vld [vmem:[#allocation5 + $0x5c0] sm:$0xff]
    %v332 = vld [vmem:[#allocation5 + $0x5c8] sm:$0xff]
    %v333 = vld [vmem:[#allocation5 + $0x5d0] sm:$0xff]
    %v334 = vld [vmem:[#allocation5 + $0x5d8] sm:$0xff]
    %v335 = vld [vmem:[#allocation5 + $0x5e0] sm:$0xff]
    %v336 = vld [vmem:[#allocation5 + $0x5e8] sm:$0xff]
    %v337 = vld [vmem:[#allocation5 + $0x5f0] sm:$0xff]
    %v338 = vld [vmem:[#allocation5 + $0x5f8] sm:$0xff]
    %v339 = vld [vmem:[#allocation5 + $0x600] sm:$0xff]
    %v340 = vld [vmem:[#allocation5 + $0x608] sm:$0xff]
    %v341 = vld [vmem:[#allocation5 + $0x610] sm:$0xff]
    %v342 = vld [vmem:[#allocation5 + $0x618] sm:$0xff]
    %v343 = vld [vmem:[#allocation5 + $0x620] sm:$0xff]
    %v344 = vld [vmem:[#allocation5 + $0x628] sm:$0xff]
    %v345 = vld [vmem:[#allocation5 + $0x630] sm:$0xff]
    %v346 = vld [vmem:[#allocation5 + $0x638] sm:$0xff]
    %v347 = vld [vmem:[#allocation5 + $0x640] sm:$0xff]
    %v348 = vld [vmem:[#allocation5 + $0x648] sm:$0xff]
    %v349 = vld [vmem:[#allocation5 + $0x650] sm:$0xff]
    %v350 = vld [vmem:[#allocation5 + $0x658] sm:$0xff]
    %v351 = vld [vmem:[#allocation5 + $0x660] sm:$0xff]
    %v352 = vld [vmem:[#allocation5 + $0x668] sm:$0xff]
    %v353 = vld [vmem:[#allocation5 + $0x670] sm:$0xff]
    %v354 = vld [vmem:[#allocation5 + $0x678] sm:$0xff]
    %v355 = vld [vmem:[#allocation5 + $0x680] sm:$0xff]
    %v356 = vld [vmem:[#allocation5 + $0x688] sm:$0xff]
    %v357 = vld [vmem:[#allocation5 + $0x690] sm:$0xff]
    %v358 = vld [vmem:[#allocation5 + $0x698] sm:$0xff]
    %v359 = vld [vmem:[#allocation5 + $0x6a0] sm:$0xff]
    %v360 = vld [vmem:[#allocation5 + $0x6a8] sm:$0xff]
    %v361 = vld [vmem:[#allocation5 + $0x6b0] sm:$0xff]
    %v362 = vld [vmem:[#allocation5 + $0x6b8] sm:$0xff]
    %v363 = vld [vmem:[#allocation5 + $0x6c0] sm:$0xff]
    %v364 = vld [vmem:[#allocation5 + $0x6c8] sm:$0xff]
    %v365 = vld [vmem:[#allocation5 + $0x6d0] sm:$0xff]
    %v366 = vld [vmem:[#allocation5 + $0x6d8] sm:$0xff]
    %v367 = vld [vmem:[#allocation5 + $0x6e0] sm:$0xff]
    %v368 = vld [vmem:[#allocation5 + $0x6e8] sm:$0xff]
    %v369 = vld [vmem:[#allocation5 + $0x6f0] sm:$0xff]
    %v370 = vld [vmem:[#allocation5 + $0x6f8] sm:$0xff]
    %v371 = vld [vmem:[#allocation5 + $0x700] sm:$0xff]
    %v372 = vld [vmem:[#allocation5 + $0x708] sm:$0xff]
    %v373 = vld [vmem:[#allocation5 + $0x710] sm:$0xff]
    %v374 = vld [vmem:[#allocation5 + $0x718] sm:$0xff]
    %v375 = vld [vmem:[#allocation5 + $0x720] sm:$0xff]
    %v376 = vld [vmem:[#allocation5 + $0x728] sm:$0xff]
    %v377 = vld [vmem:[#allocation5 + $0x730] sm:$0xff]
    %v378 = vld [vmem:[#allocation5 + $0x738] sm:$0xff]
    %v379 = vld [vmem:[#allocation5 + $0x740] sm:$0xff]
    %v380 = vld [vmem:[#allocation5 + $0x748] sm:$0xff]
    %v381 = vld [vmem:[#allocation5 + $0x750] sm:$0xff]
    %v382 = vld [vmem:[#allocation5 + $0x758] sm:$0xff]
    %v383 = vld [vmem:[#allocation5 + $0x760] sm:$0xff]
    %v384 = vld [vmem:[#allocation5 + $0x768] sm:$0xff]
    %v385 = vld [vmem:[#allocation5 + $0x770] sm:$0xff]
    %v386 = vld [vmem:[#allocation5 + $0x778] sm:$0xff]
    %v387 = vld [vmem:[#allocation5 + $0x780] sm:$0xff]
    %v388 = vld [vmem:[#allocation5 + $0x788] sm:$0xff]
    %v389 = vld [vmem:[#allocation5 + $0x790] sm:$0xff]
    %v390 = vld [vmem:[#allocation5 + $0x798] sm:$0xff]
    %v391 = vld [vmem:[#allocation5 + $0x7a0] sm:$0xff]
    %v392 = vld [vmem:[#allocation5 + $0x7a8] sm:$0xff]
    %v393 = vld [vmem:[#allocation5 + $0x7b0] sm:$0xff]
    %v394 = vld [vmem:[#allocation5 + $0x7b8] sm:$0xff]
    %v395 = vld [vmem:[#allocation5 + $0x7c0] sm:$0xff]
    %v396 = vld [vmem:[#allocation5 + $0x7c8] sm:$0xff]
    %v397 = vld [vmem:[#allocation5 + $0x7d0] sm:$0xff]
    %v398 = vld [vmem:[#allocation5 + $0x7d8] sm:$0xff]
    %v399 = vld [vmem:[#allocation5 + $0x7e0] sm:$0xff]
    %v400 = vld [vmem:[#allocation5 + $0x7e8] sm:$0xff]
    %v401 = vld [vmem:[#allocation5 + $0x7f0] sm:$0xff]
    %v402 = vld [vmem:[#allocation5 + $0x7f8] sm:$0xff]
    %v403 = vld [vmem:[%s2] sm:$0xf]
    %v405 = vlaneseq
    %v406 = vshrl.u32 %v405, 7
    %v407 = vsub.s32 0, %v406
    %v408 = vrot.slane %v403, %v407
    %v409 = vlaneseq
    %v410 = vshrl.u32 %v409, 7
    %v411 = vsub.s32 1, %v410
    %v412 = vrot.slane %v403, %v411
    %v413 = vlaneseq
    %v414 = vshrl.u32 %v413, 7
    %v415 = vsub.s32 2, %v414
    %v416 = vrot.slane %v403, %v415
    %v417 = vlaneseq
    %v418 = vshrl.u32 %v417, 7
    %v419 = vsub.s32 3, %v418
    %v420 = vrot.slane %v403, %v419
    %v489 = vunpack.c.l.b16 %v83
    %v490 = vunpack.c.h.b16 %v83
    %v491 = vunpack.c.l.b16 %v84
    %v492 = vunpack.c.h.b16 %v84
    %v493 = vunpack.c.l.b16 %v85
    %v494 = vunpack.c.h.b16 %v85
    %v495 = vunpack.c.l.b16 %v86
    %v496 = vunpack.c.h.b16 %v86
    %v497 = vunpack.c.l.b16 %v87
    %v498 = vunpack.c.h.b16 %v87
    %v499 = vunpack.c.l.b16 %v88
    %v500 = vunpack.c.h.b16 %v88
    %v501 = vunpack.c.l.b16 %v89
    %v502 = vunpack.c.h.b16 %v89
    %v503 = vunpack.c.l.b16 %v90
    %v504 = vunpack.c.h.b16 %v90
    %v505 = vunpack.c.l.b16 %v91
    %v506 = vunpack.c.h.b16 %v91
    %v507 = vunpack.c.l.b16 %v92
    %v508 = vunpack.c.h.b16 %v92
    %v509 = vunpack.c.l.b16 %v93
    %v510 = vunpack.c.h.b16 %v93
    %v511 = vunpack.c.l.b16 %v94
    %v512 = vunpack.c.h.b16 %v94
    %v513 = vunpack.c.l.b16 %v95
    %v514 = vunpack.c.h.b16 %v95
    %v515 = vunpack.c.l.b16 %v96
    %v516 = vunpack.c.h.b16 %v96
    %v517 = vunpack.c.l.b16 %v97
    %v518 = vunpack.c.h.b16 %v97
    %v519 = vunpack.c.l.b16 %v98
    %v520 = vunpack.c.h.b16 %v98
    %v521 = vunpack.c.l.b16 %v99
    %v522 = vunpack.c.h.b16 %v99
    %v523 = vunpack.c.l.b16 %v100
    %v524 = vunpack.c.h.b16 %v100
    %v525 = vunpack.c.l.b16 %v101
    %v526 = vunpack.c.h.b16 %v101
    %v527 = vunpack.c.l.b16 %v102
    %v528 = vunpack.c.h.b16 %v102
    %v529 = vunpack.c.l.b16 %v103
    %v530 = vunpack.c.h.b16 %v103
    %v531 = vunpack.c.l.b16 %v104
    %v532 = vunpack.c.h.b16 %v104
    %v533 = vunpack.c.l.b16 %v105
    %v534 = vunpack.c.h.b16 %v105
    %v535 = vunpack.c.l.b16 %v106
    %v536 = vunpack.c.h.b16 %v106
    %v537 = vunpack.c.l.b16 %v107
    %v538 = vunpack.c.h.b16 %v107
    %v539 = vunpack.c.l.b16 %v108
    %v540 = vunpack.c.h.b16 %v108
    %v541 = vunpack.c.l.b16 %v109
    %v542 = vunpack.c.h.b16 %v109
    %v543 = vunpack.c.l.b16 %v110
    %v544 = vunpack.c.h.b16 %v110
    %v545 = vunpack.c.l.b16 %v111
    %v546 = vunpack.c.h.b16 %v111
    %v547 = vunpack.c.l.b16 %v112
    %v548 = vunpack.c.h.b16 %v112
    %v549 = vunpack.c.l.b16 %v113
    %v550 = vunpack.c.h.b16 %v113
    %v551 = vunpack.c.l.b16 %v114
    %v552 = vunpack.c.h.b16 %v114
    %v553 = vunpack.c.l.b16 %v115
    %v554 = vunpack.c.h.b16 %v115
    %v555 = vunpack.c.l.b16 %v116
    %v556 = vunpack.c.h.b16 %v116
    %v557 = vunpack.c.l.b16 %v117
    %v558 = vunpack.c.h.b16 %v117
    %v559 = vunpack.c.l.b16 %v118
    %v560 = vunpack.c.h.b16 %v118
    %v561 = vunpack.c.l.b16 %v119
    %v562 = vunpack.c.h.b16 %v119
    %v563 = vunpack.c.l.b16 %v120
    %v564 = vunpack.c.h.b16 %v120
    %v565 = vunpack.c.l.b16 %v121
    %v566 = vunpack.c.h.b16 %v121
    %v567 = vunpack.c.l.b16 %v122
    %v568 = vunpack.c.h.b16 %v122
    %v569 = vunpack.c.l.b16 %v123
    %v570 = vunpack.c.h.b16 %v123
    %v571 = vunpack.c.l.b16 %v124
    %v572 = vunpack.c.h.b16 %v124
    %v573 = vunpack.c.l.b16 %v125
    %v574 = vunpack.c.h.b16 %v125
    %v575 = vunpack.c.l.b16 %v126
    %v576 = vunpack.c.h.b16 %v126
    %v577 = vunpack.c.l.b16 %v127
    %v578 = vunpack.c.h.b16 %v127
    %v579 = vunpack.c.l.b16 %v128
    %v580 = vunpack.c.h.b16 %v128
    %v581 = vunpack.c.l.b16 %v129
    %v582 = vunpack.c.h.b16 %v129
    %v583 = vunpack.c.l.b16 %v130
    %v584 = vunpack.c.h.b16 %v130
    %v585 = vunpack.c.l.b16 %v131
    %v586 = vunpack.c.h.b16 %v131
    %v587 = vunpack.c.l.b16 %v132
    %v588 = vunpack.c.h.b16 %v132
    %v589 = vunpack.c.l.b16 %v133
    %v590 = vunpack.c.h.b16 %v133
    %v591 = vunpack.c.l.b16 %v134
    %v592 = vunpack.c.h.b16 %v134
    %v593 = vunpack.c.l.b16 %v135
    %v594 = vunpack.c.h.b16 %v135
    %v595 = vunpack.c.l.b16 %v136
    %v596 = vunpack.c.h.b16 %v136
    %v597 = vunpack.c.l.b16 %v137
    %v598 = vunpack.c.h.b16 %v137
    %v599 = vunpack.c.l.b16 %v138
    %v600 = vunpack.c.h.b16 %v138
    %v601 = vunpack.c.l.b16 %v139
    %v602 = vunpack.c.h.b16 %v139
    %v603 = vunpack.c.l.b16 %v140
    %v604 = vunpack.c.h.b16 %v140
    %v605 = vunpack.c.l.b16 %v141
    %v606 = vunpack.c.h.b16 %v141
    %v607 = vunpack.c.l.b16 %v142
    %v608 = vunpack.c.h.b16 %v142
    %v609 = vunpack.c.l.b16 %v143
    %v610 = vunpack.c.h.b16 %v143
    %v611 = vunpack.c.l.b16 %v144
    %v612 = vunpack.c.h.b16 %v144
    %v613 = vunpack.c.l.b16 %v145
    %v614 = vunpack.c.h.b16 %v145
    %v615 = vunpack.c.l.b16 %v146
    %v616 = vunpack.c.h.b16 %v146
    %v617 = vpack.c.b16 %v497, %v489
    %v618 = vpack.c.b16 %v498, %v490
    %v619 = vpack.c.b16 %v499, %v491
    %v620 = vpack.c.b16 %v500, %v492
    %v621 = vpack.c.b16 %v501, %v493
    %v622 = vpack.c.b16 %v502, %v494
    %v623 = vpack.c.b16 %v503, %v495
    %v624 = vpack.c.b16 %v504, %v496
    %v625 = vpack.c.b16 %v513, %v505
    %v626 = vpack.c.b16 %v514, %v506
    %v627 = vpack.c.b16 %v515, %v507
    %v628 = vpack.c.b16 %v516, %v508
    %v629 = vpack.c.b16 %v517, %v509
    %v630 = vpack.c.b16 %v518, %v510
    %v631 = vpack.c.b16 %v519, %v511
    %v632 = vpack.c.b16 %v520, %v512
    %v633 = vpack.c.b16 %v529, %v521
    %v634 = vpack.c.b16 %v530, %v522
    %v635 = vpack.c.b16 %v531, %v523
    %v636 = vpack.c.b16 %v532, %v524
    %v637 = vpack.c.b16 %v533, %v525
    %v638 = vpack.c.b16 %v534, %v526
    %v639 = vpack.c.b16 %v535, %v527
    %v640 = vpack.c.b16 %v536, %v528
    %v641 = vpack.c.b16 %v545, %v537
    %v642 = vpack.c.b16 %v546, %v538
    %v643 = vpack.c.b16 %v547, %v539
    %v644 = vpack.c.b16 %v548, %v540
    %v645 = vpack.c.b16 %v549, %v541
    %v646 = vpack.c.b16 %v550, %v542
    %v647 = vpack.c.b16 %v551, %v543
    %v648 = vpack.c.b16 %v552, %v544
    %v649 = vpack.c.b16 %v561, %v553
    %v650 = vpack.c.b16 %v562, %v554
    %v651 = vpack.c.b16 %v563, %v555
    %v652 = vpack.c.b16 %v564, %v556
    %v653 = vpack.c.b16 %v565, %v557
    %v654 = vpack.c.b16 %v566, %v558
    %v655 = vpack.c.b16 %v567, %v559
    %v656 = vpack.c.b16 %v568, %v560
    %v657 = vpack.c.b16 %v577, %v569
    %v658 = vpack.c.b16 %v578, %v570
    %v659 = vpack.c.b16 %v579, %v571
    %v660 = vpack.c.b16 %v580, %v572
    %v661 = vpack.c.b16 %v581, %v573
    %v662 = vpack.c.b16 %v582, %v574
    %v663 = vpack.c.b16 %v583, %v575
    %v664 = vpack.c.b16 %v584, %v576
    %v665 = vpack.c.b16 %v593, %v585
    %v666 = vpack.c.b16 %v594, %v586
    %v667 = vpack.c.b16 %v595, %v587
    %v668 = vpack.c.b16 %v596, %v588
    %v669 = vpack.c.b16 %v597, %v589
    %v670 = vpack.c.b16 %v598, %v590
    %v671 = vpack.c.b16 %v599, %v591
    %v672 = vpack.c.b16 %v600, %v592
    %v673 = vpack.c.b16 %v609, %v601
    %v674 = vpack.c.b16 %v610, %v602
    %v675 = vpack.c.b16 %v611, %v603
    %v676 = vpack.c.b16 %v612, %v604
    %v677 = vpack.c.b16 %v613, %v605
    %v678 = vpack.c.b16 %v614, %v606
    %v679 = vpack.c.b16 %v615, %v607
    %v680 = vpack.c.b16 %v616, %v608
    %v1001 = vunpack.c.l.b16 %v147
    %v1002 = vunpack.c.h.b16 %v147
    %v1003 = vunpack.c.l.b16 %v148
    %v1004 = vunpack.c.h.b16 %v148
    %v1005 = vunpack.c.l.b16 %v149
    %v1006 = vunpack.c.h.b16 %v149
    %v1007 = vunpack.c.l.b16 %v150
    %v1008 = vunpack.c.h.b16 %v150
    %v1009 = vunpack.c.l.b16 %v151
    %v1010 = vunpack.c.h.b16 %v151
    %v1011 = vunpack.c.l.b16 %v152
    %v1012 = vunpack.c.h.b16 %v152
    %v1013 = vunpack.c.l.b16 %v153
    %v1014 = vunpack.c.h.b16 %v153
    %v1015 = vunpack.c.l.b16 %v154
    %v1016 = vunpack.c.h.b16 %v154
    %v1017 = vunpack.c.l.b16 %v155
    %v1018 = vunpack.c.h.b16 %v155
    %v1019 = vunpack.c.l.b16 %v156
    %v1020 = vunpack.c.h.b16 %v156
    %v1021 = vunpack.c.l.b16 %v157
    %v1022 = vunpack.c.h.b16 %v157
    %v1023 = vunpack.c.l.b16 %v158
    %v1024 = vunpack.c.h.b16 %v158
    %v1025 = vunpack.c.l.b16 %v159
    %v1026 = vunpack.c.h.b16 %v159
    %v1027 = vunpack.c.l.b16 %v160
    %v1028 = vunpack.c.h.b16 %v160
    %v1029 = vunpack.c.l.b16 %v161
    %v1030 = vunpack.c.h.b16 %v161
    %v1031 = vunpack.c.l.b16 %v162
    %v1032 = vunpack.c.h.b16 %v162
    %v1033 = vunpack.c.l.b16 %v163
    %v1034 = vunpack.c.h.b16 %v163
    %v1035 = vunpack.c.l.b16 %v164
    %v1036 = vunpack.c.h.b16 %v164
    %v1037 = vunpack.c.l.b16 %v165
    %v1038 = vunpack.c.h.b16 %v165
    %v1039 = vunpack.c.l.b16 %v166
    %v1040 = vunpack.c.h.b16 %v166
    %v1041 = vunpack.c.l.b16 %v167
    %v1042 = vunpack.c.h.b16 %v167
    %v1043 = vunpack.c.l.b16 %v168
    %v1044 = vunpack.c.h.b16 %v168
    %v1045 = vunpack.c.l.b16 %v169
    %v1046 = vunpack.c.h.b16 %v169
    %v1047 = vunpack.c.l.b16 %v170
    %v1048 = vunpack.c.h.b16 %v170
    %v1049 = vunpack.c.l.b16 %v171
    %v1050 = vunpack.c.h.b16 %v171
    %v1051 = vunpack.c.l.b16 %v172
    %v1052 = vunpack.c.h.b16 %v172
    %v1053 = vunpack.c.l.b16 %v173
    %v1054 = vunpack.c.h.b16 %v173
    %v1055 = vunpack.c.l.b16 %v174
    %v1056 = vunpack.c.h.b16 %v174
    %v1057 = vunpack.c.l.b16 %v175
    %v1058 = vunpack.c.h.b16 %v175
    %v1059 = vunpack.c.l.b16 %v176
    %v1060 = vunpack.c.h.b16 %v176
    %v1061 = vunpack.c.l.b16 %v177
    %v1062 = vunpack.c.h.b16 %v177
    %v1063 = vunpack.c.l.b16 %v178
    %v1064 = vunpack.c.h.b16 %v178
    %v1065 = vunpack.c.l.b16 %v179
    %v1066 = vunpack.c.h.b16 %v179
    %v1067 = vunpack.c.l.b16 %v180
    %v1068 = vunpack.c.h.b16 %v180
    %v1069 = vunpack.c.l.b16 %v181
    %v1070 = vunpack.c.h.b16 %v181
    %v1071 = vunpack.c.l.b16 %v182
    %v1072 = vunpack.c.h.b16 %v182
    %v1073 = vunpack.c.l.b16 %v183
    %v1074 = vunpack.c.h.b16 %v183
    %v1075 = vunpack.c.l.b16 %v184
    %v1076 = vunpack.c.h.b16 %v184
    %v1077 = vunpack.c.l.b16 %v185
    %v1078 = vunpack.c.h.b16 %v185
    %v1079 = vunpack.c.l.b16 %v186
    %v1080 = vunpack.c.h.b16 %v186
    %v1081 = vunpack.c.l.b16 %v187
    %v1082 = vunpack.c.h.b16 %v187
    %v1083 = vunpack.c.l.b16 %v188
    %v1084 = vunpack.c.h.b16 %v188
    %v1085 = vunpack.c.l.b16 %v189
    %v1086 = vunpack.c.h.b16 %v189
    %v1087 = vunpack.c.l.b16 %v190
    %v1088 = vunpack.c.h.b16 %v190
    %v1089 = vunpack.c.l.b16 %v191
    %v1090 = vunpack.c.h.b16 %v191
    %v1091 = vunpack.c.l.b16 %v192
    %v1092 = vunpack.c.h.b16 %v192
    %v1093 = vunpack.c.l.b16 %v193
    %v1094 = vunpack.c.h.b16 %v193
    %v1095 = vunpack.c.l.b16 %v194
    %v1096 = vunpack.c.h.b16 %v194
    %v1097 = vunpack.c.l.b16 %v195
    %v1098 = vunpack.c.h.b16 %v195
    %v1099 = vunpack.c.l.b16 %v196
    %v1100 = vunpack.c.h.b16 %v196
    %v1101 = vunpack.c.l.b16 %v197
    %v1102 = vunpack.c.h.b16 %v197
    %v1103 = vunpack.c.l.b16 %v198
    %v1104 = vunpack.c.h.b16 %v198
    %v1105 = vunpack.c.l.b16 %v199
    %v1106 = vunpack.c.h.b16 %v199
    %v1107 = vunpack.c.l.b16 %v200
    %v1108 = vunpack.c.h.b16 %v200
    %v1109 = vunpack.c.l.b16 %v201
    %v1110 = vunpack.c.h.b16 %v201
    %v1111 = vunpack.c.l.b16 %v202
    %v1112 = vunpack.c.h.b16 %v202
    %v1113 = vunpack.c.l.b16 %v203
    %v1114 = vunpack.c.h.b16 %v203
    %v1115 = vunpack.c.l.b16 %v204
    %v1116 = vunpack.c.h.b16 %v204
    %v1117 = vunpack.c.l.b16 %v205
    %v1118 = vunpack.c.h.b16 %v205
    %v1119 = vunpack.c.l.b16 %v206
    %v1120 = vunpack.c.h.b16 %v206
    %v1121 = vunpack.c.l.b16 %v207
    %v1122 = vunpack.c.h.b16 %v207
    %v1123 = vunpack.c.l.b16 %v208
    %v1124 = vunpack.c.h.b16 %v208
    %v1125 = vunpack.c.l.b16 %v209
    %v1126 = vunpack.c.h.b16 %v209
    %v1127 = vunpack.c.l.b16 %v210
    %v1128 = vunpack.c.h.b16 %v210
    %v1129 = vunpack.c.l.b16 %v211
    %v1130 = vunpack.c.h.b16 %v211
    %v1131 = vunpack.c.l.b16 %v212
    %v1132 = vunpack.c.h.b16 %v212
    %v1133 = vunpack.c.l.b16 %v213
    %v1134 = vunpack.c.h.b16 %v213
    %v1135 = vunpack.c.l.b16 %v214
    %v1136 = vunpack.c.h.b16 %v214
    %v1137 = vunpack.c.l.b16 %v215
    %v1138 = vunpack.c.h.b16 %v215
    %v1139 = vunpack.c.l.b16 %v216
    %v1140 = vunpack.c.h.b16 %v216
    %v1141 = vunpack.c.l.b16 %v217
    %v1142 = vunpack.c.h.b16 %v217
    %v1143 = vunpack.c.l.b16 %v218
    %v1144 = vunpack.c.h.b16 %v218
    %v1145 = vunpack.c.l.b16 %v219
    %v1146 = vunpack.c.h.b16 %v219
    %v1147 = vunpack.c.l.b16 %v220
    %v1148 = vunpack.c.h.b16 %v220
    %v1149 = vunpack.c.l.b16 %v221
    %v1150 = vunpack.c.h.b16 %v221
    %v1151 = vunpack.c.l.b16 %v222
    %v1152 = vunpack.c.h.b16 %v222
    %v1153 = vunpack.c.l.b16 %v223
    %v1154 = vunpack.c.h.b16 %v223
    %v1155 = vunpack.c.l.b16 %v224
    %v1156 = vunpack.c.h.b16 %v224
    %v1157 = vunpack.c.l.b16 %v225
    %v1158 = vunpack.c.h.b16 %v225
    %v1159 = vunpack.c.l.b16 %v226
    %v1160 = vunpack.c.h.b16 %v226
    %v1161 = vunpack.c.l.b16 %v227
    %v1162 = vunpack.c.h.b16 %v227
    %v1163 = vunpack.c.l.b16 %v228
    %v1164 = vunpack.c.h.b16 %v228
    %v1165 = vunpack.c.l.b16 %v229
    %v1166 = vunpack.c.h.b16 %v229
    %v1167 = vunpack.c.l.b16 %v230
    %v1168 = vunpack.c.h.b16 %v230
    %v1169 = vunpack.c.l.b16 %v231
    %v1170 = vunpack.c.h.b16 %v231
    %v1171 = vunpack.c.l.b16 %v232
    %v1172 = vunpack.c.h.b16 %v232
    %v1173 = vunpack.c.l.b16 %v233
    %v1174 = vunpack.c.h.b16 %v233
    %v1175 = vunpack.c.l.b16 %v234
    %v1176 = vunpack.c.h.b16 %v234
    %v1177 = vunpack.c.l.b16 %v235
    %v1178 = vunpack.c.h.b16 %v235
    %v1179 = vunpack.c.l.b16 %v236
    %v1180 = vunpack.c.h.b16 %v236
    %v1181 = vunpack.c.l.b16 %v237
    %v1182 = vunpack.c.h.b16 %v237
    %v1183 = vunpack.c.l.b16 %v238
    %v1184 = vunpack.c.h.b16 %v238
    %v1185 = vunpack.c.l.b16 %v239
    %v1186 = vunpack.c.h.b16 %v239
    %v1187 = vunpack.c.l.b16 %v240
    %v1188 = vunpack.c.h.b16 %v240
    %v1189 = vunpack.c.l.b16 %v241
    %v1190 = vunpack.c.h.b16 %v241
    %v1191 = vunpack.c.l.b16 %v242
    %v1192 = vunpack.c.h.b16 %v242
    %v1193 = vunpack.c.l.b16 %v243
    %v1194 = vunpack.c.h.b16 %v243
    %v1195 = vunpack.c.l.b16 %v244
    %v1196 = vunpack.c.h.b16 %v244
    %v1197 = vunpack.c.l.b16 %v245
    %v1198 = vunpack.c.h.b16 %v245
    %v1199 = vunpack.c.l.b16 %v246
    %v1200 = vunpack.c.h.b16 %v246
    %v1201 = vunpack.c.l.b16 %v247
    %v1202 = vunpack.c.h.b16 %v247
    %v1203 = vunpack.c.l.b16 %v248
    %v1204 = vunpack.c.h.b16 %v248
    %v1205 = vunpack.c.l.b16 %v249
    %v1206 = vunpack.c.h.b16 %v249
    %v1207 = vunpack.c.l.b16 %v250
    %v1208 = vunpack.c.h.b16 %v250
    %v1209 = vunpack.c.l.b16 %v251
    %v1210 = vunpack.c.h.b16 %v251
    %v1211 = vunpack.c.l.b16 %v252
    %v1212 = vunpack.c.h.b16 %v252
    %v1213 = vunpack.c.l.b16 %v253
    %v1214 = vunpack.c.h.b16 %v253
    %v1215 = vunpack.c.l.b16 %v254
    %v1216 = vunpack.c.h.b16 %v254
    %v1217 = vunpack.c.l.b16 %v255
    %v1218 = vunpack.c.h.b16 %v255
    %v1219 = vunpack.c.l.b16 %v256
    %v1220 = vunpack.c.h.b16 %v256
    %v1221 = vunpack.c.l.b16 %v257
    %v1222 = vunpack.c.h.b16 %v257
    %v1223 = vunpack.c.l.b16 %v258
    %v1224 = vunpack.c.h.b16 %v258
    %v1225 = vunpack.c.l.b16 %v259
    %v1226 = vunpack.c.h.b16 %v259
    %v1227 = vunpack.c.l.b16 %v260
    %v1228 = vunpack.c.h.b16 %v260
    %v1229 = vunpack.c.l.b16 %v261
    %v1230 = vunpack.c.h.b16 %v261
    %v1231 = vunpack.c.l.b16 %v262
    %v1232 = vunpack.c.h.b16 %v262
    %v1233 = vunpack.c.l.b16 %v263
    %v1234 = vunpack.c.h.b16 %v263
    %v1235 = vunpack.c.l.b16 %v264
    %v1236 = vunpack.c.h.b16 %v264
    %v1237 = vunpack.c.l.b16 %v265
    %v1238 = vunpack.c.h.b16 %v265
    %v1239 = vunpack.c.l.b16 %v266
    %v1240 = vunpack.c.h.b16 %v266
    %v1241 = vunpack.c.l.b16 %v267
    %v1242 = vunpack.c.h.b16 %v267
    %v1243 = vunpack.c.l.b16 %v268
    %v1244 = vunpack.c.h.b16 %v268
    %v1245 = vunpack.c.l.b16 %v269
    %v1246 = vunpack.c.h.b16 %v269
    %v1247 = vunpack.c.l.b16 %v270
    %v1248 = vunpack.c.h.b16 %v270
    %v1249 = vunpack.c.l.b16 %v271
    %v1250 = vunpack.c.h.b16 %v271
    %v1251 = vunpack.c.l.b16 %v272
    %v1252 = vunpack.c.h.b16 %v272
    %v1253 = vunpack.c.l.b16 %v273
    %v1254 = vunpack.c.h.b16 %v273
    %v1255 = vunpack.c.l.b16 %v274
    %v1256 = vunpack.c.h.b16 %v274
    %v1257 = vunpack.c.l.b16 %v275
    %v1258 = vunpack.c.h.b16 %v275
    %v1259 = vunpack.c.l.b16 %v276
    %v1260 = vunpack.c.h.b16 %v276
    %v1261 = vunpack.c.l.b16 %v277
    %v1262 = vunpack.c.h.b16 %v277
    %v1263 = vunpack.c.l.b16 %v278
    %v1264 = vunpack.c.h.b16 %v278
    %v1265 = vunpack.c.l.b16 %v279
    %v1266 = vunpack.c.h.b16 %v279
    %v1267 = vunpack.c.l.b16 %v280
    %v1268 = vunpack.c.h.b16 %v280
    %v1269 = vunpack.c.l.b16 %v281
    %v1270 = vunpack.c.h.b16 %v281
    %v1271 = vunpack.c.l.b16 %v282
    %v1272 = vunpack.c.h.b16 %v282
    %v1273 = vunpack.c.l.b16 %v283
    %v1274 = vunpack.c.h.b16 %v283
    %v1275 = vunpack.c.l.b16 %v284
    %v1276 = vunpack.c.h.b16 %v284
    %v1277 = vunpack.c.l.b16 %v285
    %v1278 = vunpack.c.h.b16 %v285
    %v1279 = vunpack.c.l.b16 %v286
    %v1280 = vunpack.c.h.b16 %v286
    %v1281 = vunpack.c.l.b16 %v287
    %v1282 = vunpack.c.h.b16 %v287
    %v1283 = vunpack.c.l.b16 %v288
    %v1284 = vunpack.c.h.b16 %v288
    %v1285 = vunpack.c.l.b16 %v289
    %v1286 = vunpack.c.h.b16 %v289
    %v1287 = vunpack.c.l.b16 %v290
    %v1288 = vunpack.c.h.b16 %v290
    %v1289 = vunpack.c.l.b16 %v291
    %v1290 = vunpack.c.h.b16 %v291
    %v1291 = vunpack.c.l.b16 %v292
    %v1292 = vunpack.c.h.b16 %v292
    %v1293 = vunpack.c.l.b16 %v293
    %v1294 = vunpack.c.h.b16 %v293
    %v1295 = vunpack.c.l.b16 %v294
    %v1296 = vunpack.c.h.b16 %v294
    %v1297 = vunpack.c.l.b16 %v295
    %v1298 = vunpack.c.h.b16 %v295
    %v1299 = vunpack.c.l.b16 %v296
    %v1300 = vunpack.c.h.b16 %v296
    %v1301 = vunpack.c.l.b16 %v297
    %v1302 = vunpack.c.h.b16 %v297
    %v1303 = vunpack.c.l.b16 %v298
    %v1304 = vunpack.c.h.b16 %v298
    %v1305 = vunpack.c.l.b16 %v299
    %v1306 = vunpack.c.h.b16 %v299
    %v1307 = vunpack.c.l.b16 %v300
    %v1308 = vunpack.c.h.b16 %v300
    %v1309 = vunpack.c.l.b16 %v301
    %v1310 = vunpack.c.h.b16 %v301
    %v1311 = vunpack.c.l.b16 %v302
    %v1312 = vunpack.c.h.b16 %v302
    %v1313 = vunpack.c.l.b16 %v303
    %v1314 = vunpack.c.h.b16 %v303
    %v1315 = vunpack.c.l.b16 %v304
    %v1316 = vunpack.c.h.b16 %v304
    %v1317 = vunpack.c.l.b16 %v305
    %v1318 = vunpack.c.h.b16 %v305
    %v1319 = vunpack.c.l.b16 %v306
    %v1320 = vunpack.c.h.b16 %v306
    %v1321 = vunpack.c.l.b16 %v307
    %v1322 = vunpack.c.h.b16 %v307
    %v1323 = vunpack.c.l.b16 %v308
    %v1324 = vunpack.c.h.b16 %v308
    %v1325 = vunpack.c.l.b16 %v309
    %v1326 = vunpack.c.h.b16 %v309
    %v1327 = vunpack.c.l.b16 %v310
    %v1328 = vunpack.c.h.b16 %v310
    %v1329 = vunpack.c.l.b16 %v311
    %v1330 = vunpack.c.h.b16 %v311
    %v1331 = vunpack.c.l.b16 %v312
    %v1332 = vunpack.c.h.b16 %v312
    %v1333 = vunpack.c.l.b16 %v313
    %v1334 = vunpack.c.h.b16 %v313
    %v1335 = vunpack.c.l.b16 %v314
    %v1336 = vunpack.c.h.b16 %v314
    %v1337 = vunpack.c.l.b16 %v315
    %v1338 = vunpack.c.h.b16 %v315
    %v1339 = vunpack.c.l.b16 %v316
    %v1340 = vunpack.c.h.b16 %v316
    %v1341 = vunpack.c.l.b16 %v317
    %v1342 = vunpack.c.h.b16 %v317
    %v1343 = vunpack.c.l.b16 %v318
    %v1344 = vunpack.c.h.b16 %v318
    %v1345 = vunpack.c.l.b16 %v319
    %v1346 = vunpack.c.h.b16 %v319
    %v1347 = vunpack.c.l.b16 %v320
    %v1348 = vunpack.c.h.b16 %v320
    %v1349 = vunpack.c.l.b16 %v321
    %v1350 = vunpack.c.h.b16 %v321
    %v1351 = vunpack.c.l.b16 %v322
    %v1352 = vunpack.c.h.b16 %v322
    %v1353 = vunpack.c.l.b16 %v323
    %v1354 = vunpack.c.h.b16 %v323
    %v1355 = vunpack.c.l.b16 %v324
    %v1356 = vunpack.c.h.b16 %v324
    %v1357 = vunpack.c.l.b16 %v325
    %v1358 = vunpack.c.h.b16 %v325
    %v1359 = vunpack.c.l.b16 %v326
    %v1360 = vunpack.c.h.b16 %v326
    %v1361 = vunpack.c.l.b16 %v327
    %v1362 = vunpack.c.h.b16 %v327
    %v1363 = vunpack.c.l.b16 %v328
    %v1364 = vunpack.c.h.b16 %v328
    %v1365 = vunpack.c.l.b16 %v329
    %v1366 = vunpack.c.h.b16 %v329
    %v1367 = vunpack.c.l.b16 %v330
    %v1368 = vunpack.c.h.b16 %v330
    %v1369 = vunpack.c.l.b16 %v331
    %v1370 = vunpack.c.h.b16 %v331
    %v1371 = vunpack.c.l.b16 %v332
    %v1372 = vunpack.c.h.b16 %v332
    %v1373 = vunpack.c.l.b16 %v333
    %v1374 = vunpack.c.h.b16 %v333
    %v1375 = vunpack.c.l.b16 %v334
    %v1376 = vunpack.c.h.b16 %v334
    %v1377 = vunpack.c.l.b16 %v335
    %v1378 = vunpack.c.h.b16 %v335
    %v1379 = vunpack.c.l.b16 %v336
    %v1380 = vunpack.c.h.b16 %v336
    %v1381 = vunpack.c.l.b16 %v337
    %v1382 = vunpack.c.h.b16 %v337
    %v1383 = vunpack.c.l.b16 %v338
    %v1384 = vunpack.c.h.b16 %v338
    %v1385 = vunpack.c.l.b16 %v339
    %v1386 = vunpack.c.h.b16 %v339
    %v1387 = vunpack.c.l.b16 %v340
    %v1388 = vunpack.c.h.b16 %v340
    %v1389 = vunpack.c.l.b16 %v341
    %v1390 = vunpack.c.h.b16 %v341
    %v1391 = vunpack.c.l.b16 %v342
    %v1392 = vunpack.c.h.b16 %v342
    %v1393 = vunpack.c.l.b16 %v343
    %v1394 = vunpack.c.h.b16 %v343
    %v1395 = vunpack.c.l.b16 %v344
    %v1396 = vunpack.c.h.b16 %v344
    %v1397 = vunpack.c.l.b16 %v345
    %v1398 = vunpack.c.h.b16 %v345
    %v1399 = vunpack.c.l.b16 %v346
    %v1400 = vunpack.c.h.b16 %v346
    %v1401 = vunpack.c.l.b16 %v347
    %v1402 = vunpack.c.h.b16 %v347
    %v1403 = vunpack.c.l.b16 %v348
    %v1404 = vunpack.c.h.b16 %v348
    %v1405 = vunpack.c.l.b16 %v349
    %v1406 = vunpack.c.h.b16 %v349
    %v1407 = vunpack.c.l.b16 %v350
    %v1408 = vunpack.c.h.b16 %v350
    %v1409 = vunpack.c.l.b16 %v351
    %v1410 = vunpack.c.h.b16 %v351
    %v1411 = vunpack.c.l.b16 %v352
    %v1412 = vunpack.c.h.b16 %v352
    %v1413 = vunpack.c.l.b16 %v353
    %v1414 = vunpack.c.h.b16 %v353
    %v1415 = vunpack.c.l.b16 %v354
    %v1416 = vunpack.c.h.b16 %v354
    %v1417 = vunpack.c.l.b16 %v355
    %v1418 = vunpack.c.h.b16 %v355
    %v1419 = vunpack.c.l.b16 %v356
    %v1420 = vunpack.c.h.b16 %v356
    %v1421 = vunpack.c.l.b16 %v357
    %v1422 = vunpack.c.h.b16 %v357
    %v1423 = vunpack.c.l.b16 %v358
    %v1424 = vunpack.c.h.b16 %v358
    %v1425 = vunpack.c.l.b16 %v359
    %v1426 = vunpack.c.h.b16 %v359
    %v1427 = vunpack.c.l.b16 %v360
    %v1428 = vunpack.c.h.b16 %v360
    %v1429 = vunpack.c.l.b16 %v361
    %v1430 = vunpack.c.h.b16 %v361
    %v1431 = vunpack.c.l.b16 %v362
    %v1432 = vunpack.c.h.b16 %v362
    %v1433 = vunpack.c.l.b16 %v363
    %v1434 = vunpack.c.h.b16 %v363
    %v1435 = vunpack.c.l.b16 %v364
    %v1436 = vunpack.c.h.b16 %v364
    %v1437 = vunpack.c.l.b16 %v365
    %v1438 = vunpack.c.h.b16 %v365
    %v1439 = vunpack.c.l.b16 %v366
    %v1440 = vunpack.c.h.b16 %v366
    %v1441 = vunpack.c.l.b16 %v367
    %v1442 = vunpack.c.h.b16 %v367
    %v1443 = vunpack.c.l.b16 %v368
    %v1444 = vunpack.c.h.b16 %v368
    %v1445 = vunpack.c.l.b16 %v369
    %v1446 = vunpack.c.h.b16 %v369
    %v1447 = vunpack.c.l.b16 %v370
    %v1448 = vunpack.c.h.b16 %v370
    %v1449 = vunpack.c.l.b16 %v371
    %v1450 = vunpack.c.h.b16 %v371
    %v1451 = vunpack.c.l.b16 %v372
    %v1452 = vunpack.c.h.b16 %v372
    %v1453 = vunpack.c.l.b16 %v373
    %v1454 = vunpack.c.h.b16 %v373
    %v1455 = vunpack.c.l.b16 %v374
    %v1456 = vunpack.c.h.b16 %v374
    %v1457 = vunpack.c.l.b16 %v375
    %v1458 = vunpack.c.h.b16 %v375
    %v1459 = vunpack.c.l.b16 %v376
    %v1460 = vunpack.c.h.b16 %v376
    %v1461 = vunpack.c.l.b16 %v377
    %v1462 = vunpack.c.h.b16 %v377
    %v1463 = vunpack.c.l.b16 %v378
    %v1464 = vunpack.c.h.b16 %v378
    %v1465 = vunpack.c.l.b16 %v379
    %v1466 = vunpack.c.h.b16 %v379
    %v1467 = vunpack.c.l.b16 %v380
    %v1468 = vunpack.c.h.b16 %v380
    %v1469 = vunpack.c.l.b16 %v381
    %v1470 = vunpack.c.h.b16 %v381
    %v1471 = vunpack.c.l.b16 %v382
    %v1472 = vunpack.c.h.b16 %v382
    %v1473 = vunpack.c.l.b16 %v383
    %v1474 = vunpack.c.h.b16 %v383
    %v1475 = vunpack.c.l.b16 %v384
    %v1476 = vunpack.c.h.b16 %v384
    %v1477 = vunpack.c.l.b16 %v385
    %v1478 = vunpack.c.h.b16 %v385
    %v1479 = vunpack.c.l.b16 %v386
    %v1480 = vunpack.c.h.b16 %v386
    %v1481 = vunpack.c.l.b16 %v387
    %v1482 = vunpack.c.h.b16 %v387
    %v1483 = vunpack.c.l.b16 %v388
    %v1484 = vunpack.c.h.b16 %v388
    %v1485 = vunpack.c.l.b16 %v389
    %v1486 = vunpack.c.h.b16 %v389
    %v1487 = vunpack.c.l.b16 %v390
    %v1488 = vunpack.c.h.b16 %v390
    %v1489 = vunpack.c.l.b16 %v391
    %v1490 = vunpack.c.h.b16 %v391
    %v1491 = vunpack.c.l.b16 %v392
    %v1492 = vunpack.c.h.b16 %v392
    %v1493 = vunpack.c.l.b16 %v393
    %v1494 = vunpack.c.h.b16 %v393
    %v1495 = vunpack.c.l.b16 %v394
    %v1496 = vunpack.c.h.b16 %v394
    %v1497 = vunpack.c.l.b16 %v395
    %v1498 = vunpack.c.h.b16 %v395
    %v1499 = vunpack.c.l.b16 %v396
    %v1500 = vunpack.c.h.b16 %v396
    %v1501 = vunpack.c.l.b16 %v397
    %v1502 = vunpack.c.h.b16 %v397
    %v1503 = vunpack.c.l.b16 %v398
    %v1504 = vunpack.c.h.b16 %v398
    %v1505 = vunpack.c.l.b16 %v399
    %v1506 = vunpack.c.h.b16 %v399
    %v1507 = vunpack.c.l.b16 %v400
    %v1508 = vunpack.c.h.b16 %v400
    %v1509 = vunpack.c.l.b16 %v401
    %v1510 = vunpack.c.h.b16 %v401
    %v1511 = vunpack.c.l.b16 %v402
    %v1512 = vunpack.c.h.b16 %v402
    %v1513 = vpack.c.b16 %v1005, %v1001
    %v1514 = vpack.c.b16 %v1006, %v1002
    %v1515 = vpack.c.b16 %v1007, %v1003
    %v1516 = vpack.c.b16 %v1008, %v1004
    %v1517 = vpack.c.b16 %v1013, %v1009
    %v1518 = vpack.c.b16 %v1014, %v1010
    %v1519 = vpack.c.b16 %v1015, %v1011
    %v1520 = vpack.c.b16 %v1016, %v1012
    %v1521 = vpack.c.b16 %v1021, %v1017
    %v1522 = vpack.c.b16 %v1022, %v1018
    %v1523 = vpack.c.b16 %v1023, %v1019
    %v1524 = vpack.c.b16 %v1024, %v1020
    %v1525 = vpack.c.b16 %v1029, %v1025
    %v1526 = vpack.c.b16 %v1030, %v1026
    %v1527 = vpack.c.b16 %v1031, %v1027
    %v1528 = vpack.c.b16 %v1032, %v1028
    %v1529 = vpack.c.b16 %v1037, %v1033
    %v1530 = vpack.c.b16 %v1038, %v1034
    %v1531 = vpack.c.b16 %v1039, %v1035
    %v1532 = vpack.c.b16 %v1040, %v1036
    %v1533 = vpack.c.b16 %v1045, %v1041
    %v1534 = vpack.c.b16 %v1046, %v1042
    %v1535 = vpack.c.b16 %v1047, %v1043
    %v1536 = vpack.c.b16 %v1048, %v1044
    %v1537 = vpack.c.b16 %v1053, %v1049
    %v1538 = vpack.c.b16 %v1054, %v1050
    %v1539 = vpack.c.b16 %v1055, %v1051
    %v1540 = vpack.c.b16 %v1056, %v1052
    %v1541 = vpack.c.b16 %v1061, %v1057
    %v1542 = vpack.c.b16 %v1062, %v1058
    %v1543 = vpack.c.b16 %v1063, %v1059
    %v1544 = vpack.c.b16 %v1064, %v1060
    %v1545 = vpack.c.b16 %v1069, %v1065
    %v1546 = vpack.c.b16 %v1070, %v1066
    %v1547 = vpack.c.b16 %v1071, %v1067
    %v1548 = vpack.c.b16 %v1072, %v1068
    %v1549 = vpack.c.b16 %v1077, %v1073
    %v1550 = vpack.c.b16 %v1078, %v1074
    %v1551 = vpack.c.b16 %v1079, %v1075
    %v1552 = vpack.c.b16 %v1080, %v1076
    %v1553 = vpack.c.b16 %v1085, %v1081
    %v1554 = vpack.c.b16 %v1086, %v1082
    %v1555 = vpack.c.b16 %v1087, %v1083
    %v1556 = vpack.c.b16 %v1088, %v1084
    %v1557 = vpack.c.b16 %v1093, %v1089
    %v1558 = vpack.c.b16 %v1094, %v1090
    %v1559 = vpack.c.b16 %v1095, %v1091
    %v1560 = vpack.c.b16 %v1096, %v1092
    %v1561 = vpack.c.b16 %v1101, %v1097
    %v1562 = vpack.c.b16 %v1102, %v1098
    %v1563 = vpack.c.b16 %v1103, %v1099
    %v1564 = vpack.c.b16 %v1104, %v1100
    %v1565 = vpack.c.b16 %v1109, %v1105
    %v1566 = vpack.c.b16 %v1110, %v1106
    %v1567 = vpack.c.b16 %v1111, %v1107
    %v1568 = vpack.c.b16 %v1112, %v1108
    %v1569 = vpack.c.b16 %v1117, %v1113
    %v1570 = vpack.c.b16 %v1118, %v1114
    %v1571 = vpack.c.b16 %v1119, %v1115
    %v1572 = vpack.c.b16 %v1120, %v1116
    %v1573 = vpack.c.b16 %v1125, %v1121
    %v1574 = vpack.c.b16 %v1126, %v1122
    %v1575 = vpack.c.b16 %v1127, %v1123
    %v1576 = vpack.c.b16 %v1128, %v1124
    %v1577 = vpack.c.b16 %v1133, %v1129
    %v1578 = vpack.c.b16 %v1134, %v1130
    %v1579 = vpack.c.b16 %v1135, %v1131
    %v1580 = vpack.c.b16 %v1136, %v1132
    %v1581 = vpack.c.b16 %v1141, %v1137
    %v1582 = vpack.c.b16 %v1142, %v1138
    %v1583 = vpack.c.b16 %v1143, %v1139
    %v1584 = vpack.c.b16 %v1144, %v1140
    %v1585 = vpack.c.b16 %v1149, %v1145
    %v1586 = vpack.c.b16 %v1150, %v1146
    %v1587 = vpack.c.b16 %v1151, %v1147
    %v1588 = vpack.c.b16 %v1152, %v1148
    %v1589 = vpack.c.b16 %v1157, %v1153
    %v1590 = vpack.c.b16 %v1158, %v1154
    %v1591 = vpack.c.b16 %v1159, %v1155
    %v1592 = vpack.c.b16 %v1160, %v1156
    %v1593 = vpack.c.b16 %v1165, %v1161
    %v1594 = vpack.c.b16 %v1166, %v1162
    %v1595 = vpack.c.b16 %v1167, %v1163
    %v1596 = vpack.c.b16 %v1168, %v1164
    %v1597 = vpack.c.b16 %v1173, %v1169
    %v1598 = vpack.c.b16 %v1174, %v1170
    %v1599 = vpack.c.b16 %v1175, %v1171
    %v1600 = vpack.c.b16 %v1176, %v1172
    %v1601 = vpack.c.b16 %v1181, %v1177
    %v1602 = vpack.c.b16 %v1182, %v1178
    %v1603 = vpack.c.b16 %v1183, %v1179
    %v1604 = vpack.c.b16 %v1184, %v1180
    %v1605 = vpack.c.b16 %v1189, %v1185
    %v1606 = vpack.c.b16 %v1190, %v1186
    %v1607 = vpack.c.b16 %v1191, %v1187
    %v1608 = vpack.c.b16 %v1192, %v1188
    %v1609 = vpack.c.b16 %v1197, %v1193
    %v1610 = vpack.c.b16 %v1198, %v1194
    %v1611 = vpack.c.b16 %v1199, %v1195
    %v1612 = vpack.c.b16 %v1200, %v1196
    %v1613 = vpack.c.b16 %v1205, %v1201
    %v1614 = vpack.c.b16 %v1206, %v1202
    %v1615 = vpack.c.b16 %v1207, %v1203
    %v1616 = vpack.c.b16 %v1208, %v1204
    %v1617 = vpack.c.b16 %v1213, %v1209
    %v1618 = vpack.c.b16 %v1214, %v1210
    %v1619 = vpack.c.b16 %v1215, %v1211
    %v1620 = vpack.c.b16 %v1216, %v1212
    %v1621 = vpack.c.b16 %v1221, %v1217
    %v1622 = vpack.c.b16 %v1222, %v1218
    %v1623 = vpack.c.b16 %v1223, %v1219
    %v1624 = vpack.c.b16 %v1224, %v1220
    %v1625 = vpack.c.b16 %v1229, %v1225
    %v1626 = vpack.c.b16 %v1230, %v1226
    %v1627 = vpack.c.b16 %v1231, %v1227
    %v1628 = vpack.c.b16 %v1232, %v1228
    %v1629 = vpack.c.b16 %v1237, %v1233
    %v1630 = vpack.c.b16 %v1238, %v1234
    %v1631 = vpack.c.b16 %v1239, %v1235
    %v1632 = vpack.c.b16 %v1240, %v1236
    %v1633 = vpack.c.b16 %v1245, %v1241
    %v1634 = vpack.c.b16 %v1246, %v1242
    %v1635 = vpack.c.b16 %v1247, %v1243
    %v1636 = vpack.c.b16 %v1248, %v1244
    %v1637 = vpack.c.b16 %v1253, %v1249
    %v1638 = vpack.c.b16 %v1254, %v1250
    %v1639 = vpack.c.b16 %v1255, %v1251
    %v1640 = vpack.c.b16 %v1256, %v1252
    %v1641 = vpack.c.b16 %v1261, %v1257
    %v1642 = vpack.c.b16 %v1262, %v1258
    %v1643 = vpack.c.b16 %v1263, %v1259
    %v1644 = vpack.c.b16 %v1264, %v1260
    %v1645 = vpack.c.b16 %v1269, %v1265
    %v1646 = vpack.c.b16 %v1270, %v1266
    %v1647 = vpack.c.b16 %v1271, %v1267
    %v1648 = vpack.c.b16 %v1272, %v1268
    %v1649 = vpack.c.b16 %v1277, %v1273
    %v1650 = vpack.c.b16 %v1278, %v1274
    %v1651 = vpack.c.b16 %v1279, %v1275
    %v1652 = vpack.c.b16 %v1280, %v1276
    %v1653 = vpack.c.b16 %v1285, %v1281
    %v1654 = vpack.c.b16 %v1286, %v1282
    %v1655 = vpack.c.b16 %v1287, %v1283
    %v1656 = vpack.c.b16 %v1288, %v1284
    %v1657 = vpack.c.b16 %v1293, %v1289
    %v1658 = vpack.c.b16 %v1294, %v1290
    %v1659 = vpack.c.b16 %v1295, %v1291
    %v1660 = vpack.c.b16 %v1296, %v1292
    %v1661 = vpack.c.b16 %v1301, %v1297
    %v1662 = vpack.c.b16 %v1302, %v1298
    %v1663 = vpack.c.b16 %v1303, %v1299
    %v1664 = vpack.c.b16 %v1304, %v1300
    %v1665 = vpack.c.b16 %v1309, %v1305
    %v1666 = vpack.c.b16 %v1310, %v1306
    %v1667 = vpack.c.b16 %v1311, %v1307
    %v1668 = vpack.c.b16 %v1312, %v1308
    %v1669 = vpack.c.b16 %v1317, %v1313
    %v1670 = vpack.c.b16 %v1318, %v1314
    %v1671 = vpack.c.b16 %v1319, %v1315
    %v1672 = vpack.c.b16 %v1320, %v1316
    %v1673 = vpack.c.b16 %v1325, %v1321
    %v1674 = vpack.c.b16 %v1326, %v1322
    %v1675 = vpack.c.b16 %v1327, %v1323
    %v1676 = vpack.c.b16 %v1328, %v1324
    %v1677 = vpack.c.b16 %v1333, %v1329
    %v1678 = vpack.c.b16 %v1334, %v1330
    %v1679 = vpack.c.b16 %v1335, %v1331
    %v1680 = vpack.c.b16 %v1336, %v1332
    %v1681 = vpack.c.b16 %v1341, %v1337
    %v1682 = vpack.c.b16 %v1342, %v1338
    %v1683 = vpack.c.b16 %v1343, %v1339
    %v1684 = vpack.c.b16 %v1344, %v1340
    %v1685 = vpack.c.b16 %v1349, %v1345
    %v1686 = vpack.c.b16 %v1350, %v1346
    %v1687 = vpack.c.b16 %v1351, %v1347
    %v1688 = vpack.c.b16 %v1352, %v1348
    %v1689 = vpack.c.b16 %v1357, %v1353
    %v1690 = vpack.c.b16 %v1358, %v1354
    %v1691 = vpack.c.b16 %v1359, %v1355
    %v1692 = vpack.c.b16 %v1360, %v1356
    %v1693 = vpack.c.b16 %v1365, %v1361
    %v1694 = vpack.c.b16 %v1366, %v1362
    %v1695 = vpack.c.b16 %v1367, %v1363
    %v1696 = vpack.c.b16 %v1368, %v1364
    %v1697 = vpack.c.b16 %v1373, %v1369
    %v1698 = vpack.c.b16 %v1374, %v1370
    %v1699 = vpack.c.b16 %v1375, %v1371
    %v1700 = vpack.c.b16 %v1376, %v1372
    %v1701 = vpack.c.b16 %v1381, %v1377
    %v1702 = vpack.c.b16 %v1382, %v1378
    %v1703 = vpack.c.b16 %v1383, %v1379
    %v1704 = vpack.c.b16 %v1384, %v1380
    %v1705 = vpack.c.b16 %v1389, %v1385
    %v1706 = vpack.c.b16 %v1390, %v1386
    %v1707 = vpack.c.b16 %v1391, %v1387
    %v1708 = vpack.c.b16 %v1392, %v1388
    %v1709 = vpack.c.b16 %v1397, %v1393
    %v1710 = vpack.c.b16 %v1398, %v1394
    %v1711 = vpack.c.b16 %v1399, %v1395
    %v1712 = vpack.c.b16 %v1400, %v1396
    %v1713 = vpack.c.b16 %v1405, %v1401
    %v1714 = vpack.c.b16 %v1406, %v1402
    %v1715 = vpack.c.b16 %v1407, %v1403
    %v1716 = vpack.c.b16 %v1408, %v1404
    %v1717 = vpack.c.b16 %v1413, %v1409
    %v1718 = vpack.c.b16 %v1414, %v1410
    %v1719 = vpack.c.b16 %v1415, %v1411
    %v1720 = vpack.c.b16 %v1416, %v1412
    %v1721 = vpack.c.b16 %v1421, %v1417
    %v1722 = vpack.c.b16 %v1422, %v1418
    %v1723 = vpack.c.b16 %v1423, %v1419
    %v1724 = vpack.c.b16 %v1424, %v1420
    %v1725 = vpack.c.b16 %v1429, %v1425
    %v1726 = vpack.c.b16 %v1430, %v1426
    %v1727 = vpack.c.b16 %v1431, %v1427
    %v1728 = vpack.c.b16 %v1432, %v1428
    %v1729 = vpack.c.b16 %v1437, %v1433
    %v1730 = vpack.c.b16 %v1438, %v1434
    %v1731 = vpack.c.b16 %v1439, %v1435
    %v1732 = vpack.c.b16 %v1440, %v1436
    %v1733 = vpack.c.b16 %v1445, %v1441
    %v1734 = vpack.c.b16 %v1446, %v1442
    %v1735 = vpack.c.b16 %v1447, %v1443
    %v1736 = vpack.c.b16 %v1448, %v1444
    %v1737 = vpack.c.b16 %v1453, %v1449
    %v1738 = vpack.c.b16 %v1454, %v1450
    %v1739 = vpack.c.b16 %v1455, %v1451
    %v1740 = vpack.c.b16 %v1456, %v1452
    %v1741 = vpack.c.b16 %v1461, %v1457
    %v1742 = vpack.c.b16 %v1462, %v1458
    %v1743 = vpack.c.b16 %v1463, %v1459
    %v1744 = vpack.c.b16 %v1464, %v1460
    %v1745 = vpack.c.b16 %v1469, %v1465
    %v1746 = vpack.c.b16 %v1470, %v1466
    %v1747 = vpack.c.b16 %v1471, %v1467
    %v1748 = vpack.c.b16 %v1472, %v1468
    %v1749 = vpack.c.b16 %v1477, %v1473
    %v1750 = vpack.c.b16 %v1478, %v1474
    %v1751 = vpack.c.b16 %v1479, %v1475
    %v1752 = vpack.c.b16 %v1480, %v1476
    %v1753 = vpack.c.b16 %v1485, %v1481
    %v1754 = vpack.c.b16 %v1486, %v1482
    %v1755 = vpack.c.b16 %v1487, %v1483
    %v1756 = vpack.c.b16 %v1488, %v1484
    %v1757 = vpack.c.b16 %v1493, %v1489
    %v1758 = vpack.c.b16 %v1494, %v1490
    %v1759 = vpack.c.b16 %v1495, %v1491
    %v1760 = vpack.c.b16 %v1496, %v1492
    %v1761 = vpack.c.b16 %v1501, %v1497
    %v1762 = vpack.c.b16 %v1502, %v1498
    %v1763 = vpack.c.b16 %v1503, %v1499
    %v1764 = vpack.c.b16 %v1504, %v1500
    %v1765 = vpack.c.b16 %v1509, %v1505
    %v1766 = vpack.c.b16 %v1510, %v1506
    %v1767 = vpack.c.b16 %v1511, %v1507
    %v1768 = vpack.c.b16 %v1512, %v1508
    %2025 = vmatprep.subr.bf16.mxu0 %v1514
    %2026 = vmatpush1.bf16.msra.mxu0 %v1513
    %2027 = vmatprep.subr.bf16.mxu0 %v1518
    %2028 = vmatpush1.bf16.msra.mxu0 %v1517
    %2029 = vmatprep.subr.bf16.mxu0 %v1522
    %2030 = vmatpush1.bf16.msra.mxu0 %v1521
    %2031 = vmatprep.subr.bf16.mxu0 %v1526
    %2032 = vmatpush1.bf16.msra.mxu0 %v1525
    %2033 = vmatprep.subr.bf16.mxu0 %v1530
    %2034 = vmatpush1.bf16.msra.mxu0 %v1529
    %2035 = vmatprep.subr.bf16.mxu0 %v1534
    %2036 = vmatpush1.bf16.msra.mxu0 %v1533
    %2037 = vmatprep.subr.bf16.mxu0 %v1538
    %2038 = vmatpush1.bf16.msra.mxu0 %v1537
    %2039 = vmatprep.subr.bf16.mxu0 %v1542
    %2040 = vmatpush1.bf16.msra.mxu0 %v1541
    %2041 = vmatprep.subr.bf16.mxu0 %v1546
    %2042 = vmatpush1.bf16.msra.mxu0 %v1545
    %2043 = vmatprep.subr.bf16.mxu0 %v1550
    %2044 = vmatpush1.bf16.msra.mxu0 %v1549
    %2045 = vmatprep.subr.bf16.mxu0 %v1554
    %2046 = vmatpush1.bf16.msra.mxu0 %v1553
    %2047 = vmatprep.subr.bf16.mxu0 %v1558
    %2048 = vmatpush1.bf16.msra.mxu0 %v1557
    %2049 = vmatprep.subr.bf16.mxu0 %v1562
    %2050 = vmatpush1.bf16.msra.mxu0 %v1561
    %2051 = vmatprep.subr.bf16.mxu0 %v1566
    %2052 = vmatpush1.bf16.msra.mxu0 %v1565
    %2053 = vmatprep.subr.bf16.mxu0 %v1570
    %2054 = vmatpush1.bf16.msra.mxu0 %v1569
    %2055 = vmatprep.subr.bf16.mxu0 %v1574
    %2056 = vmatpush1.bf16.msra.mxu0 %v1573
    %2057 = vmatprep.mubr.bf16.mxu0 %v618
    %2058 = vmatmul.mubr.bf16.gmra.mrb[0].mxu0 %v617
    %v2059 = vpop.f32.mrb[0].mxu0
    %v2060 = vadd.f32 %v408, %v2059
    %v2061 = vpop.f32.mrb[0].mxu0
    %v2062 = vadd.f32 %v412, %v2061
    %v2063 = vpop.f32.mrb[0].mxu0
    %v2064 = vadd.f32 %v408, %v2063
    %v2065 = vpop.f32.mrb[0].mxu0
    %v2066 = vadd.f32 %v412, %v2065
    %2067 = vmatprep.mubr.bf16.mxu0 %v626
    %2068 = vmatmul.mubr.bf16.gmra.mrb[0].mxu0 %v625
    %v2069 = vpop.f32.mrb[0].mxu0
    %v2070 = vadd.f32 %v408, %v2069
    %v2071 = vpop.f32.mrb[0].mxu0
    %v2072 = vadd.f32 %v412, %v2071
    %v2073 = vpop.f32.mrb[0].mxu0
    %v2074 = vadd.f32 %v408, %v2073
    %v2075 = vpop.f32.mrb[0].mxu0
    %v2076 = vadd.f32 %v412, %v2075
    %2077 = vmatprep.mubr.bf16.mxu0 %v634
    %2078 = vmatmul.mubr.bf16.gmra.mrb[0].mxu0 %v633
    %v2079 = vpop.f32.mrb[0].mxu0
    %v2080 = vadd.f32 %v408, %v2079
    %v2081 = vpop.f32.mrb[0].mxu0
    %v2082 = vadd.f32 %v412, %v2081
    %v2083 = vpop.f32.mrb[0].mxu0
    %v2084 = vadd.f32 %v408, %v2083
    %v2085 = vpop.f32.mrb[0].mxu0
    %v2086 = vadd.f32 %v412, %v2085
    %2087 = vmatprep.mubr.bf16.mxu0 %v642
    %2088 = vmatmul.mubr.bf16.gmra.mrb[0].mxu0 %v641
    %v2089 = vpop.f32.mrb[0].mxu0
    %v2090 = vadd.f32 %v408, %v2089
    %v2091 = vpop.f32.mrb[0].mxu0
    %v2092 = vadd.f32 %v412, %v2091
    %v2093 = vpop.f32.mrb[0].mxu0
    %v2094 = vadd.f32 %v408, %v2093
    %v2095 = vpop.f32.mrb[0].mxu0
    %v2096 = vadd.f32 %v412, %v2095
    %2097 = vmatprep.mubr.bf16.mxu0 %v650
    %2098 = vmatmul.mubr.bf16.gmra.mrb[0].mxu0 %v649
    %v2099 = vpop.f32.mrb[0].mxu0
    %v2100 = vadd.f32 %v408, %v2099
    %v2101 = vpop.f32.mrb[0].mxu0
    %v2102 = vadd.f32 %v412, %v2101
    %v2103 = vpop.f32.mrb[0].mxu0
    %v2104 = vadd.f32 %v408, %v2103
    %v2105 = vpop.f32.mrb[0].mxu0
    %v2106 = vadd.f32 %v412, %v2105
    %2107 = vmatprep.mubr.bf16.mxu0 %v658
    %2108 = vmatmul.mubr.bf16.gmra.mrb[0].mxu0 %v657
    %v2109 = vpop.f32.mrb[0].mxu0
    %v2110 = vadd.f32 %v408, %v2109
    %v2111 = vpop.f32.mrb[0].mxu0
    %v2112 = vadd.f32 %v412, %v2111
    %v2113 = vpop.f32.mrb[0].mxu0
    %v2114 = vadd.f32 %v408, %v2113
    %v2115 = vpop.f32.mrb[0].mxu0
    %v2116 = vadd.f32 %v412, %v2115
    %2117 = vmatprep.mubr.bf16.mxu0 %v666
    %2118 = vmatmul.mubr.bf16.gmra.mrb[0].mxu0 %v665
    %v2119 = vpop.f32.mrb[0].mxu0
    %v2120 = vadd.f32 %v408, %v2119
    %v2121 = vpop.f32.mrb[0].mxu0
    %v2122 = vadd.f32 %v412, %v2121
    %v2123 = vpop.f32.mrb[0].mxu0
    %v2124 = vadd.f32 %v408, %v2123
    %v2125 = vpop.f32.mrb[0].mxu0
    %v2126 = vadd.f32 %v412, %v2125
    %2127 = vmatprep.mubr.bf16.mxu0 %v674
    %2128 = vmatmul.mubr.bf16.gmra.mrb[0].mxu0 %v673
    %v2129 = vpop.f32.mrb[0].mxu0
    %v2130 = vadd.f32 %v408, %v2129
    %v2131 = vpop.f32.mrb[0].mxu0
    %v2132 = vadd.f32 %v412, %v2131
    %v2133 = vpop.f32.mrb[0].mxu0
    %v2134 = vadd.f32 %v408, %v2133
    %v2135 = vpop.f32.mrb[0].mxu0
    %v2136 = vadd.f32 %v412, %v2135
    %2137 = vdwg.mxu0
    %2138 = vmatprep.subr.bf16.mxu0 %v1578
    %2139 = vmatpush1.bf16.msra.mxu0 %v1577
    %2140 = vmatprep.subr.bf16.mxu0 %v1582
    %2141 = vmatpush1.bf16.msra.mxu0 %v1581
    %2142 = vmatprep.subr.bf16.mxu0 %v1586
    %2143 = vmatpush1.bf16.msra.mxu0 %v1585
    %2144 = vmatprep.subr.bf16.mxu0 %v1590
    %2145 = vmatpush1.bf16.msra.mxu0 %v1589
    %2146 = vmatprep.subr.bf16.mxu0 %v1594
    %2147 = vmatpush1.bf16.msra.mxu0 %v1593
    %2148 = vmatprep.subr.bf16.mxu0 %v1598
    %2149 = vmatpush1.bf16.msra.mxu0 %v1597
    %2150 = vmatprep.subr.bf16.mxu0 %v1602
    %2151 = vmatpush1.bf16.msra.mxu0 %v1601
    %2152 = vmatprep.subr.bf16.mxu0 %v1606
    %2153 = vmatpush1.bf16.msra.mxu0 %v1605
    %2154 = vmatprep.subr.bf16.mxu0 %v1610
    %2155 = vmatpush1.bf16.msra.mxu0 %v1609
    %2156 = vmatprep.subr.bf16.mxu0 %v1614
    %2157 = vmatpush1.bf16.msra.mxu0 %v1613
    %2158 = vmatprep.subr.bf16.mxu0 %v1618
    %2159 = vmatpush1.bf16.msra.mxu0 %v1617
    %2160 = vmatprep.subr.bf16.mxu0 %v1622
    %2161 = vmatpush1.bf16.msra.mxu0 %v1621
    %2162 = vmatprep.subr.bf16.mxu0 %v1626
    %2163 = vmatpush1.bf16.msra.mxu0 %v1625
    %2164 = vmatprep.subr.bf16.mxu0 %v1630
    %2165 = vmatpush1.bf16.msra.mxu0 %v1629
    %2166 = vmatprep.subr.bf16.mxu0 %v1634
    %2167 = vmatpush1.bf16.msra.mxu0 %v1633
    %2168 = vmatprep.subr.bf16.mxu0 %v1638
    %2169 = vmatpush1.bf16.msra.mxu0 %v1637
    %2170 = vmatprep.mubr.bf16.mxu0 %v620
    %2171 = vmatmul.mubr.bf16.gmra.mrb[0].mxu0 %v619
    %v2172 = vpop.f32.mrb[0].mxu0
    %v2173 = vadd.f32 %v2060, %v2172
    %v2174 = vpop.f32.mrb[0].mxu0
    %v2175 = vadd.f32 %v2062, %v2174
    %v2176 = vpop.f32.mrb[0].mxu0
    %v2177 = vadd.f32 %v2064, %v2176
    %v2178 = vpop.f32.mrb[0].mxu0
    %v2179 = vadd.f32 %v2066, %v2178
    %2180 = vmatprep.mubr.bf16.mxu0 %v628
    %2181 = vmatmul.mubr.bf16.gmra.mrb[0].mxu0 %v627
    %v2182 = vpop.f32.mrb[0].mxu0
    %v2183 = vadd.f32 %v2070, %v2182
    %v2184 = vpop.f32.mrb[0].mxu0
    %v2185 = vadd.f32 %v2072, %v2184
    %v2186 = vpop.f32.mrb[0].mxu0
    %v2187 = vadd.f32 %v2074, %v2186
    %v2188 = vpop.f32.mrb[0].mxu0
    %v2189 = vadd.f32 %v2076, %v2188
    %2190 = vmatprep.mubr.bf16.mxu0 %v636
    %2191 = vmatmul.mubr.bf16.gmra.mrb[0].mxu0 %v635
    %v2192 = vpop.f32.mrb[0].mxu0
    %v2193 = vadd.f32 %v2080, %v2192
    %v2194 = vpop.f32.mrb[0].mxu0
    %v2195 = vadd.f32 %v2082, %v2194
    %v2196 = vpop.f32.mrb[0].mxu0
    %v2197 = vadd.f32 %v2084, %v2196
    %v2198 = vpop.f32.mrb[0].mxu0
    %v2199 = vadd.f32 %v2086, %v2198
    %2200 = vmatprep.mubr.bf16.mxu0 %v644
    %2201 = vmatmul.mubr.bf16.gmra.mrb[0].mxu0 %v643
    %v2202 = vpop.f32.mrb[0].mxu0
    %v2203 = vadd.f32 %v2090, %v2202
    %v2204 = vpop.f32.mrb[0].mxu0
    %v2205 = vadd.f32 %v2092, %v2204
    %v2206 = vpop.f32.mrb[0].mxu0
    %v2207 = vadd.f32 %v2094, %v2206
    %v2208 = vpop.f32.mrb[0].mxu0
    %v2209 = vadd.f32 %v2096, %v2208
    %2210 = vmatprep.mubr.bf16.mxu0 %v652
    %2211 = vmatmul.mubr.bf16.gmra.mrb[0].mxu0 %v651
    %v2212 = vpop.f32.mrb[0].mxu0
    %v2213 = vadd.f32 %v2100, %v2212
    %v2214 = vpop.f32.mrb[0].mxu0
    %v2215 = vadd.f32 %v2102, %v2214
    %v2216 = vpop.f32.mrb[0].mxu0
    %v2217 = vadd.f32 %v2104, %v2216
    %v2218 = vpop.f32.mrb[0].mxu0
    %v2219 = vadd.f32 %v2106, %v2218
    %2220 = vmatprep.mubr.bf16.mxu0 %v660
    %2221 = vmatmul.mubr.bf16.gmra.mrb[0].mxu0 %v659
    %v2222 = vpop.f32.mrb[0].mxu0
    %v2223 = vadd.f32 %v2110, %v2222
    %v2224 = vpop.f32.mrb[0].mxu0
    %v2225 = vadd.f32 %v2112, %v2224
    %v2226 = vpop.f32.mrb[0].mxu0
    %v2227 = vadd.f32 %v2114, %v2226
    %v2228 = vpop.f32.mrb[0].mxu0
    %v2229 = vadd.f32 %v2116, %v2228
    %2230 = vmatprep.mubr.bf16.mxu0 %v668
    %2231 = vmatmul.mubr.bf16.gmra.mrb[0].mxu0 %v667
    %v2232 = vpop.f32.mrb[0].mxu0
    %v2233 = vadd.f32 %v2120, %v2232
    %v2234 = vpop.f32.mrb[0].mxu0
    %v2235 = vadd.f32 %v2122, %v2234
    %v2236 = vpop.f32.mrb[0].mxu0
    %v2237 = vadd.f32 %v2124, %v2236
    %v2238 = vpop.f32.mrb[0].mxu0
    %v2239 = vadd.f32 %v2126, %v2238
    %2240 = vmatprep.mubr.bf16.mxu0 %v676
    %2241 = vmatmul.mubr.bf16.gmra.mrb[0].mxu0 %v675
    %v2242 = vpop.f32.mrb[0].mxu0
    %v2243 = vadd.f32 %v2130, %v2242
    %v2244 = vpop.f32.mrb[0].mxu0
    %v2245 = vadd.f32 %v2132, %v2244
    %v2246 = vpop.f32.mrb[0].mxu0
    %v2247 = vadd.f32 %v2134, %v2246
    %v2248 = vpop.f32.mrb[0].mxu0
    %v2249 = vadd.f32 %v2136, %v2248
    %2250 = vdwg.mxu0
    %2251 = vmatprep.subr.bf16.mxu0 %v1642
    %2252 = vmatpush1.bf16.msra.mxu0 %v1641
    %2253 = vmatprep.subr.bf16.mxu0 %v1646
    %2254 = vmatpush1.bf16.msra.mxu0 %v1645
    %2255 = vmatprep.subr.bf16.mxu0 %v1650
    %2256 = vmatpush1.bf16.msra.mxu0 %v1649
    %2257 = vmatprep.subr.bf16.mxu0 %v1654
    %2258 = vmatpush1.bf16.msra.mxu0 %v1653
    %2259 = vmatprep.subr.bf16.mxu0 %v1658
    %2260 = vmatpush1.bf16.msra.mxu0 %v1657
    %2261 = vmatprep.subr.bf16.mxu0 %v1662
    %2262 = vmatpush1.bf16.msra.mxu0 %v1661
    %2263 = vmatprep.subr.bf16.mxu0 %v1666
    %2264 = vmatpush1.bf16.msra.mxu0 %v1665
    %2265 = vmatprep.subr.bf16.mxu0 %v1670
    %2266 = vmatpush1.bf16.msra.mxu0 %v1669
    %2267 = vmatprep.subr.bf16.mxu0 %v1674
    %2268 = vmatpush1.bf16.msra.mxu0 %v1673
    %2269 = vmatprep.subr.bf16.mxu0 %v1678
    %2270 = vmatpush1.bf16.msra.mxu0 %v1677
    %2271 = vmatprep.subr.bf16.mxu0 %v1682
    %2272 = vmatpush1.bf16.msra.mxu0 %v1681
    %2273 = vmatprep.subr.bf16.mxu0 %v1686
    %2274 = vmatpush1.bf16.msra.mxu0 %v1685
    %2275 = vmatprep.subr.bf16.mxu0 %v1690
    %2276 = vmatpush1.bf16.msra.mxu0 %v1689
    %2277 = vmatprep.subr.bf16.mxu0 %v1694
    %2278 = vmatpush1.bf16.msra.mxu0 %v1693
    %2279 = vmatprep.subr.bf16.mxu0 %v1698
    %2280 = vmatpush1.bf16.msra.mxu0 %v1697
    %2281 = vmatprep.subr.bf16.mxu0 %v1702
    %2282 = vmatpush1.bf16.msra.mxu0 %v1701
    %2283 = vmatprep.mubr.bf16.mxu0 %v622
    %2284 = vmatmul.mubr.bf16.gmra.mrb[0].mxu0 %v621
    %v2285 = vpop.f32.mrb[0].mxu0
    %v2286 = vadd.f32 %v2173, %v2285
    %v2287 = vpop.f32.mrb[0].mxu0
    %v2288 = vadd.f32 %v2175, %v2287
    %v2289 = vpop.f32.mrb[0].mxu0
    %v2290 = vadd.f32 %v2177, %v2289
    %v2291 = vpop.f32.mrb[0].mxu0
    %v2292 = vadd.f32 %v2179, %v2291
    %2293 = vmatprep.mubr.bf16.mxu0 %v630
    %2294 = vmatmul.mubr.bf16.gmra.mrb[0].mxu0 %v629
    %v2295 = vpop.f32.mrb[0].mxu0
    %v2296 = vadd.f32 %v2183, %v2295
    %v2297 = vpop.f32.mrb[0].mxu0
    %v2298 = vadd.f32 %v2185, %v2297
    %v2299 = vpop.f32.mrb[0].mxu0
    %v2300 = vadd.f32 %v2187, %v2299
    %v2301 = vpop.f32.mrb[0].mxu0
    %v2302 = vadd.f32 %v2189, %v2301
    %2303 = vmatprep.mubr.bf16.mxu0 %v638
    %2304 = vmatmul.mubr.bf16.gmra.mrb[0].mxu0 %v637
    %v2305 = vpop.f32.mrb[0].mxu0
    %v2306 = vadd.f32 %v2193, %v2305
    %v2307 = vpop.f32.mrb[0].mxu0
    %v2308 = vadd.f32 %v2195, %v2307
    %v2309 = vpop.f32.mrb[0].mxu0
    %v2310 = vadd.f32 %v2197, %v2309
    %v2311 = vpop.f32.mrb[0].mxu0
    %v2312 = vadd.f32 %v2199, %v2311
    %2313 = vmatprep.mubr.bf16.mxu0 %v646
    %2314 = vmatmul.mubr.bf16.gmra.mrb[0].mxu0 %v645
    %v2315 = vpop.f32.mrb[0].mxu0
    %v2316 = vadd.f32 %v2203, %v2315
    %v2317 = vpop.f32.mrb[0].mxu0
    %v2318 = vadd.f32 %v2205, %v2317
    %v2319 = vpop.f32.mrb[0].mxu0
    %v2320 = vadd.f32 %v2207, %v2319
    %v2321 = vpop.f32.mrb[0].mxu0
    %v2322 = vadd.f32 %v2209, %v2321
    %2323 = vmatprep.mubr.bf16.mxu0 %v654
    %2324 = vmatmul.mubr.bf16.gmra.mrb[0].mxu0 %v653
    %v2325 = vpop.f32.mrb[0].mxu0
    %v2326 = vadd.f32 %v2213, %v2325
    %v2327 = vpop.f32.mrb[0].mxu0
    %v2328 = vadd.f32 %v2215, %v2327
    %v2329 = vpop.f32.mrb[0].mxu0
    %v2330 = vadd.f32 %v2217, %v2329
    %v2331 = vpop.f32.mrb[0].mxu0
    %v2332 = vadd.f32 %v2219, %v2331
    %2333 = vmatprep.mubr.bf16.mxu0 %v662
    %2334 = vmatmul.mubr.bf16.gmra.mrb[0].mxu0 %v661
    %v2335 = vpop.f32.mrb[0].mxu0
    %v2336 = vadd.f32 %v2223, %v2335
    %v2337 = vpop.f32.mrb[0].mxu0
    %v2338 = vadd.f32 %v2225, %v2337
    %v2339 = vpop.f32.mrb[0].mxu0
    %v2340 = vadd.f32 %v2227, %v2339
    %v2341 = vpop.f32.mrb[0].mxu0
    %v2342 = vadd.f32 %v2229, %v2341
    %2343 = vmatprep.mubr.bf16.mxu0 %v670
    %2344 = vmatmul.mubr.bf16.gmra.mrb[0].mxu0 %v669
    %v2345 = vpop.f32.mrb[0].mxu0
    %v2346 = vadd.f32 %v2233, %v2345
    %v2347 = vpop.f32.mrb[0].mxu0
    %v2348 = vadd.f32 %v2235, %v2347
    %v2349 = vpop.f32.mrb[0].mxu0
    %v2350 = vadd.f32 %v2237, %v2349
    %v2351 = vpop.f32.mrb[0].mxu0
    %v2352 = vadd.f32 %v2239, %v2351
    %2353 = vmatprep.mubr.bf16.mxu0 %v678
    %2354 = vmatmul.mubr.bf16.gmra.mrb[0].mxu0 %v677
    %v2355 = vpop.f32.mrb[0].mxu0
    %v2356 = vadd.f32 %v2243, %v2355
    %v2357 = vpop.f32.mrb[0].mxu0
    %v2358 = vadd.f32 %v2245, %v2357
    %v2359 = vpop.f32.mrb[0].mxu0
    %v2360 = vadd.f32 %v2247, %v2359
    %v2361 = vpop.f32.mrb[0].mxu0
    %v2362 = vadd.f32 %v2249, %v2361
    %2363 = vdwg.mxu0
    %2364 = vmatprep.subr.bf16.mxu0 %v1706
    %2365 = vmatpush1.bf16.msra.mxu0 %v1705
    %2366 = vmatprep.subr.bf16.mxu0 %v1710
    %2367 = vmatpush1.bf16.msra.mxu0 %v1709
    %2368 = vmatprep.subr.bf16.mxu0 %v1714
    %2369 = vmatpush1.bf16.msra.mxu0 %v1713
    %2370 = vmatprep.subr.bf16.mxu0 %v1718
    %2371 = vmatpush1.bf16.msra.mxu0 %v1717
    %2372 = vmatprep.subr.bf16.mxu0 %v1722
    %2373 = vmatpush1.bf16.msra.mxu0 %v1721
    %2374 = vmatprep.subr.bf16.mxu0 %v1726
    %2375 = vmatpush1.bf16.msra.mxu0 %v1725
    %2376 = vmatprep.subr.bf16.mxu0 %v1730
    %2377 = vmatpush1.bf16.msra.mxu0 %v1729
    %2378 = vmatprep.subr.bf16.mxu0 %v1734
    %2379 = vmatpush1.bf16.msra.mxu0 %v1733
    %2380 = vmatprep.subr.bf16.mxu0 %v1738
    %2381 = vmatpush1.bf16.msra.mxu0 %v1737
    %2382 = vmatprep.subr.bf16.mxu0 %v1742
    %2383 = vmatpush1.bf16.msra.mxu0 %v1741
    %2384 = vmatprep.subr.bf16.mxu0 %v1746
    %2385 = vmatpush1.bf16.msra.mxu0 %v1745
    %2386 = vmatprep.subr.bf16.mxu0 %v1750
    %2387 = vmatpush1.bf16.msra.mxu0 %v1749
    %2388 = vmatprep.subr.bf16.mxu0 %v1754
    %2389 = vmatpush1.bf16.msra.mxu0 %v1753
    %2390 = vmatprep.subr.bf16.mxu0 %v1758
    %2391 = vmatpush1.bf16.msra.mxu0 %v1757
    %2392 = vmatprep.subr.bf16.mxu0 %v1762
    %2393 = vmatpush1.bf16.msra.mxu0 %v1761
    %2394 = vmatprep.subr.bf16.mxu0 %v1766
    %2395 = vmatpush1.bf16.msra.mxu0 %v1765
    %2396 = vmatprep.mubr.bf16.mxu0 %v624
    %2397 = vmatmul.mubr.bf16.gmra.mrb[0].mxu0 %v623
    %v2398 = vpop.f32.mrb[0].mxu0
    %v2399 = vadd.f32 %v2286, %v2398
    %v2400 = vpop.f32.mrb[0].mxu0
    %v2401 = vadd.f32 %v2288, %v2400
    %v2402 = vpop.f32.mrb[0].mxu0
    %v2403 = vadd.f32 %v2290, %v2402
    %v2404 = vpop.f32.mrb[0].mxu0
    %v2405 = vadd.f32 %v2292, %v2404
    %2406 = vmatprep.mubr.bf16.mxu0 %v632
    %2407 = vmatmul.mubr.bf16.gmra.mrb[0].mxu0 %v631
    %v2408 = vpop.f32.mrb[0].mxu0
    %v2409 = vadd.f32 %v2296, %v2408
    %v2410 = vpop.f32.mrb[0].mxu0
    %v2411 = vadd.f32 %v2298, %v2410
    %v2412 = vpop.f32.mrb[0].mxu0
    %v2413 = vadd.f32 %v2300, %v2412
    %v2414 = vpop.f32.mrb[0].mxu0
    %v2415 = vadd.f32 %v2302, %v2414
    %2416 = vmatprep.mubr.bf16.mxu0 %v640
    %2417 = vmatmul.mubr.bf16.gmra.mrb[0].mxu0 %v639
    %v2418 = vpop.f32.mrb[0].mxu0
    %v2419 = vadd.f32 %v2306, %v2418
    %v2420 = vpop.f32.mrb[0].mxu0
    %v2421 = vadd.f32 %v2308, %v2420
    %v2422 = vpop.f32.mrb[0].mxu0
    %v2423 = vadd.f32 %v2310, %v2422
    %v2424 = vpop.f32.mrb[0].mxu0
    %v2425 = vadd.f32 %v2312, %v2424
    %2426 = vmatprep.mubr.bf16.mxu0 %v648
    %2427 = vmatmul.mubr.bf16.gmra.mrb[0].mxu0 %v647
    %v2428 = vpop.f32.mrb[0].mxu0
    %v2429 = vadd.f32 %v2316, %v2428
    %v2430 = vpop.f32.mrb[0].mxu0
    %v2431 = vadd.f32 %v2318, %v2430
    %v2432 = vpop.f32.mrb[0].mxu0
    %v2433 = vadd.f32 %v2320, %v2432
    %v2434 = vpop.f32.mrb[0].mxu0
    %v2435 = vadd.f32 %v2322, %v2434
    %2436 = vmatprep.mubr.bf16.mxu0 %v656
    %2437 = vmatmul.mubr.bf16.gmra.mrb[0].mxu0 %v655
    %v2438 = vpop.f32.mrb[0].mxu0
    %v2439 = vadd.f32 %v2326, %v2438
    %v2440 = vpop.f32.mrb[0].mxu0
    %v2441 = vadd.f32 %v2328, %v2440
    %v2442 = vpop.f32.mrb[0].mxu0
    %v2443 = vadd.f32 %v2330, %v2442
    %v2444 = vpop.f32.mrb[0].mxu0
    %v2445 = vadd.f32 %v2332, %v2444
    %2446 = vmatprep.mubr.bf16.mxu0 %v664
    %2447 = vmatmul.mubr.bf16.gmra.mrb[0].mxu0 %v663
    %v2448 = vpop.f32.mrb[0].mxu0
    %v2449 = vadd.f32 %v2336, %v2448
    %v2450 = vpop.f32.mrb[0].mxu0
    %v2451 = vadd.f32 %v2338, %v2450
    %v2452 = vpop.f32.mrb[0].mxu0
    %v2453 = vadd.f32 %v2340, %v2452
    %v2454 = vpop.f32.mrb[0].mxu0
    %v2455 = vadd.f32 %v2342, %v2454
    %2456 = vmatprep.mubr.bf16.mxu0 %v672
    %2457 = vmatmul.mubr.bf16.gmra.mrb[0].mxu0 %v671
    %v2458 = vpop.f32.mrb[0].mxu0
    %v2459 = vadd.f32 %v2346, %v2458
    %v2460 = vpop.f32.mrb[0].mxu0
    %v2461 = vadd.f32 %v2348, %v2460
    %v2462 = vpop.f32.mrb[0].mxu0
    %v2463 = vadd.f32 %v2350, %v2462
    %v2464 = vpop.f32.mrb[0].mxu0
    %v2465 = vadd.f32 %v2352, %v2464
    %2466 = vmatprep.mubr.bf16.mxu0 %v680
    %2467 = vmatmul.mubr.bf16.gmra.mrb[0].mxu0 %v679
    %v2468 = vpop.f32.mrb[0].mxu0
    %v2469 = vadd.f32 %v2356, %v2468
    %v2470 = vpop.f32.mrb[0].mxu0
    %v2471 = vadd.f32 %v2358, %v2470
    %v2472 = vpop.f32.mrb[0].mxu0
    %v2473 = vadd.f32 %v2360, %v2472
    %v2474 = vpop.f32.mrb[0].mxu0
    %v2475 = vadd.f32 %v2362, %v2474
    %2476 = vdwg.mxu0
    %2477 = vmatprep.subr.bf16.mxu0 %v1516
    %2478 = vmatpush1.bf16.msra.mxu0 %v1515
    %2479 = vmatprep.subr.bf16.mxu0 %v1520
    %2480 = vmatpush1.bf16.msra.mxu0 %v1519
    %2481 = vmatprep.subr.bf16.mxu0 %v1524
    %2482 = vmatpush1.bf16.msra.mxu0 %v1523
    %2483 = vmatprep.subr.bf16.mxu0 %v1528
    %2484 = vmatpush1.bf16.msra.mxu0 %v1527
    %2485 = vmatprep.subr.bf16.mxu0 %v1532
    %2486 = vmatpush1.bf16.msra.mxu0 %v1531
    %2487 = vmatprep.subr.bf16.mxu0 %v1536
    %2488 = vmatpush1.bf16.msra.mxu0 %v1535
    %2489 = vmatprep.subr.bf16.mxu0 %v1540
    %2490 = vmatpush1.bf16.msra.mxu0 %v1539
    %2491 = vmatprep.subr.bf16.mxu0 %v1544
    %2492 = vmatpush1.bf16.msra.mxu0 %v1543
    %2493 = vmatprep.subr.bf16.mxu0 %v1548
    %2494 = vmatpush1.bf16.msra.mxu0 %v1547
    %2495 = vmatprep.subr.bf16.mxu0 %v1552
    %2496 = vmatpush1.bf16.msra.mxu0 %v1551
    %2497 = vmatprep.subr.bf16.mxu0 %v1556
    %2498 = vmatpush1.bf16.msra.mxu0 %v1555
    %2499 = vmatprep.subr.bf16.mxu0 %v1560
    %2500 = vmatpush1.bf16.msra.mxu0 %v1559
    %2501 = vmatprep.subr.bf16.mxu0 %v1564
    %2502 = vmatpush1.bf16.msra.mxu0 %v1563
    %2503 = vmatprep.subr.bf16.mxu0 %v1568
    %2504 = vmatpush1.bf16.msra.mxu0 %v1567
    %2505 = vmatprep.subr.bf16.mxu0 %v1572
    %2506 = vmatpush1.bf16.msra.mxu0 %v1571
    %2507 = vmatprep.subr.bf16.mxu0 %v1576
    %2508 = vmatpush1.bf16.msra.mxu0 %v1575
    %2509 = vmatprep.mubr.bf16.mxu0 %v618
    %2510 = vmatmul.mubr.bf16.gmra.mrb[0].mxu0 %v617
    %v2511 = vpop.f32.mrb[0].mxu0
    %v2512 = vadd.f32 %v416, %v2511
    %v2513 = vpop.f32.mrb[0].mxu0
    %v2514 = vadd.f32 %v420, %v2513
    %v2515 = vpop.f32.mrb[0].mxu0
    %v2516 = vadd.f32 %v416, %v2515
    %v2517 = vpop.f32.mrb[0].mxu0
    %v2518 = vadd.f32 %v420, %v2517
    %2519 = vmatprep.mubr.bf16.mxu0 %v626
    %2520 = vmatmul.mubr.bf16.gmra.mrb[0].mxu0 %v625
    %v2521 = vpop.f32.mrb[0].mxu0
    %v2522 = vadd.f32 %v416, %v2521
    %v2523 = vpop.f32.mrb[0].mxu0
    %v2524 = vadd.f32 %v420, %v2523
    %v2525 = vpop.f32.mrb[0].mxu0
    %v2526 = vadd.f32 %v416, %v2525
    %v2527 = vpop.f32.mrb[0].mxu0
    %v2528 = vadd.f32 %v420, %v2527
    %2529 = vmatprep.mubr.bf16.mxu0 %v634
    %2530 = vmatmul.mubr.bf16.gmra.mrb[0].mxu0 %v633
    %v2531 = vpop.f32.mrb[0].mxu0
    %v2532 = vadd.f32 %v416, %v2531
    %v2533 = vpop.f32.mrb[0].mxu0
    %v2534 = vadd.f32 %v420, %v2533
    %v2535 = vpop.f32.mrb[0].mxu0
    %v2536 = vadd.f32 %v416, %v2535
    %v2537 = vpop.f32.mrb[0].mxu0
    %v2538 = vadd.f32 %v420, %v2537
    %2539 = vmatprep.mubr.bf16.mxu0 %v642
    %2540 = vmatmul.mubr.bf16.gmra.mrb[0].mxu0 %v641
    %v2541 = vpop.f32.mrb[0].mxu0
    %v2542 = vadd.f32 %v416, %v2541
    %v2543 = vpop.f32.mrb[0].mxu0
    %v2544 = vadd.f32 %v420, %v2543
    %v2545 = vpop.f32.mrb[0].mxu0
    %v2546 = vadd.f32 %v416, %v2545
    %v2547 = vpop.f32.mrb[0].mxu0
    %v2548 = vadd.f32 %v420, %v2547
    %2549 = vmatprep.mubr.bf16.mxu0 %v650
    %2550 = vmatmul.mubr.bf16.gmra.mrb[0].mxu0 %v649
    %v2551 = vpop.f32.mrb[0].mxu0
    %v2552 = vadd.f32 %v416, %v2551
    %v2553 = vpop.f32.mrb[0].mxu0
    %v2554 = vadd.f32 %v420, %v2553
    %v2555 = vpop.f32.mrb[0].mxu0
    %v2556 = vadd.f32 %v416, %v2555
    %v2557 = vpop.f32.mrb[0].mxu0
    %v2558 = vadd.f32 %v420, %v2557
    %2559 = vmatprep.mubr.bf16.mxu0 %v658
    %2560 = vmatmul.mubr.bf16.gmra.mrb[0].mxu0 %v657
    %v2561 = vpop.f32.mrb[0].mxu0
    %v2562 = vadd.f32 %v416, %v2561
    %v2563 = vpop.f32.mrb[0].mxu0
    %v2564 = vadd.f32 %v420, %v2563
    %v2565 = vpop.f32.mrb[0].mxu0
    %v2566 = vadd.f32 %v416, %v2565
    %v2567 = vpop.f32.mrb[0].mxu0
    %v2568 = vadd.f32 %v420, %v2567
    %2569 = vmatprep.mubr.bf16.mxu0 %v666
    %2570 = vmatmul.mubr.bf16.gmra.mrb[0].mxu0 %v665
    %v2571 = vpop.f32.mrb[0].mxu0
    %v2572 = vadd.f32 %v416, %v2571
    %v2573 = vpop.f32.mrb[0].mxu0
    %v2574 = vadd.f32 %v420, %v2573
    %v2575 = vpop.f32.mrb[0].mxu0
    %v2576 = vadd.f32 %v416, %v2575
    %v2577 = vpop.f32.mrb[0].mxu0
    %v2578 = vadd.f32 %v420, %v2577
    %2579 = vmatprep.mubr.bf16.mxu0 %v674
    %2580 = vmatmul.mubr.bf16.gmra.mrb[0].mxu0 %v673
    %v2581 = vpop.f32.mrb[0].mxu0
    %v2582 = vadd.f32 %v416, %v2581
    %v2583 = vpop.f32.mrb[0].mxu0
    %v2584 = vadd.f32 %v420, %v2583
    %v2585 = vpop.f32.mrb[0].mxu0
    %v2586 = vadd.f32 %v416, %v2585
    %v2587 = vpop.f32.mrb[0].mxu0
    %v2588 = vadd.f32 %v420, %v2587
    %2589 = vdwg.mxu0
    %2590 = vmatprep.subr.bf16.mxu0 %v1580
    %2591 = vmatpush1.bf16.msra.mxu0 %v1579
    %2592 = vmatprep.subr.bf16.mxu0 %v1584
    %2593 = vmatpush1.bf16.msra.mxu0 %v1583
    %2594 = vmatprep.subr.bf16.mxu0 %v1588
    %2595 = vmatpush1.bf16.msra.mxu0 %v1587
    %2596 = vmatprep.subr.bf16.mxu0 %v1592
    %2597 = vmatpush1.bf16.msra.mxu0 %v1591
    %2598 = vmatprep.subr.bf16.mxu0 %v1596
    %2599 = vmatpush1.bf16.msra.mxu0 %v1595
    %2600 = vmatprep.subr.bf16.mxu0 %v1600
    %2601 = vmatpush1.bf16.msra.mxu0 %v1599
    %2602 = vmatprep.subr.bf16.mxu0 %v1604
    %2603 = vmatpush1.bf16.msra.mxu0 %v1603
    %2604 = vmatprep.subr.bf16.mxu0 %v1608
    %2605 = vmatpush1.bf16.msra.mxu0 %v1607
    %2606 = vmatprep.subr.bf16.mxu0 %v1612
    %2607 = vmatpush1.bf16.msra.mxu0 %v1611
    %2608 = vmatprep.subr.bf16.mxu0 %v1616
    %2609 = vmatpush1.bf16.msra.mxu0 %v1615
    %2610 = vmatprep.subr.bf16.mxu0 %v1620
    %2611 = vmatpush1.bf16.msra.mxu0 %v1619
    %2612 = vmatprep.subr.bf16.mxu0 %v1624
    %2613 = vmatpush1.bf16.msra.mxu0 %v1623
    %2614 = vmatprep.subr.bf16.mxu0 %v1628
    %2615 = vmatpush1.bf16.msra.mxu0 %v1627
    %2616 = vmatprep.subr.bf16.mxu0 %v1632
    %2617 = vmatpush1.bf16.msra.mxu0 %v1631
    %2618 = vmatprep.subr.bf16.mxu0 %v1636
    %2619 = vmatpush1.bf16.msra.mxu0 %v1635
    %2620 = vmatprep.subr.bf16.mxu0 %v1640
    %2621 = vmatpush1.bf16.msra.mxu0 %v1639
    %2622 = vmatprep.mubr.bf16.mxu0 %v620
    %2623 = vmatmul.mubr.bf16.gmra.mrb[0].mxu0 %v619
    %v2624 = vpop.f32.mrb[0].mxu0
    %v2625 = vadd.f32 %v2512, %v2624
    %v2626 = vpop.f32.mrb[0].mxu0
    %v2627 = vadd.f32 %v2514, %v2626
    %v2628 = vpop.f32.mrb[0].mxu0
    %v2629 = vadd.f32 %v2516, %v2628
    %v2630 = vpop.f32.mrb[0].mxu0
    %v2631 = vadd.f32 %v2518, %v2630
    %2632 = vmatprep.mubr.bf16.mxu0 %v628
    %2633 = vmatmul.mubr.bf16.gmra.mrb[0].mxu0 %v627
    %v2634 = vpop.f32.mrb[0].mxu0
    %v2635 = vadd.f32 %v2522, %v2634
    %v2636 = vpop.f32.mrb[0].mxu0
    %v2637 = vadd.f32 %v2524, %v2636
    %v2638 = vpop.f32.mrb[0].mxu0
    %v2639 = vadd.f32 %v2526, %v2638
    %v2640 = vpop.f32.mrb[0].mxu0
    %v2641 = vadd.f32 %v2528, %v2640
    %2642 = vmatprep.mubr.bf16.mxu0 %v636
    %2643 = vmatmul.mubr.bf16.gmra.mrb[0].mxu0 %v635
    %v2644 = vpop.f32.mrb[0].mxu0
    %v2645 = vadd.f32 %v2532, %v2644
    %v2646 = vpop.f32.mrb[0].mxu0
    %v2647 = vadd.f32 %v2534, %v2646
    %v2648 = vpop.f32.mrb[0].mxu0
    %v2649 = vadd.f32 %v2536, %v2648
    %v2650 = vpop.f32.mrb[0].mxu0
    %v2651 = vadd.f32 %v2538, %v2650
    %2652 = vmatprep.mubr.bf16.mxu0 %v644
    %2653 = vmatmul.mubr.bf16.gmra.mrb[0].mxu0 %v643
    %v2654 = vpop.f32.mrb[0].mxu0
    %v2655 = vadd.f32 %v2542, %v2654
    %v2656 = vpop.f32.mrb[0].mxu0
    %v2657 = vadd.f32 %v2544, %v2656
    %v2658 = vpop.f32.mrb[0].mxu0
    %v2659 = vadd.f32 %v2546, %v2658
    %v2660 = vpop.f32.mrb[0].mxu0
    %v2661 = vadd.f32 %v2548, %v2660
    %2662 = vmatprep.mubr.bf16.mxu0 %v652
    %2663 = vmatmul.mubr.bf16.gmra.mrb[0].mxu0 %v651
    %v2664 = vpop.f32.mrb[0].mxu0
    %v2665 = vadd.f32 %v2552, %v2664
    %v2666 = vpop.f32.mrb[0].mxu0
    %v2667 = vadd.f32 %v2554, %v2666
    %v2668 = vpop.f32.mrb[0].mxu0
    %v2669 = vadd.f32 %v2556, %v2668
    %v2670 = vpop.f32.mrb[0].mxu0
    %v2671 = vadd.f32 %v2558, %v2670
    %2672 = vmatprep.mubr.bf16.mxu0 %v660
    %2673 = vmatmul.mubr.bf16.gmra.mrb[0].mxu0 %v659
    %v2674 = vpop.f32.mrb[0].mxu0
    %v2675 = vadd.f32 %v2562, %v2674
    %v2676 = vpop.f32.mrb[0].mxu0
    %v2677 = vadd.f32 %v2564, %v2676
    %v2678 = vpop.f32.mrb[0].mxu0
    %v2679 = vadd.f32 %v2566, %v2678
    %v2680 = vpop.f32.mrb[0].mxu0
    %v2681 = vadd.f32 %v2568, %v2680
    %2682 = vmatprep.mubr.bf16.mxu0 %v668
    %2683 = vmatmul.mubr.bf16.gmra.mrb[0].mxu0 %v667
    %v2684 = vpop.f32.mrb[0].mxu0
    %v2685 = vadd.f32 %v2572, %v2684
    %v2686 = vpop.f32.mrb[0].mxu0
    %v2687 = vadd.f32 %v2574, %v2686
    %v2688 = vpop.f32.mrb[0].mxu0
    %v2689 = vadd.f32 %v2576, %v2688
    %v2690 = vpop.f32.mrb[0].mxu0
    %v2691 = vadd.f32 %v2578, %v2690
    %2692 = vmatprep.mubr.bf16.mxu0 %v676
    %2693 = vmatmul.mubr.bf16.gmra.mrb[0].mxu0 %v675
    %v2694 = vpop.f32.mrb[0].mxu0
    %v2695 = vadd.f32 %v2582, %v2694
    %v2696 = vpop.f32.mrb[0].mxu0
    %v2697 = vadd.f32 %v2584, %v2696
    %v2698 = vpop.f32.mrb[0].mxu0
    %v2699 = vadd.f32 %v2586, %v2698
    %v2700 = vpop.f32.mrb[0].mxu0
    %v2701 = vadd.f32 %v2588, %v2700
    %2702 = vdwg.mxu0
    %2703 = vmatprep.subr.bf16.mxu0 %v1644
    %2704 = vmatpush1.bf16.msra.mxu0 %v1643
    %2705 = vmatprep.subr.bf16.mxu0 %v1648
    %2706 = vmatpush1.bf16.msra.mxu0 %v1647
    %2707 = vmatprep.subr.bf16.mxu0 %v1652
    %2708 = vmatpush1.bf16.msra.mxu0 %v1651
    %2709 = vmatprep.subr.bf16.mxu0 %v1656
    %2710 = vmatpush1.bf16.msra.mxu0 %v1655
    %2711 = vmatprep.subr.bf16.mxu0 %v1660
    %2712 = vmatpush1.bf16.msra.mxu0 %v1659
    %2713 = vmatprep.subr.bf16.mxu0 %v1664
    %2714 = vmatpush1.bf16.msra.mxu0 %v1663
    %2715 = vmatprep.subr.bf16.mxu0 %v1668
    %2716 = vmatpush1.bf16.msra.mxu0 %v1667
    %2717 = vmatprep.subr.bf16.mxu0 %v1672
    %2718 = vmatpush1.bf16.msra.mxu0 %v1671
    %2719 = vmatprep.subr.bf16.mxu0 %v1676
    %2720 = vmatpush1.bf16.msra.mxu0 %v1675
    %2721 = vmatprep.subr.bf16.mxu0 %v1680
    %2722 = vmatpush1.bf16.msra.mxu0 %v1679
    %2723 = vmatprep.subr.bf16.mxu0 %v1684
    %2724 = vmatpush1.bf16.msra.mxu0 %v1683
    %2725 = vmatprep.subr.bf16.mxu0 %v1688
    %2726 = vmatpush1.bf16.msra.mxu0 %v1687
    %2727 = vmatprep.subr.bf16.mxu0 %v1692
    %2728 = vmatpush1.bf16.msra.mxu0 %v1691
    %2729 = vmatprep.subr.bf16.mxu0 %v1696
    %2730 = vmatpush1.bf16.msra.mxu0 %v1695
    %2731 = vmatprep.subr.bf16.mxu0 %v1700
    %2732 = vmatpush1.bf16.msra.mxu0 %v1699
    %2733 = vmatprep.subr.bf16.mxu0 %v1704
    %2734 = vmatpush1.bf16.msra.mxu0 %v1703
    %2735 = vmatprep.mubr.bf16.mxu0 %v622
    %2736 = vmatmul.mubr.bf16.gmra.mrb[0].mxu0 %v621
    %v2737 = vpop.f32.mrb[0].mxu0
    %v2738 = vadd.f32 %v2625, %v2737
    %v2739 = vpop.f32.mrb[0].mxu0
    %v2740 = vadd.f32 %v2627, %v2739
    %v2741 = vpop.f32.mrb[0].mxu0
    %v2742 = vadd.f32 %v2629, %v2741
    %v2743 = vpop.f32.mrb[0].mxu0
    %v2744 = vadd.f32 %v2631, %v2743
    %2745 = vmatprep.mubr.bf16.mxu0 %v630
    %2746 = vmatmul.mubr.bf16.gmra.mrb[0].mxu0 %v629
    %v2747 = vpop.f32.mrb[0].mxu0
    %v2748 = vadd.f32 %v2635, %v2747
    %v2749 = vpop.f32.mrb[0].mxu0
    %v2750 = vadd.f32 %v2637, %v2749
    %v2751 = vpop.f32.mrb[0].mxu0
    %v2752 = vadd.f32 %v2639, %v2751
    %v2753 = vpop.f32.mrb[0].mxu0
    %v2754 = vadd.f32 %v2641, %v2753
    %2755 = vmatprep.mubr.bf16.mxu0 %v638
    %2756 = vmatmul.mubr.bf16.gmra.mrb[0].mxu0 %v637
    %v2757 = vpop.f32.mrb[0].mxu0
    %v2758 = vadd.f32 %v2645, %v2757
    %v2759 = vpop.f32.mrb[0].mxu0
    %v2760 = vadd.f32 %v2647, %v2759
    %v2761 = vpop.f32.mrb[0].mxu0
    %v2762 = vadd.f32 %v2649, %v2761
    %v2763 = vpop.f32.mrb[0].mxu0
    %v2764 = vadd.f32 %v2651, %v2763
    %2765 = vmatprep.mubr.bf16.mxu0 %v646
    %2766 = vmatmul.mubr.bf16.gmra.mrb[0].mxu0 %v645
    %v2767 = vpop.f32.mrb[0].mxu0
    %v2768 = vadd.f32 %v2655, %v2767
    %v2769 = vpop.f32.mrb[0].mxu0
    %v2770 = vadd.f32 %v2657, %v2769
    %v2771 = vpop.f32.mrb[0].mxu0
    %v2772 = vadd.f32 %v2659, %v2771
    %v2773 = vpop.f32.mrb[0].mxu0
    %v2774 = vadd.f32 %v2661, %v2773
    %2775 = vmatprep.mubr.bf16.mxu0 %v654
    %2776 = vmatmul.mubr.bf16.gmra.mrb[0].mxu0 %v653
    %v2777 = vpop.f32.mrb[0].mxu0
    %v2778 = vadd.f32 %v2665, %v2777
    %v2779 = vpop.f32.mrb[0].mxu0
    %v2780 = vadd.f32 %v2667, %v2779
    %v2781 = vpop.f32.mrb[0].mxu0
    %v2782 = vadd.f32 %v2669, %v2781
    %v2783 = vpop.f32.mrb[0].mxu0
    %v2784 = vadd.f32 %v2671, %v2783
    %2785 = vmatprep.mubr.bf16.mxu0 %v662
    %2786 = vmatmul.mubr.bf16.gmra.mrb[0].mxu0 %v661
    %v2787 = vpop.f32.mrb[0].mxu0
    %v2788 = vadd.f32 %v2675, %v2787
    %v2789 = vpop.f32.mrb[0].mxu0
    %v2790 = vadd.f32 %v2677, %v2789
    %v2791 = vpop.f32.mrb[0].mxu0
    %v2792 = vadd.f32 %v2679, %v2791
    %v2793 = vpop.f32.mrb[0].mxu0
    %v2794 = vadd.f32 %v2681, %v2793
    %2795 = vmatprep.mubr.bf16.mxu0 %v670
    %2796 = vmatmul.mubr.bf16.gmra.mrb[0].mxu0 %v669
    %v2797 = vpop.f32.mrb[0].mxu0
    %v2798 = vadd.f32 %v2685, %v2797
    %v2799 = vpop.f32.mrb[0].mxu0
    %v2800 = vadd.f32 %v2687, %v2799
    %v2801 = vpop.f32.mrb[0].mxu0
    %v2802 = vadd.f32 %v2689, %v2801
    %v2803 = vpop.f32.mrb[0].mxu0
    %v2804 = vadd.f32 %v2691, %v2803
    %2805 = vmatprep.mubr.bf16.mxu0 %v678
    %2806 = vmatmul.mubr.bf16.gmra.mrb[0].mxu0 %v677
    %v2807 = vpop.f32.mrb[0].mxu0
    %v2808 = vadd.f32 %v2695, %v2807
    %v2809 = vpop.f32.mrb[0].mxu0
    %v2810 = vadd.f32 %v2697, %v2809
    %v2811 = vpop.f32.mrb[0].mxu0
    %v2812 = vadd.f32 %v2699, %v2811
    %v2813 = vpop.f32.mrb[0].mxu0
    %v2814 = vadd.f32 %v2701, %v2813
    %2815 = vdwg.mxu0
    %2816 = vmatprep.subr.bf16.mxu0 %v1708
    %2817 = vmatpush1.bf16.msra.mxu0 %v1707
    %2818 = vmatprep.subr.bf16.mxu0 %v1712
    %2819 = vmatpush1.bf16.msra.mxu0 %v1711
    %2820 = vmatprep.subr.bf16.mxu0 %v1716
    %2821 = vmatpush1.bf16.msra.mxu0 %v1715
    %2822 = vmatprep.subr.bf16.mxu0 %v1720
    %2823 = vmatpush1.bf16.msra.mxu0 %v1719
    %2824 = vmatprep.subr.bf16.mxu0 %v1724
    %2825 = vmatpush1.bf16.msra.mxu0 %v1723
    %2826 = vmatprep.subr.bf16.mxu0 %v1728
    %2827 = vmatpush1.bf16.msra.mxu0 %v1727
    %2828 = vmatprep.subr.bf16.mxu0 %v1732
    %2829 = vmatpush1.bf16.msra.mxu0 %v1731
    %2830 = vmatprep.subr.bf16.mxu0 %v1736
    %2831 = vmatpush1.bf16.msra.mxu0 %v1735
    %2832 = vmatprep.subr.bf16.mxu0 %v1740
    %2833 = vmatpush1.bf16.msra.mxu0 %v1739
    %2834 = vmatprep.subr.bf16.mxu0 %v1744
    %2835 = vmatpush1.bf16.msra.mxu0 %v1743
    %2836 = vmatprep.subr.bf16.mxu0 %v1748
    %2837 = vmatpush1.bf16.msra.mxu0 %v1747
    %2838 = vmatprep.subr.bf16.mxu0 %v1752
    %2839 = vmatpush1.bf16.msra.mxu0 %v1751
    %2840 = vmatprep.subr.bf16.mxu0 %v1756
    %2841 = vmatpush1.bf16.msra.mxu0 %v1755
    %2842 = vmatprep.subr.bf16.mxu0 %v1760
    %2843 = vmatpush1.bf16.msra.mxu0 %v1759
    %2844 = vmatprep.subr.bf16.mxu0 %v1764
    %2845 = vmatpush1.bf16.msra.mxu0 %v1763
    %2846 = vmatprep.subr.bf16.mxu0 %v1768
    %2847 = vmatpush1.bf16.msra.mxu0 %v1767
    %2848 = vmatprep.mubr.bf16.mxu0 %v624
    %2849 = vmatmul.mubr.bf16.gmra.mrb[0].mxu0 %v623
    %v2850 = vpop.f32.mrb[0].mxu0
    %v2851 = vadd.f32 %v2738, %v2850
    %v2852 = vpop.f32.mrb[0].mxu0
    %v2853 = vadd.f32 %v2740, %v2852
    %v2854 = vpop.f32.mrb[0].mxu0
    %v2855 = vadd.f32 %v2742, %v2854
    %v2856 = vpop.f32.mrb[0].mxu0
    %v2857 = vadd.f32 %v2744, %v2856
    %2858 = vmatprep.mubr.bf16.mxu0 %v632
    %2859 = vmatmul.mubr.bf16.gmra.mrb[0].mxu0 %v631
    %v2860 = vpop.f32.mrb[0].mxu0
    %v2861 = vadd.f32 %v2748, %v2860
    %v2862 = vpop.f32.mrb[0].mxu0
    %v2863 = vadd.f32 %v2750, %v2862
    %v2864 = vpop.f32.mrb[0].mxu0
    %v2865 = vadd.f32 %v2752, %v2864
    %v2866 = vpop.f32.mrb[0].mxu0
    %v2867 = vadd.f32 %v2754, %v2866
    %2868 = vmatprep.mubr.bf16.mxu0 %v640
    %2869 = vmatmul.mubr.bf16.gmra.mrb[0].mxu0 %v639
    %v2870 = vpop.f32.mrb[0].mxu0
    %v2871 = vadd.f32 %v2758, %v2870
    %v2872 = vpop.f32.mrb[0].mxu0
    %v2873 = vadd.f32 %v2760, %v2872
    %v2874 = vpop.f32.mrb[0].mxu0
    %v2875 = vadd.f32 %v2762, %v2874
    %v2876 = vpop.f32.mrb[0].mxu0
    %v2877 = vadd.f32 %v2764, %v2876
    %2878 = vmatprep.mubr.bf16.mxu0 %v648
    %2879 = vmatmul.mubr.bf16.gmra.mrb[0].mxu0 %v647
    %v2880 = vpop.f32.mrb[0].mxu0
    %v2881 = vadd.f32 %v2768, %v2880
    %v2882 = vpop.f32.mrb[0].mxu0
    %v2883 = vadd.f32 %v2770, %v2882
    %v2884 = vpop.f32.mrb[0].mxu0
    %v2885 = vadd.f32 %v2772, %v2884
    %v2886 = vpop.f32.mrb[0].mxu0
    %v2887 = vadd.f32 %v2774, %v2886
    %2888 = vmatprep.mubr.bf16.mxu0 %v656
    %2889 = vmatmul.mubr.bf16.gmra.mrb[0].mxu0 %v655
    %v2890 = vpop.f32.mrb[0].mxu0
    %v2891 = vadd.f32 %v2778, %v2890
    %v2892 = vpop.f32.mrb[0].mxu0
    %v2893 = vadd.f32 %v2780, %v2892
    %v2894 = vpop.f32.mrb[0].mxu0
    %v2895 = vadd.f32 %v2782, %v2894
    %v2896 = vpop.f32.mrb[0].mxu0
    %v2897 = vadd.f32 %v2784, %v2896
    %2898 = vmatprep.mubr.bf16.mxu0 %v664
    %2899 = vmatmul.mubr.bf16.gmra.mrb[0].mxu0 %v663
    %v2900 = vpop.f32.mrb[0].mxu0
    %v2901 = vadd.f32 %v2788, %v2900
    %v2902 = vpop.f32.mrb[0].mxu0
    %v2903 = vadd.f32 %v2790, %v2902
    %v2904 = vpop.f32.mrb[0].mxu0
    %v2905 = vadd.f32 %v2792, %v2904
    %v2906 = vpop.f32.mrb[0].mxu0
    %v2907 = vadd.f32 %v2794, %v2906
    %2908 = vmatprep.mubr.bf16.mxu0 %v672
    %2909 = vmatmul.mubr.bf16.gmra.mrb[0].mxu0 %v671
    %v2910 = vpop.f32.mrb[0].mxu0
    %v2911 = vadd.f32 %v2798, %v2910
    %v2912 = vpop.f32.mrb[0].mxu0
    %v2913 = vadd.f32 %v2800, %v2912
    %v2914 = vpop.f32.mrb[0].mxu0
    %v2915 = vadd.f32 %v2802, %v2914
    %v2916 = vpop.f32.mrb[0].mxu0
    %v2917 = vadd.f32 %v2804, %v2916
    %2918 = vmatprep.mubr.bf16.mxu0 %v680
    %2919 = vmatmul.mubr.bf16.gmra.mrb[0].mxu0 %v679
    %v2920 = vpop.f32.mrb[0].mxu0
    %v2921 = vadd.f32 %v2808, %v2920
    %v2922 = vpop.f32.mrb[0].mxu0
    %v2923 = vadd.f32 %v2810, %v2922
    %v2924 = vpop.f32.mrb[0].mxu0
    %v2925 = vadd.f32 %v2812, %v2924
    %v2926 = vpop.f32.mrb[0].mxu0
    %v2927 = vadd.f32 %v2814, %v2926
    %2928 = vdwg.mxu0
    %vm2929 = vcmp.gt.f32.partialorder %v2399, 0.0
    %vm2930 = vcmp.gt.f32.partialorder %v2401, 0.0
    %vm2931 = vcmp.gt.f32.partialorder %v2851, 0.0
    %vm2932 = vcmp.gt.f32.partialorder %v2853, 0.0
    %vm2933 = vcmp.gt.f32.partialorder %v2403, 0.0
    %vm2934 = vcmp.gt.f32.partialorder %v2405, 0.0
    %vm2935 = vcmp.gt.f32.partialorder %v2855, 0.0
    %vm2936 = vcmp.gt.f32.partialorder %v2857, 0.0
    %vm2937 = vcmp.gt.f32.partialorder %v2409, 0.0
    %vm2938 = vcmp.gt.f32.partialorder %v2411, 0.0
    %vm2939 = vcmp.gt.f32.partialorder %v2861, 0.0
    %vm2940 = vcmp.gt.f32.partialorder %v2863, 0.0
    %vm2941 = vcmp.gt.f32.partialorder %v2413, 0.0
    %vm2942 = vcmp.gt.f32.partialorder %v2415, 0.0
    %vm2943 = vcmp.gt.f32.partialorder %v2865, 0.0
    %vm2944 = vcmp.gt.f32.partialorder %v2867, 0.0
    %vm2945 = vcmp.gt.f32.partialorder %v2419, 0.0
    %vm2946 = vcmp.gt.f32.partialorder %v2421, 0.0
    %vm2947 = vcmp.gt.f32.partialorder %v2871, 0.0
    %vm2948 = vcmp.gt.f32.partialorder %v2873, 0.0
    %vm2949 = vcmp.gt.f32.partialorder %v2423, 0.0
    %vm2950 = vcmp.gt.f32.partialorder %v2425, 0.0
    %vm2951 = vcmp.gt.f32.partialorder %v2875, 0.0
    %vm2952 = vcmp.gt.f32.partialorder %v2877, 0.0
    %vm2953 = vcmp.gt.f32.partialorder %v2429, 0.0
    %vm2954 = vcmp.gt.f32.partialorder %v2431, 0.0
    %vm2955 = vcmp.gt.f32.partialorder %v2881, 0.0
    %vm2956 = vcmp.gt.f32.partialorder %v2883, 0.0
    %vm2957 = vcmp.gt.f32.partialorder %v2433, 0.0
    %vm2958 = vcmp.gt.f32.partialorder %v2435, 0.0
    %vm2959 = vcmp.gt.f32.partialorder %v2885, 0.0
    %vm2960 = vcmp.gt.f32.partialorder %v2887, 0.0
    %vm2961 = vcmp.gt.f32.partialorder %v2439, 0.0
    %vm2962 = vcmp.gt.f32.partialorder %v2441, 0.0
    %vm2963 = vcmp.gt.f32.partialorder %v2891, 0.0
    %vm2964 = vcmp.gt.f32.partialorder %v2893, 0.0
    %vm2965 = vcmp.gt.f32.partialorder %v2443, 0.0
    %vm2966 = vcmp.gt.f32.partialorder %v2445, 0.0
    %vm2967 = vcmp.gt.f32.partialorder %v2895, 0.0
    %vm2968 = vcmp.gt.f32.partialorder %v2897, 0.0
    %vm2969 = vcmp.gt.f32.partialorder %v2449, 0.0
    %vm2970 = vcmp.gt.f32.partialorder %v2451, 0.0
    %vm2971 = vcmp.gt.f32.partialorder %v2901, 0.0
    %vm2972 = vcmp.gt.f32.partialorder %v2903, 0.0
    %vm2973 = vcmp.gt.f32.partialorder %v2453, 0.0
    %vm2974 = vcmp.gt.f32.partialorder %v2455, 0.0
    %vm2975 = vcmp.gt.f32.partialorder %v2905, 0.0
    %vm2976 = vcmp.gt.f32.partialorder %v2907, 0.0
    %vm2977 = vcmp.gt.f32.partialorder %v2459, 0.0
    %vm2978 = vcmp.gt.f32.partialorder %v2461, 0.0
    %vm2979 = vcmp.gt.f32.partialorder %v2911, 0.0
    %vm2980 = vcmp.gt.f32.partialorder %v2913, 0.0
    %vm2981 = vcmp.gt.f32.partialorder %v2463, 0.0
    %vm2982 = vcmp.gt.f32.partialorder %v2465, 0.0
    %vm2983 = vcmp.gt.f32.partialorder %v2915, 0.0
    %vm2984 = vcmp.gt.f32.partialorder %v2917, 0.0
    %vm2985 = vcmp.gt.f32.partialorder %v2469, 0.0
    %vm2986 = vcmp.gt.f32.partialorder %v2471, 0.0
    %vm2987 = vcmp.gt.f32.partialorder %v2921, 0.0
    %vm2988 = vcmp.gt.f32.partialorder %v2923, 0.0
    %vm2989 = vcmp.gt.f32.partialorder %v2473, 0.0
    %vm2990 = vcmp.gt.f32.partialorder %v2475, 0.0
    %vm2991 = vcmp.gt.f32.partialorder %v2925, 0.0
    %vm2992 = vcmp.gt.f32.partialorder %v2927, 0.0
    %v2993 = vmul.f32 %v2399, 0.2
    %v2994 = vmul.f32 %v2401, 0.2
    %v2995 = vmul.f32 %v2851, 0.2
    %v2996 = vmul.f32 %v2853, 0.2
    %v2997 = vmul.f32 %v2403, 0.2
    %v2998 = vmul.f32 %v2405, 0.2
    %v2999 = vmul.f32 %v2855, 0.2
    %v3000 = vmul.f32 %v2857, 0.2
    %v3001 = vmul.f32 %v2409, 0.2
    %v3002 = vmul.f32 %v2411, 0.2
    %v3003 = vmul.f32 %v2861, 0.2
    %v3004 = vmul.f32 %v2863, 0.2
    %v3005 = vmul.f32 %v2413, 0.2
    %v3006 = vmul.f32 %v2415, 0.2
    %v3007 = vmul.f32 %v2865, 0.2
    %v3008 = vmul.f32 %v2867, 0.2
    %v3009 = vmul.f32 %v2419, 0.2
    %v3010 = vmul.f32 %v2421, 0.2
    %v3011 = vmul.f32 %v2871, 0.2
    %v3012 = vmul.f32 %v2873, 0.2
    %v3013 = vmul.f32 %v2423, 0.2
    %v3014 = vmul.f32 %v2425, 0.2
    %v3015 = vmul.f32 %v2875, 0.2
    %v3016 = vmul.f32 %v2877, 0.2
    %v3017 = vmul.f32 %v2429, 0.2
    %v3018 = vmul.f32 %v2431, 0.2
    %v3019 = vmul.f32 %v2881, 0.2
    %v3020 = vmul.f32 %v2883, 0.2
    %v3021 = vmul.f32 %v2433, 0.2
    %v3022 = vmul.f32 %v2435, 0.2
    %v3023 = vmul.f32 %v2885, 0.2
    %v3024 = vmul.f32 %v2887, 0.2
    %v3025 = vmul.f32 %v2439, 0.2
    %v3026 = vmul.f32 %v2441, 0.2
    %v3027 = vmul.f32 %v2891, 0.2
    %v3028 = vmul.f32 %v2893, 0.2
    %v3029 = vmul.f32 %v2443, 0.2
    %v3030 = vmul.f32 %v2445, 0.2
    %v3031 = vmul.f32 %v2895, 0.2
    %v3032 = vmul.f32 %v2897, 0.2
    %v3033 = vmul.f32 %v2449, 0.2
    %v3034 = vmul.f32 %v2451, 0.2
    %v3035 = vmul.f32 %v2901, 0.2
    %v3036 = vmul.f32 %v2903, 0.2
    %v3037 = vmul.f32 %v2453, 0.2
    %v3038 = vmul.f32 %v2455, 0.2
    %v3039 = vmul.f32 %v2905, 0.2
    %v3040 = vmul.f32 %v2907, 0.2
    %v3041 = vmul.f32 %v2459, 0.2
    %v3042 = vmul.f32 %v2461, 0.2
    %v3043 = vmul.f32 %v2911, 0.2
    %v3044 = vmul.f32 %v2913, 0.2
    %v3045 = vmul.f32 %v2463, 0.2
    %v3046 = vmul.f32 %v2465, 0.2
    %v3047 = vmul.f32 %v2915, 0.2
    %v3048 = vmul.f32 %v2917, 0.2
    %v3049 = vmul.f32 %v2469, 0.2
    %v3050 = vmul.f32 %v2471, 0.2
    %v3051 = vmul.f32 %v2921, 0.2
    %v3052 = vmul.f32 %v2923, 0.2
    %v3053 = vmul.f32 %v2473, 0.2
    %v3054 = vmul.f32 %v2475, 0.2
    %v3055 = vmul.f32 %v2925, 0.2
    %v3056 = vmul.f32 %v2927, 0.2
    %v3057 = vsel %vm2929, %v2399, %v2993
    %v3058 = vsel %vm2930, %v2401, %v2994
    %v3059 = vsel %vm2931, %v2851, %v2995
    %v3060 = vsel %vm2932, %v2853, %v2996
    %v3061 = vsel %vm2933, %v2403, %v2997
    %v3062 = vsel %vm2934, %v2405, %v2998
    %v3063 = vsel %vm2935, %v2855, %v2999
    %v3064 = vsel %vm2936, %v2857, %v3000
    %v3065 = vsel %vm2937, %v2409, %v3001
    %v3066 = vsel %vm2938, %v2411, %v3002
    %v3067 = vsel %vm2939, %v2861, %v3003
    %v3068 = vsel %vm2940, %v2863, %v3004
    %v3069 = vsel %vm2941, %v2413, %v3005
    %v3070 = vsel %vm2942, %v2415, %v3006
    %v3071 = vsel %vm2943, %v2865, %v3007
    %v3072 = vsel %vm2944, %v2867, %v3008
    %v3073 = vsel %vm2945, %v2419, %v3009
    %v3074 = vsel %vm2946, %v2421, %v3010
    %v3075 = vsel %vm2947, %v2871, %v3011
    %v3076 = vsel %vm2948, %v2873, %v3012
    %v3077 = vsel %vm2949, %v2423, %v3013
    %v3078 = vsel %vm2950, %v2425, %v3014
    %v3079 = vsel %vm2951, %v2875, %v3015
    %v3080 = vsel %vm2952, %v2877, %v3016
    %v3081 = vsel %vm2953, %v2429, %v3017
    %v3082 = vsel %vm2954, %v2431, %v3018
    %v3083 = vsel %vm2955, %v2881, %v3019
    %v3084 = vsel %vm2956, %v2883, %v3020
    %v3085 = vsel %vm2957, %v2433, %v3021
    %v3086 = vsel %vm2958, %v2435, %v3022
    %v3087 = vsel %vm2959, %v2885, %v3023
    %v3088 = vsel %vm2960, %v2887, %v3024
    %v3089 = vsel %vm2961, %v2439, %v3025
    %v3090 = vsel %vm2962, %v2441, %v3026
    %v3091 = vsel %vm2963, %v2891, %v3027
    %v3092 = vsel %vm2964, %v2893, %v3028
    %v3093 = vsel %vm2965, %v2443, %v3029
    %v3094 = vsel %vm2966, %v2445, %v3030
    %v3095 = vsel %vm2967, %v2895, %v3031
    %v3096 = vsel %vm2968, %v2897, %v3032
    %v3097 = vsel %vm2969, %v2449, %v3033
    %v3098 = vsel %vm2970, %v2451, %v3034
    %v3099 = vsel %vm2971, %v2901, %v3035
    %v3100 = vsel %vm2972, %v2903, %v3036
    %v3101 = vsel %vm2973, %v2453, %v3037
    %v3102 = vsel %vm2974, %v2455, %v3038
    %v3103 = vsel %vm2975, %v2905, %v3039
    %v3104 = vsel %vm2976, %v2907, %v3040
    %v3105 = vsel %vm2977, %v2459, %v3041
    %v3106 = vsel %vm2978, %v2461, %v3042
    %v3107 = vsel %vm2979, %v2911, %v3043
    %v3108 = vsel %vm2980, %v2913, %v3044
    %v3109 = vsel %vm2981, %v2463, %v3045
    %v3110 = vsel %vm2982, %v2465, %v3046
    %v3111 = vsel %vm2983, %v2915, %v3047
    %v3112 = vsel %vm2984, %v2917, %v3048
    %v3113 = vsel %vm2985, %v2469, %v3049
    %v3114 = vsel %vm2986, %v2471, %v3050
    %v3115 = vsel %vm2987, %v2921, %v3051
    %v3116 = vsel %vm2988, %v2923, %v3052
    %v3117 = vsel %vm2989, %v2473, %v3053
    %v3118 = vsel %vm2990, %v2475, %v3054
    %v3119 = vsel %vm2991, %v2925, %v3055
    %v3120 = vsel %vm2992, %v2927, %v3056
    %v3121 = vpack.c.bf16 %v3061, %v3057
    %v3122 = vpack.c.bf16 %v3062, %v3058
    %v3123 = vpack.c.bf16 %v3063, %v3059
    %v3124 = vpack.c.bf16 %v3064, %v3060
    %v3125 = vpack.c.bf16 %v3069, %v3065
    %v3126 = vpack.c.bf16 %v3070, %v3066
    %v3127 = vpack.c.bf16 %v3071, %v3067
    %v3128 = vpack.c.bf16 %v3072, %v3068
    %v3129 = vpack.c.bf16 %v3077, %v3073
    %v3130 = vpack.c.bf16 %v3078, %v3074
    %v3131 = vpack.c.bf16 %v3079, %v3075
    %v3132 = vpack.c.bf16 %v3080, %v3076
    %v3133 = vpack.c.bf16 %v3085, %v3081
    %v3134 = vpack.c.bf16 %v3086, %v3082
    %v3135 = vpack.c.bf16 %v3087, %v3083
    %v3136 = vpack.c.bf16 %v3088, %v3084
    %v3137 = vpack.c.bf16 %v3093, %v3089
    %v3138 = vpack.c.bf16 %v3094, %v3090
    %v3139 = vpack.c.bf16 %v3095, %v3091
    %v3140 = vpack.c.bf16 %v3096, %v3092
    %v3141 = vpack.c.bf16 %v3101, %v3097
    %v3142 = vpack.c.bf16 %v3102, %v3098
    %v3143 = vpack.c.bf16 %v3103, %v3099
    %v3144 = vpack.c.bf16 %v3104, %v3100
    %v3145 = vpack.c.bf16 %v3109, %v3105
    %v3146 = vpack.c.bf16 %v3110, %v3106
    %v3147 = vpack.c.bf16 %v3111, %v3107
    %v3148 = vpack.c.bf16 %v3112, %v3108
    %v3149 = vpack.c.bf16 %v3117, %v3113
    %v3150 = vpack.c.bf16 %v3118, %v3114
    %v3151 = vpack.c.bf16 %v3119, %v3115
    %v3152 = vpack.c.bf16 %v3120, %v3116
    %v3153 = vld [vmem:[#allocation7] sm:$0xff]
    %v3154 = vld [vmem:[#allocation7 + $0x8] sm:$0xff]
    %v3155 = vld [vmem:[#allocation7 + $0x10] sm:$0xff]
    %v3156 = vld [vmem:[#allocation7 + $0x18] sm:$0xff]
    %v3157 = vld [vmem:[#allocation7 + $0x20] sm:$0xff]
    %v3158 = vld [vmem:[#allocation7 + $0x28] sm:$0xff]
    %v3159 = vld [vmem:[#allocation7 + $0x30] sm:$0xff]
    %v3160 = vld [vmem:[#allocation7 + $0x38] sm:$0xff]
    %v3161 = vld [vmem:[#allocation7 + $0x40] sm:$0xff]
    %v3162 = vld [vmem:[#allocation7 + $0x48] sm:$0xff]
    %v3163 = vld [vmem:[#allocation7 + $0x50] sm:$0xff]
    %v3164 = vld [vmem:[#allocation7 + $0x58] sm:$0xff]
    %v3165 = vld [vmem:[#allocation7 + $0x60] sm:$0xff]
    %v3166 = vld [vmem:[#allocation7 + $0x68] sm:$0xff]
    %v3167 = vld [vmem:[#allocation7 + $0x70] sm:$0xff]
    %v3168 = vld [vmem:[#allocation7 + $0x78] sm:$0xff]
    %v3169 = vld [vmem:[#allocation7 + $0x80] sm:$0xff]
    %v3170 = vld [vmem:[#allocation7 + $0x88] sm:$0xff]
    %v3171 = vld [vmem:[#allocation7 + $0x90] sm:$0xff]
    %v3172 = vld [vmem:[#allocation7 + $0x98] sm:$0xff]
    %v3173 = vld [vmem:[#allocation7 + $0xa0] sm:$0xff]
    %v3174 = vld [vmem:[#allocation7 + $0xa8] sm:$0xff]
    %v3175 = vld [vmem:[#allocation7 + $0xb0] sm:$0xff]
    %v3176 = vld [vmem:[#allocation7 + $0xb8] sm:$0xff]
    %v3177 = vld [vmem:[#allocation7 + $0xc0] sm:$0xff]
    %v3178 = vld [vmem:[#allocation7 + $0xc8] sm:$0xff]
    %v3179 = vld [vmem:[#allocation7 + $0xd0] sm:$0xff]
    %v3180 = vld [vmem:[#allocation7 + $0xd8] sm:$0xff]
    %v3181 = vld [vmem:[#allocation7 + $0xe0] sm:$0xff]
    %v3182 = vld [vmem:[#allocation7 + $0xe8] sm:$0xff]
    %v3183 = vld [vmem:[#allocation7 + $0xf0] sm:$0xff]
    %v3184 = vld [vmem:[#allocation7 + $0xf8] sm:$0xff]
    %v3185 = vld [vmem:[#allocation7 + $0x100] sm:$0xff]
    %v3186 = vld [vmem:[#allocation7 + $0x108] sm:$0xff]
    %v3187 = vld [vmem:[#allocation7 + $0x110] sm:$0xff]
    %v3188 = vld [vmem:[#allocation7 + $0x118] sm:$0xff]
    %v3189 = vld [vmem:[#allocation7 + $0x120] sm:$0xff]
    %v3190 = vld [vmem:[#allocation7 + $0x128] sm:$0xff]
    %v3191 = vld [vmem:[#allocation7 + $0x130] sm:$0xff]
    %v3192 = vld [vmem:[#allocation7 + $0x138] sm:$0xff]
    %v3193 = vld [vmem:[#allocation7 + $0x140] sm:$0xff]
    %v3194 = vld [vmem:[#allocation7 + $0x148] sm:$0xff]
    %v3195 = vld [vmem:[#allocation7 + $0x150] sm:$0xff]
    %v3196 = vld [vmem:[#allocation7 + $0x158] sm:$0xff]
    %v3197 = vld [vmem:[#allocation7 + $0x160] sm:$0xff]
    %v3198 = vld [vmem:[#allocation7 + $0x168] sm:$0xff]
    %v3199 = vld [vmem:[#allocation7 + $0x170] sm:$0xff]
    %v3200 = vld [vmem:[#allocation7 + $0x178] sm:$0xff]
    %v3201 = vld [vmem:[#allocation7 + $0x180] sm:$0xff]
    %v3202 = vld [vmem:[#allocation7 + $0x188] sm:$0xff]
    %v3203 = vld [vmem:[#allocation7 + $0x190] sm:$0xff]
    %v3204 = vld [vmem:[#allocation7 + $0x198] sm:$0xff]
    %v3205 = vld [vmem:[#allocation7 + $0x1a0] sm:$0xff]
    %v3206 = vld [vmem:[#allocation7 + $0x1a8] sm:$0xff]
    %v3207 = vld [vmem:[#allocation7 + $0x1b0] sm:$0xff]
    %v3208 = vld [vmem:[#allocation7 + $0x1b8] sm:$0xff]
    %v3209 = vld [vmem:[#allocation7 + $0x1c0] sm:$0xff]
    %v3210 = vld [vmem:[#allocation7 + $0x1c8] sm:$0xff]
    %v3211 = vld [vmem:[#allocation7 + $0x1d0] sm:$0xff]
    %v3212 = vld [vmem:[#allocation7 + $0x1d8] sm:$0xff]
    %v3213 = vld [vmem:[#allocation7 + $0x1e0] sm:$0xff]
    %v3214 = vld [vmem:[#allocation7 + $0x1e8] sm:$0xff]
    %v3215 = vld [vmem:[#allocation7 + $0x1f0] sm:$0xff]
    %v3216 = vld [vmem:[#allocation7 + $0x1f8] sm:$0xff]
    %v3217 = vld [vmem:[%s4] sm:$0x3]
    %v3219 = vlaneseq
    %v3220 = vshrl.u32 %v3219, 7
    %v3221 = vsub.s32 0, %v3220
    %v3222 = vrot.slane %v3217, %v3221
    %v3223 = vlaneseq
    %v3224 = vshrl.u32 %v3223, 7
    %v3225 = vsub.s32 1, %v3224
    %v3226 = vrot.slane %v3217, %v3225
    %v3293 = vunpack.c.l.b16 %v3153
    %v3294 = vunpack.c.h.b16 %v3153
    %v3295 = vunpack.c.l.b16 %v3154
    %v3296 = vunpack.c.h.b16 %v3154
    %v3297 = vunpack.c.l.b16 %v3155
    %v3298 = vunpack.c.h.b16 %v3155
    %v3299 = vunpack.c.l.b16 %v3156
    %v3300 = vunpack.c.h.b16 %v3156
    %v3301 = vunpack.c.l.b16 %v3157
    %v3302 = vunpack.c.h.b16 %v3157
    %v3303 = vunpack.c.l.b16 %v3158
    %v3304 = vunpack.c.h.b16 %v3158
    %v3305 = vunpack.c.l.b16 %v3159
    %v3306 = vunpack.c.h.b16 %v3159
    %v3307 = vunpack.c.l.b16 %v3160
    %v3308 = vunpack.c.h.b16 %v3160
    %v3309 = vunpack.c.l.b16 %v3161
    %v3310 = vunpack.c.h.b16 %v3161
    %v3311 = vunpack.c.l.b16 %v3162
    %v3312 = vunpack.c.h.b16 %v3162
    %v3313 = vunpack.c.l.b16 %v3163
    %v3314 = vunpack.c.h.b16 %v3163
    %v3315 = vunpack.c.l.b16 %v3164
    %v3316 = vunpack.c.h.b16 %v3164
    %v3317 = vunpack.c.l.b16 %v3165
    %v3318 = vunpack.c.h.b16 %v3165
    %v3319 = vunpack.c.l.b16 %v3166
    %v3320 = vunpack.c.h.b16 %v3166
    %v3321 = vunpack.c.l.b16 %v3167
    %v3322 = vunpack.c.h.b16 %v3167
    %v3323 = vunpack.c.l.b16 %v3168
    %v3324 = vunpack.c.h.b16 %v3168
    %v3325 = vunpack.c.l.b16 %v3169
    %v3326 = vunpack.c.h.b16 %v3169
    %v3327 = vunpack.c.l.b16 %v3170
    %v3328 = vunpack.c.h.b16 %v3170
    %v3329 = vunpack.c.l.b16 %v3171
    %v3330 = vunpack.c.h.b16 %v3171
    %v3331 = vunpack.c.l.b16 %v3172
    %v3332 = vunpack.c.h.b16 %v3172
    %v3333 = vunpack.c.l.b16 %v3173
    %v3334 = vunpack.c.h.b16 %v3173
    %v3335 = vunpack.c.l.b16 %v3174
    %v3336 = vunpack.c.h.b16 %v3174
    %v3337 = vunpack.c.l.b16 %v3175
    %v3338 = vunpack.c.h.b16 %v3175
    %v3339 = vunpack.c.l.b16 %v3176
    %v3340 = vunpack.c.h.b16 %v3176
    %v3341 = vunpack.c.l.b16 %v3177
    %v3342 = vunpack.c.h.b16 %v3177
    %v3343 = vunpack.c.l.b16 %v3178
    %v3344 = vunpack.c.h.b16 %v3178
    %v3345 = vunpack.c.l.b16 %v3179
    %v3346 = vunpack.c.h.b16 %v3179
    %v3347 = vunpack.c.l.b16 %v3180
    %v3348 = vunpack.c.h.b16 %v3180
    %v3349 = vunpack.c.l.b16 %v3181
    %v3350 = vunpack.c.h.b16 %v3181
    %v3351 = vunpack.c.l.b16 %v3182
    %v3352 = vunpack.c.h.b16 %v3182
    %v3353 = vunpack.c.l.b16 %v3183
    %v3354 = vunpack.c.h.b16 %v3183
    %v3355 = vunpack.c.l.b16 %v3184
    %v3356 = vunpack.c.h.b16 %v3184
    %v3357 = vunpack.c.l.b16 %v3185
    %v3358 = vunpack.c.h.b16 %v3185
    %v3359 = vunpack.c.l.b16 %v3186
    %v3360 = vunpack.c.h.b16 %v3186
    %v3361 = vunpack.c.l.b16 %v3187
    %v3362 = vunpack.c.h.b16 %v3187
    %v3363 = vunpack.c.l.b16 %v3188
    %v3364 = vunpack.c.h.b16 %v3188
    %v3365 = vunpack.c.l.b16 %v3189
    %v3366 = vunpack.c.h.b16 %v3189
    %v3367 = vunpack.c.l.b16 %v3190
    %v3368 = vunpack.c.h.b16 %v3190
    %v3369 = vunpack.c.l.b16 %v3191
    %v3370 = vunpack.c.h.b16 %v3191
    %v3371 = vunpack.c.l.b16 %v3192
    %v3372 = vunpack.c.h.b16 %v3192
    %v3373 = vunpack.c.l.b16 %v3193
    %v3374 = vunpack.c.h.b16 %v3193
    %v3375 = vunpack.c.l.b16 %v3194
    %v3376 = vunpack.c.h.b16 %v3194
    %v3377 = vunpack.c.l.b16 %v3195
    %v3378 = vunpack.c.h.b16 %v3195
    %v3379 = vunpack.c.l.b16 %v3196
    %v3380 = vunpack.c.h.b16 %v3196
    %v3381 = vunpack.c.l.b16 %v3197
    %v3382 = vunpack.c.h.b16 %v3197
    %v3383 = vunpack.c.l.b16 %v3198
    %v3384 = vunpack.c.h.b16 %v3198
    %v3385 = vunpack.c.l.b16 %v3199
    %v3386 = vunpack.c.h.b16 %v3199
    %v3387 = vunpack.c.l.b16 %v3200
    %v3388 = vunpack.c.h.b16 %v3200
    %v3389 = vunpack.c.l.b16 %v3201
    %v3390 = vunpack.c.h.b16 %v3201
    %v3391 = vunpack.c.l.b16 %v3202
    %v3392 = vunpack.c.h.b16 %v3202
    %v3393 = vunpack.c.l.b16 %v3203
    %v3394 = vunpack.c.h.b16 %v3203
    %v3395 = vunpack.c.l.b16 %v3204
    %v3396 = vunpack.c.h.b16 %v3204
    %v3397 = vunpack.c.l.b16 %v3205
    %v3398 = vunpack.c.h.b16 %v3205
    %v3399 = vunpack.c.l.b16 %v3206
    %v3400 = vunpack.c.h.b16 %v3206
    %v3401 = vunpack.c.l.b16 %v3207
    %v3402 = vunpack.c.h.b16 %v3207
    %v3403 = vunpack.c.l.b16 %v3208
    %v3404 = vunpack.c.h.b16 %v3208
    %v3405 = vunpack.c.l.b16 %v3209
    %v3406 = vunpack.c.h.b16 %v3209
    %v3407 = vunpack.c.l.b16 %v3210
    %v3408 = vunpack.c.h.b16 %v3210
    %v3409 = vunpack.c.l.b16 %v3211
    %v3410 = vunpack.c.h.b16 %v3211
    %v3411 = vunpack.c.l.b16 %v3212
    %v3412 = vunpack.c.h.b16 %v3212
    %v3413 = vunpack.c.l.b16 %v3213
    %v3414 = vunpack.c.h.b16 %v3213
    %v3415 = vunpack.c.l.b16 %v3214
    %v3416 = vunpack.c.h.b16 %v3214
    %v3417 = vunpack.c.l.b16 %v3215
    %v3418 = vunpack.c.h.b16 %v3215
    %v3419 = vunpack.c.l.b16 %v3216
    %v3420 = vunpack.c.h.b16 %v3216
    %v3421 = vpack.c.b16 %v3295, %v3293
    %v3422 = vpack.c.b16 %v3296, %v3294
    %v3423 = vpack.c.b16 %v3299, %v3297
    %v3424 = vpack.c.b16 %v3300, %v3298
    %v3425 = vpack.c.b16 %v3303, %v3301
    %v3426 = vpack.c.b16 %v3304, %v3302
    %v3427 = vpack.c.b16 %v3307, %v3305
    %v3428 = vpack.c.b16 %v3308, %v3306
    %v3429 = vpack.c.b16 %v3311, %v3309
    %v3430 = vpack.c.b16 %v3312, %v3310
    %v3431 = vpack.c.b16 %v3315, %v3313
    %v3432 = vpack.c.b16 %v3316, %v3314
    %v3433 = vpack.c.b16 %v3319, %v3317
    %v3434 = vpack.c.b16 %v3320, %v3318
    %v3435 = vpack.c.b16 %v3323, %v3321
    %v3436 = vpack.c.b16 %v3324, %v3322
    %v3437 = vpack.c.b16 %v3327, %v3325
    %v3438 = vpack.c.b16 %v3328, %v3326
    %v3439 = vpack.c.b16 %v3331, %v3329
    %v3440 = vpack.c.b16 %v3332, %v3330
    %v3441 = vpack.c.b16 %v3335, %v3333
    %v3442 = vpack.c.b16 %v3336, %v3334
    %v3443 = vpack.c.b16 %v3339, %v3337
    %v3444 = vpack.c.b16 %v3340, %v3338
    %v3445 = vpack.c.b16 %v3343, %v3341
    %v3446 = vpack.c.b16 %v3344, %v3342
    %v3447 = vpack.c.b16 %v3347, %v3345
    %v3448 = vpack.c.b16 %v3348, %v3346
    %v3449 = vpack.c.b16 %v3351, %v3349
    %v3450 = vpack.c.b16 %v3352, %v3350
    %v3451 = vpack.c.b16 %v3355, %v3353
    %v3452 = vpack.c.b16 %v3356, %v3354
    %v3453 = vpack.c.b16 %v3359, %v3357
    %v3454 = vpack.c.b16 %v3360, %v3358
    %v3455 = vpack.c.b16 %v3363, %v3361
    %v3456 = vpack.c.b16 %v3364, %v3362
    %v3457 = vpack.c.b16 %v3367, %v3365
    %v3458 = vpack.c.b16 %v3368, %v3366
    %v3459 = vpack.c.b16 %v3371, %v3369
    %v3460 = vpack.c.b16 %v3372, %v3370
    %v3461 = vpack.c.b16 %v3375, %v3373
    %v3462 = vpack.c.b16 %v3376, %v3374
    %v3463 = vpack.c.b16 %v3379, %v3377
    %v3464 = vpack.c.b16 %v3380, %v3378
    %v3465 = vpack.c.b16 %v3383, %v3381
    %v3466 = vpack.c.b16 %v3384, %v3382
    %v3467 = vpack.c.b16 %v3387, %v3385
    %v3468 = vpack.c.b16 %v3388, %v3386
    %v3469 = vpack.c.b16 %v3391, %v3389
    %v3470 = vpack.c.b16 %v3392, %v3390
    %v3471 = vpack.c.b16 %v3395, %v3393
    %v3472 = vpack.c.b16 %v3396, %v3394
    %v3473 = vpack.c.b16 %v3399, %v3397
    %v3474 = vpack.c.b16 %v3400, %v3398
    %v3475 = vpack.c.b16 %v3403, %v3401
    %v3476 = vpack.c.b16 %v3404, %v3402
    %v3477 = vpack.c.b16 %v3407, %v3405
    %v3478 = vpack.c.b16 %v3408, %v3406
    %v3479 = vpack.c.b16 %v3411, %v3409
    %v3480 = vpack.c.b16 %v3412, %v3410
    %v3481 = vpack.c.b16 %v3415, %v3413
    %v3482 = vpack.c.b16 %v3416, %v3414
    %v3483 = vpack.c.b16 %v3419, %v3417
    %v3484 = vpack.c.b16 %v3420, %v3418
    %3549 = vmatprep.subr.bf16.mxu0 %v3422
    %3550 = vmatpush1.bf16.msra.mxu0 %v3421
    %3551 = vmatprep.subr.bf16.mxu0 %v3424
    %3552 = vmatpush1.bf16.msra.mxu0 %v3423
    %3553 = vmatprep.subr.bf16.mxu0 %v3426
    %3554 = vmatpush1.bf16.msra.mxu0 %v3425
    %3555 = vmatprep.subr.bf16.mxu0 %v3428
    %3556 = vmatpush1.bf16.msra.mxu0 %v3427
    %3557 = vmatprep.subr.bf16.mxu0 %v3430
    %3558 = vmatpush1.bf16.msra.mxu0 %v3429
    %3559 = vmatprep.subr.bf16.mxu0 %v3432
    %3560 = vmatpush1.bf16.msra.mxu0 %v3431
    %3561 = vmatprep.subr.bf16.mxu0 %v3434
    %3562 = vmatpush1.bf16.msra.mxu0 %v3433
    %3563 = vmatprep.subr.bf16.mxu0 %v3436
    %3564 = vmatpush1.bf16.msra.mxu0 %v3435
    %3565 = vmatprep.subr.bf16.mxu0 %v3438
    %3566 = vmatpush1.bf16.msra.mxu0 %v3437
    %3567 = vmatprep.subr.bf16.mxu0 %v3440
    %3568 = vmatpush1.bf16.msra.mxu0 %v3439
    %3569 = vmatprep.subr.bf16.mxu0 %v3442
    %3570 = vmatpush1.bf16.msra.mxu0 %v3441
    %3571 = vmatprep.subr.bf16.mxu0 %v3444
    %3572 = vmatpush1.bf16.msra.mxu0 %v3443
    %3573 = vmatprep.subr.bf16.mxu0 %v3446
    %3574 = vmatpush1.bf16.msra.mxu0 %v3445
    %3575 = vmatprep.subr.bf16.mxu0 %v3448
    %3576 = vmatpush1.bf16.msra.mxu0 %v3447
    %3577 = vmatprep.subr.bf16.mxu0 %v3450
    %3578 = vmatpush1.bf16.msra.mxu0 %v3449
    %3579 = vmatprep.subr.bf16.mxu0 %v3452
    %3580 = vmatpush1.bf16.msra.mxu0 %v3451
    %3581 = vmatprep.mubr.bf16.mxu0 %v3122
    %3582 = vmatmul.mubr.bf16.gmra.mrb[0].mxu0 %v3121
    %v3583 = vpop.f32.mrb[0].mxu0
    %v3584 = vadd.f32 %v3222, %v3583
    %v3585 = vpop.f32.mrb[0].mxu0
    %v3586 = vadd.f32 %v3226, %v3585
    %v3587 = vpop.f32.mrb[0].mxu0
    %v3588 = vadd.f32 %v3222, %v3587
    %v3589 = vpop.f32.mrb[0].mxu0
    %v3590 = vadd.f32 %v3226, %v3589
    %3591 = vmatprep.mubr.bf16.mxu0 %v3126
    %3592 = vmatmul.mubr.bf16.gmra.mrb[0].mxu0 %v3125
    %v3593 = vpop.f32.mrb[0].mxu0
    %v3594 = vadd.f32 %v3222, %v3593
    %v3595 = vpop.f32.mrb[0].mxu0
    %v3596 = vadd.f32 %v3226, %v3595
    %v3597 = vpop.f32.mrb[0].mxu0
    %v3598 = vadd.f32 %v3222, %v3597
    %v3599 = vpop.f32.mrb[0].mxu0
    %v3600 = vadd.f32 %v3226, %v3599
    %3601 = vmatprep.mubr.bf16.mxu0 %v3130
    %3602 = vmatmul.mubr.bf16.gmra.mrb[0].mxu0 %v3129
    %v3603 = vpop.f32.mrb[0].mxu0
    %v3604 = vadd.f32 %v3222, %v3603
    %v3605 = vpop.f32.mrb[0].mxu0
    %v3606 = vadd.f32 %v3226, %v3605
    %v3607 = vpop.f32.mrb[0].mxu0
    %v3608 = vadd.f32 %v3222, %v3607
    %v3609 = vpop.f32.mrb[0].mxu0
    %v3610 = vadd.f32 %v3226, %v3609
    %3611 = vmatprep.mubr.bf16.mxu0 %v3134
    %3612 = vmatmul.mubr.bf16.gmra.mrb[0].mxu0 %v3133
    %v3613 = vpop.f32.mrb[0].mxu0
    %v3614 = vadd.f32 %v3222, %v3613
    %v3615 = vpop.f32.mrb[0].mxu0
    %v3616 = vadd.f32 %v3226, %v3615
    %v3617 = vpop.f32.mrb[0].mxu0
    %v3618 = vadd.f32 %v3222, %v3617
    %v3619 = vpop.f32.mrb[0].mxu0
    %v3620 = vadd.f32 %v3226, %v3619
    %3621 = vmatprep.mubr.bf16.mxu0 %v3138
    %3622 = vmatmul.mubr.bf16.gmra.mrb[0].mxu0 %v3137
    %v3623 = vpop.f32.mrb[0].mxu0
    %v3624 = vadd.f32 %v3222, %v3623
    %v3625 = vpop.f32.mrb[0].mxu0
    %v3626 = vadd.f32 %v3226, %v3625
    %v3627 = vpop.f32.mrb[0].mxu0
    %v3628 = vadd.f32 %v3222, %v3627
    %v3629 = vpop.f32.mrb[0].mxu0
    %v3630 = vadd.f32 %v3226, %v3629
    %3631 = vmatprep.mubr.bf16.mxu0 %v3142
    %3632 = vmatmul.mubr.bf16.gmra.mrb[0].mxu0 %v3141
    %v3633 = vpop.f32.mrb[0].mxu0
    %v3634 = vadd.f32 %v3222, %v3633
    %v3635 = vpop.f32.mrb[0].mxu0
    %v3636 = vadd.f32 %v3226, %v3635
    %v3637 = vpop.f32.mrb[0].mxu0
    %v3638 = vadd.f32 %v3222, %v3637
    %v3639 = vpop.f32.mrb[0].mxu0
    %v3640 = vadd.f32 %v3226, %v3639
    %3641 = vmatprep.mubr.bf16.mxu0 %v3146
    %3642 = vmatmul.mubr.bf16.gmra.mrb[0].mxu0 %v3145
    %v3643 = vpop.f32.mrb[0].mxu0
    %v3644 = vadd.f32 %v3222, %v3643
    %v3645 = vpop.f32.mrb[0].mxu0
    %v3646 = vadd.f32 %v3226, %v3645
    %v3647 = vpop.f32.mrb[0].mxu0
    %v3648 = vadd.f32 %v3222, %v3647
    %v3649 = vpop.f32.mrb[0].mxu0
    %v3650 = vadd.f32 %v3226, %v3649
    %3651 = vmatprep.mubr.bf16.mxu0 %v3150
    %3652 = vmatmul.mubr.bf16.gmra.mrb[0].mxu0 %v3149
    %v3653 = vpop.f32.mrb[0].mxu0
    %v3654 = vadd.f32 %v3222, %v3653
    %v3655 = vpop.f32.mrb[0].mxu0
    %v3656 = vadd.f32 %v3226, %v3655
    %v3657 = vpop.f32.mrb[0].mxu0
    %v3658 = vadd.f32 %v3222, %v3657
    %v3659 = vpop.f32.mrb[0].mxu0
    %v3660 = vadd.f32 %v3226, %v3659
    %3661 = vdwg.mxu0
    %3662 = vmatprep.subr.bf16.mxu0 %v3454
    %3663 = vmatpush1.bf16.msra.mxu0 %v3453
    %3664 = vmatprep.subr.bf16.mxu0 %v3456
    %3665 = vmatpush1.bf16.msra.mxu0 %v3455
    %3666 = vmatprep.subr.bf16.mxu0 %v3458
    %3667 = vmatpush1.bf16.msra.mxu0 %v3457
    %3668 = vmatprep.subr.bf16.mxu0 %v3460
    %3669 = vmatpush1.bf16.msra.mxu0 %v3459
    %3670 = vmatprep.subr.bf16.mxu0 %v3462
    %3671 = vmatpush1.bf16.msra.mxu0 %v3461
    %3672 = vmatprep.subr.bf16.mxu0 %v3464
    %3673 = vmatpush1.bf16.msra.mxu0 %v3463
    %3674 = vmatprep.subr.bf16.mxu0 %v3466
    %3675 = vmatpush1.bf16.msra.mxu0 %v3465
    %3676 = vmatprep.subr.bf16.mxu0 %v3468
    %3677 = vmatpush1.bf16.msra.mxu0 %v3467
    %3678 = vmatprep.subr.bf16.mxu0 %v3470
    %3679 = vmatpush1.bf16.msra.mxu0 %v3469
    %3680 = vmatprep.subr.bf16.mxu0 %v3472
    %3681 = vmatpush1.bf16.msra.mxu0 %v3471
    %3682 = vmatprep.subr.bf16.mxu0 %v3474
    %3683 = vmatpush1.bf16.msra.mxu0 %v3473
    %3684 = vmatprep.subr.bf16.mxu0 %v3476
    %3685 = vmatpush1.bf16.msra.mxu0 %v3475
    %3686 = vmatprep.subr.bf16.mxu0 %v3478
    %3687 = vmatpush1.bf16.msra.mxu0 %v3477
    %3688 = vmatprep.subr.bf16.mxu0 %v3480
    %3689 = vmatpush1.bf16.msra.mxu0 %v3479
    %3690 = vmatprep.subr.bf16.mxu0 %v3482
    %3691 = vmatpush1.bf16.msra.mxu0 %v3481
    %3692 = vmatprep.subr.bf16.mxu0 %v3484
    %3693 = vmatpush1.bf16.msra.mxu0 %v3483
    %3694 = vmatprep.mubr.bf16.mxu0 %v3124
    %3695 = vmatmul.mubr.bf16.gmra.mrb[0].mxu0 %v3123
    %v3696 = vpop.f32.mrb[0].mxu0
    %v3697 = vadd.f32 %v3584, %v3696
    %v3698 = vpop.f32.mrb[0].mxu0
    %v3699 = vadd.f32 %v3586, %v3698
    %v3700 = vpop.f32.mrb[0].mxu0
    %v3701 = vadd.f32 %v3588, %v3700
    %v3702 = vpop.f32.mrb[0].mxu0
    %v3703 = vadd.f32 %v3590, %v3702
    %3704 = vmatprep.mubr.bf16.mxu0 %v3128
    %3705 = vmatmul.mubr.bf16.gmra.mrb[0].mxu0 %v3127
    %v3706 = vpop.f32.mrb[0].mxu0
    %v3707 = vadd.f32 %v3594, %v3706
    %v3708 = vpop.f32.mrb[0].mxu0
    %v3709 = vadd.f32 %v3596, %v3708
    %v3710 = vpop.f32.mrb[0].mxu0
    %v3711 = vadd.f32 %v3598, %v3710
    %v3712 = vpop.f32.mrb[0].mxu0
    %v3713 = vadd.f32 %v3600, %v3712
    %3714 = vmatprep.mubr.bf16.mxu0 %v3132
    %3715 = vmatmul.mubr.bf16.gmra.mrb[0].mxu0 %v3131
    %v3716 = vpop.f32.mrb[0].mxu0
    %v3717 = vadd.f32 %v3604, %v3716
    %v3718 = vpop.f32.mrb[0].mxu0
    %v3719 = vadd.f32 %v3606, %v3718
    %v3720 = vpop.f32.mrb[0].mxu0
    %v3721 = vadd.f32 %v3608, %v3720
    %v3722 = vpop.f32.mrb[0].mxu0
    %v3723 = vadd.f32 %v3610, %v3722
    %3724 = vmatprep.mubr.bf16.mxu0 %v3136
    %3725 = vmatmul.mubr.bf16.gmra.mrb[0].mxu0 %v3135
    %v3726 = vpop.f32.mrb[0].mxu0
    %v3727 = vadd.f32 %v3614, %v3726
    %v3728 = vpop.f32.mrb[0].mxu0
    %v3729 = vadd.f32 %v3616, %v3728
    %v3730 = vpop.f32.mrb[0].mxu0
    %v3731 = vadd.f32 %v3618, %v3730
    %v3732 = vpop.f32.mrb[0].mxu0
    %v3733 = vadd.f32 %v3620, %v3732
    %3734 = vmatprep.mubr.bf16.mxu0 %v3140
    %3735 = vmatmul.mubr.bf16.gmra.mrb[0].mxu0 %v3139
    %v3736 = vpop.f32.mrb[0].mxu0
    %v3737 = vadd.f32 %v3624, %v3736
    %v3738 = vpop.f32.mrb[0].mxu0
    %v3739 = vadd.f32 %v3626, %v3738
    %v3740 = vpop.f32.mrb[0].mxu0
    %v3741 = vadd.f32 %v3628, %v3740
    %v3742 = vpop.f32.mrb[0].mxu0
    %v3743 = vadd.f32 %v3630, %v3742
    %3744 = vmatprep.mubr.bf16.mxu0 %v3144
    %3745 = vmatmul.mubr.bf16.gmra.mrb[0].mxu0 %v3143
    %v3746 = vpop.f32.mrb[0].mxu0
    %v3747 = vadd.f32 %v3634, %v3746
    %v3748 = vpop.f32.mrb[0].mxu0
    %v3749 = vadd.f32 %v3636, %v3748
    %v3750 = vpop.f32.mrb[0].mxu0
    %v3751 = vadd.f32 %v3638, %v3750
    %v3752 = vpop.f32.mrb[0].mxu0
    %v3753 = vadd.f32 %v3640, %v3752
    %3754 = vmatprep.mubr.bf16.mxu0 %v3148
    %3755 = vmatmul.mubr.bf16.gmra.mrb[0].mxu0 %v3147
    %v3756 = vpop.f32.mrb[0].mxu0
    %v3757 = vadd.f32 %v3644, %v3756
    %v3758 = vpop.f32.mrb[0].mxu0
    %v3759 = vadd.f32 %v3646, %v3758
    %v3760 = vpop.f32.mrb[0].mxu0
    %v3761 = vadd.f32 %v3648, %v3760
    %v3762 = vpop.f32.mrb[0].mxu0
    %v3763 = vadd.f32 %v3650, %v3762
    %3764 = vmatprep.mubr.bf16.mxu0 %v3152
    %3765 = vmatmul.mubr.bf16.gmra.mrb[0].mxu0 %v3151
    %v3766 = vpop.f32.mrb[0].mxu0
    %v3767 = vadd.f32 %v3654, %v3766
    %v3768 = vpop.f32.mrb[0].mxu0
    %v3769 = vadd.f32 %v3656, %v3768
    %v3770 = vpop.f32.mrb[0].mxu0
    %v3771 = vadd.f32 %v3658, %v3770
    %v3772 = vpop.f32.mrb[0].mxu0
    %v3773 = vadd.f32 %v3660, %v3772
    %3774 = vdwg.mxu0
    %vm3775 = vcmp.gt.f32.partialorder %v3697, 0.0
    %vm3776 = vcmp.gt.f32.partialorder %v3699, 0.0
    %vm3777 = vcmp.gt.f32.partialorder %v3701, 0.0
    %vm3778 = vcmp.gt.f32.partialorder %v3703, 0.0
    %vm3779 = vcmp.gt.f32.partialorder %v3707, 0.0
    %vm3780 = vcmp.gt.f32.partialorder %v3709, 0.0
    %vm3781 = vcmp.gt.f32.partialorder %v3711, 0.0
    %vm3782 = vcmp.gt.f32.partialorder %v3713, 0.0
    %vm3783 = vcmp.gt.f32.partialorder %v3717, 0.0
    %vm3784 = vcmp.gt.f32.partialorder %v3719, 0.0
    %vm3785 = vcmp.gt.f32.partialorder %v3721, 0.0
    %vm3786 = vcmp.gt.f32.partialorder %v3723, 0.0
    %vm3787 = vcmp.gt.f32.partialorder %v3727, 0.0
    %vm3788 = vcmp.gt.f32.partialorder %v3729, 0.0
    %vm3789 = vcmp.gt.f32.partialorder %v3731, 0.0
    %vm3790 = vcmp.gt.f32.partialorder %v3733, 0.0
    %vm3791 = vcmp.gt.f32.partialorder %v3737, 0.0
    %vm3792 = vcmp.gt.f32.partialorder %v3739, 0.0
    %vm3793 = vcmp.gt.f32.partialorder %v3741, 0.0
    %vm3794 = vcmp.gt.f32.partialorder %v3743, 0.0
    %vm3795 = vcmp.gt.f32.partialorder %v3747, 0.0
    %vm3796 = vcmp.gt.f32.partialorder %v3749, 0.0
    %vm3797 = vcmp.gt.f32.partialorder %v3751, 0.0
    %vm3798 = vcmp.gt.f32.partialorder %v3753, 0.0
    %vm3799 = vcmp.gt.f32.partialorder %v3757, 0.0
    %vm3800 = vcmp.gt.f32.partialorder %v3759, 0.0
    %vm3801 = vcmp.gt.f32.partialorder %v3761, 0.0
    %vm3802 = vcmp.gt.f32.partialorder %v3763, 0.0
    %vm3803 = vcmp.gt.f32.partialorder %v3767, 0.0
    %vm3804 = vcmp.gt.f32.partialorder %v3769, 0.0
    %vm3805 = vcmp.gt.f32.partialorder %v3771, 0.0
    %vm3806 = vcmp.gt.f32.partialorder %v3773, 0.0
    %v3807 = vmul.f32 %v3697, 0.2
    %v3808 = vmul.f32 %v3699, 0.2
    %v3809 = vmul.f32 %v3701, 0.2
    %v3810 = vmul.f32 %v3703, 0.2
    %v3811 = vmul.f32 %v3707, 0.2
    %v3812 = vmul.f32 %v3709, 0.2
    %v3813 = vmul.f32 %v3711, 0.2
    %v3814 = vmul.f32 %v3713, 0.2
    %v3815 = vmul.f32 %v3717, 0.2
    %v3816 = vmul.f32 %v3719, 0.2
    %v3817 = vmul.f32 %v3721, 0.2
    %v3818 = vmul.f32 %v3723, 0.2
    %v3819 = vmul.f32 %v3727, 0.2
    %v3820 = vmul.f32 %v3729, 0.2
    %v3821 = vmul.f32 %v3731, 0.2
    %v3822 = vmul.f32 %v3733, 0.2
    %v3823 = vmul.f32 %v3737, 0.2
    %v3824 = vmul.f32 %v3739, 0.2
    %v3825 = vmul.f32 %v3741, 0.2
    %v3826 = vmul.f32 %v3743, 0.2
    %v3827 = vmul.f32 %v3747, 0.2
    %v3828 = vmul.f32 %v3749, 0.2
    %v3829 = vmul.f32 %v3751, 0.2
    %v3830 = vmul.f32 %v3753, 0.2
    %v3831 = vmul.f32 %v3757, 0.2
    %v3832 = vmul.f32 %v3759, 0.2
    %v3833 = vmul.f32 %v3761, 0.2
    %v3834 = vmul.f32 %v3763, 0.2
    %v3835 = vmul.f32 %v3767, 0.2
    %v3836 = vmul.f32 %v3769, 0.2
    %v3837 = vmul.f32 %v3771, 0.2
    %v3838 = vmul.f32 %v3773, 0.2
    %v3839 = vsel %vm3775, %v3697, %v3807
    %v3840 = vsel %vm3776, %v3699, %v3808
    %v3841 = vsel %vm3777, %v3701, %v3809
    %v3842 = vsel %vm3778, %v3703, %v3810
    %v3843 = vsel %vm3779, %v3707, %v3811
    %v3844 = vsel %vm3780, %v3709, %v3812
    %v3845 = vsel %vm3781, %v3711, %v3813
    %v3846 = vsel %vm3782, %v3713, %v3814
    %v3847 = vsel %vm3783, %v3717, %v3815
    %v3848 = vsel %vm3784, %v3719, %v3816
    %v3849 = vsel %vm3785, %v3721, %v3817
    %v3850 = vsel %vm3786, %v3723, %v3818
    %v3851 = vsel %vm3787, %v3727, %v3819
    %v3852 = vsel %vm3788, %v3729, %v3820
    %v3853 = vsel %vm3789, %v3731, %v3821
    %v3854 = vsel %vm3790, %v3733, %v3822
    %v3855 = vsel %vm3791, %v3737, %v3823
    %v3856 = vsel %vm3792, %v3739, %v3824
    %v3857 = vsel %vm3793, %v3741, %v3825
    %v3858 = vsel %vm3794, %v3743, %v3826
    %v3859 = vsel %vm3795, %v3747, %v3827
    %v3860 = vsel %vm3796, %v3749, %v3828
    %v3861 = vsel %vm3797, %v3751, %v3829
    %v3862 = vsel %vm3798, %v3753, %v3830
    %v3863 = vsel %vm3799, %v3757, %v3831
    %v3864 = vsel %vm3800, %v3759, %v3832
    %v3865 = vsel %vm3801, %v3761, %v3833
    %v3866 = vsel %vm3802, %v3763, %v3834
    %v3867 = vsel %vm3803, %v3767, %v3835
    %v3868 = vsel %vm3804, %v3769, %v3836
    %v3869 = vsel %vm3805, %v3771, %v3837
    %v3870 = vsel %vm3806, %v3773, %v3838
    %v3871 = vpack.c.bf16 %v3841, %v3839
    %v3872 = vpack.c.bf16 %v3842, %v3840
    %v3873 = vpack.c.bf16 %v3845, %v3843
    %v3874 = vpack.c.bf16 %v3846, %v3844
    %v3875 = vpack.c.bf16 %v3849, %v3847
    %v3876 = vpack.c.bf16 %v3850, %v3848
    %v3877 = vpack.c.bf16 %v3853, %v3851
    %v3878 = vpack.c.bf16 %v3854, %v3852
    %v3879 = vpack.c.bf16 %v3857, %v3855
    %v3880 = vpack.c.bf16 %v3858, %v3856
    %v3881 = vpack.c.bf16 %v3861, %v3859
    %v3882 = vpack.c.bf16 %v3862, %v3860
    %v3883 = vpack.c.bf16 %v3865, %v3863
    %v3884 = vpack.c.bf16 %v3866, %v3864
    %v3885 = vpack.c.bf16 %v3869, %v3867
    %v3886 = vpack.c.bf16 %v3870, %v3868
    %v3887 = vld [vmem:[#allocation8] sm:$0xf]
    %v3888 = vld [vmem:[#allocation8 + $0x4] sm:$0xf]
    %v3889 = vld [vmem:[#allocation8 + $0x8] sm:$0xf]
    %v3890 = vld [vmem:[#allocation8 + $0xc] sm:$0xf]
    %v3891 = vld [vmem:[#allocation8 + $0x10] sm:$0xf]
    %v3892 = vld [vmem:[#allocation8 + $0x14] sm:$0xf]
    %v3893 = vld [vmem:[#allocation8 + $0x18] sm:$0xf]
    %v3894 = vld [vmem:[#allocation8 + $0x1c] sm:$0xf]
    %v3895 = vld [vmem:[#allocation8 + $0x20] sm:$0xf]
    %v3896 = vld [vmem:[#allocation8 + $0x24] sm:$0xf]
    %v3897 = vld [vmem:[#allocation8 + $0x28] sm:$0xf]
    %v3898 = vld [vmem:[#allocation8 + $0x2c] sm:$0xf]
    %v3899 = vld [vmem:[#allocation8 + $0x30] sm:$0xf]
    %v3900 = vld [vmem:[#allocation8 + $0x34] sm:$0xf]
    %v3901 = vld [vmem:[#allocation8 + $0x38] sm:$0xf]
    %v3902 = vld [vmem:[#allocation8 + $0x3c] sm:$0xf]
    %v3903 = vld [vmem:[#allocation8 + $0x40] sm:$0xf]
    %v3904 = vld [vmem:[#allocation8 + $0x44] sm:$0xf]
    %v3905 = vld [vmem:[#allocation8 + $0x48] sm:$0xf]
    %v3906 = vld [vmem:[#allocation8 + $0x4c] sm:$0xf]
    %v3907 = vld [vmem:[#allocation8 + $0x50] sm:$0xf]
    %v3908 = vld [vmem:[#allocation8 + $0x54] sm:$0xf]
    %v3909 = vld [vmem:[#allocation8 + $0x58] sm:$0xf]
    %v3910 = vld [vmem:[#allocation8 + $0x5c] sm:$0xf]
    %v3911 = vld [vmem:[#allocation8 + $0x60] sm:$0xf]
    %v3912 = vld [vmem:[#allocation8 + $0x64] sm:$0xf]
    %v3913 = vld [vmem:[#allocation8 + $0x68] sm:$0xf]
    %v3914 = vld [vmem:[#allocation8 + $0x6c] sm:$0xf]
    %v3915 = vld [vmem:[#allocation8 + $0x70] sm:$0xf]
    %v3916 = vld [vmem:[#allocation8 + $0x74] sm:$0xf]
    %v3917 = vld [vmem:[#allocation8 + $0x78] sm:$0xf]
    %v3918 = vld [vmem:[#allocation8 + $0x7c] sm:$0xf]
    %v3919 = vld [vmem:[%s6] sm:$0x1]
    %v3921 = vlaneseq
    %v3922 = vshrl.u32 %v3921, 7
    %v3923 = vsub.s32 0, %v3922
    %v3924 = vrot.slane %v3919, %v3923
    %v3958 = vunpack.c.l.b16 %v3887
    %v3959 = vunpack.c.l.b16 %v3888
    %v3960 = vunpack.c.l.b16 %v3889
    %v3961 = vunpack.c.l.b16 %v3890
    %v3962 = vunpack.c.l.b16 %v3891
    %v3963 = vunpack.c.l.b16 %v3892
    %v3964 = vunpack.c.l.b16 %v3893
    %v3965 = vunpack.c.l.b16 %v3894
    %v3966 = vunpack.c.l.b16 %v3895
    %v3967 = vunpack.c.l.b16 %v3896
    %v3968 = vunpack.c.l.b16 %v3897
    %v3969 = vunpack.c.l.b16 %v3898
    %v3970 = vunpack.c.l.b16 %v3899
    %v3971 = vunpack.c.l.b16 %v3900
    %v3972 = vunpack.c.l.b16 %v3901
    %v3973 = vunpack.c.l.b16 %v3902
    %v3974 = vunpack.c.l.b16 %v3903
    %v3975 = vunpack.c.l.b16 %v3904
    %v3976 = vunpack.c.l.b16 %v3905
    %v3977 = vunpack.c.l.b16 %v3906
    %v3978 = vunpack.c.l.b16 %v3907
    %v3979 = vunpack.c.l.b16 %v3908
    %v3980 = vunpack.c.l.b16 %v3909
    %v3981 = vunpack.c.l.b16 %v3910
    %v3982 = vunpack.c.l.b16 %v3911
    %v3983 = vunpack.c.l.b16 %v3912
    %v3984 = vunpack.c.l.b16 %v3913
    %v3985 = vunpack.c.l.b16 %v3914
    %v3986 = vunpack.c.l.b16 %v3915
    %v3987 = vunpack.c.l.b16 %v3916
    %v3988 = vunpack.c.l.b16 %v3917
    %v3989 = vunpack.c.l.b16 %v3918
    %v3990 = vpack.c.b16 %v3959, %v3958
    %v3991 = vpack.c.b16 %v3961, %v3960
    %v3992 = vpack.c.b16 %v3963, %v3962
    %v3993 = vpack.c.b16 %v3965, %v3964
    %v3994 = vpack.c.b16 %v3967, %v3966
    %v3995 = vpack.c.b16 %v3969, %v3968
    %v3996 = vpack.c.b16 %v3971, %v3970
    %v3997 = vpack.c.b16 %v3973, %v3972
    %v3998 = vpack.c.b16 %v3975, %v3974
    %v3999 = vpack.c.b16 %v3977, %v3976
    %v4000 = vpack.c.b16 %v3979, %v3978
    %v4001 = vpack.c.b16 %v3981, %v3980
    %v4002 = vpack.c.b16 %v3983, %v3982
    %v4003 = vpack.c.b16 %v3985, %v3984
    %v4004 = vpack.c.b16 %v3987, %v3986
    %v4005 = vpack.c.b16 %v3989, %v3988
    %4022 = vmatprep.subr.bf16.mxu0 0
    %4023 = vmatpush1.bf16.msra.mxu0 %v3990
    %4024 = vmatprep.subr.bf16.mxu0 0
    %4025 = vmatpush1.bf16.msra.mxu0 %v3991
    %4026 = vmatprep.subr.bf16.mxu0 0
    %4027 = vmatpush1.bf16.msra.mxu0 %v3992
    %4028 = vmatprep.subr.bf16.mxu0 0
    %4029 = vmatpush1.bf16.msra.mxu0 %v3993
    %4030 = vmatprep.subr.bf16.mxu0 0
    %4031 = vmatpush1.bf16.msra.mxu0 %v3994
    %4032 = vmatprep.subr.bf16.mxu0 0
    %4033 = vmatpush1.bf16.msra.mxu0 %v3995
    %4034 = vmatprep.subr.bf16.mxu0 0
    %4035 = vmatpush1.bf16.msra.mxu0 %v3996
    %4036 = vmatprep.subr.bf16.mxu0 0
    %4037 = vmatpush1.bf16.msra.mxu0 %v3997
    %4038 = vmatprep.subr.bf16.mxu0 0
    %4039 = vmatpush1.bf16.msra.mxu0 %v3998
    %4040 = vmatprep.subr.bf16.mxu0 0
    %4041 = vmatpush1.bf16.msra.mxu0 %v3999
    %4042 = vmatprep.subr.bf16.mxu0 0
    %4043 = vmatpush1.bf16.msra.mxu0 %v4000
    %4044 = vmatprep.subr.bf16.mxu0 0
    %4045 = vmatpush1.bf16.msra.mxu0 %v4001
    %4046 = vmatprep.subr.bf16.mxu0 0
    %4047 = vmatpush1.bf16.msra.mxu0 %v4002
    %4048 = vmatprep.subr.bf16.mxu0 0
    %4049 = vmatpush1.bf16.msra.mxu0 %v4003
    %4050 = vmatprep.subr.bf16.mxu0 0
    %4051 = vmatpush1.bf16.msra.mxu0 %v4004
    %4052 = vmatprep.subr.bf16.mxu0 0
    %4053 = vmatpush1.bf16.msra.mxu0 %v4005
    %4054 = vmatprep.mubr.bf16.mxu0 %v3872
    %4055 = vmatmul.mubr.bf16.gmra.mrb[0].mxu0 %v3871
    %v4056 = vpop.f32.mrb[0].mxu0
    %v4057 = vadd.f32 %v3924, %v4056
    %v4058 = vpop.f32.mrb[0].mxu0
    %v4059 = vpop.f32.mrb[0].mxu0
    %v4060 = vadd.f32 %v3924, %v4059
    %v4061 = vpop.f32.mrb[0].mxu0
    %4062 = vmatprep.mubr.bf16.mxu0 %v3874
    %4063 = vmatmul.mubr.bf16.gmra.mrb[0].mxu0 %v3873
    %v4064 = vpop.f32.mrb[0].mxu0
    %v4065 = vadd.f32 %v3924, %v4064
    %v4066 = vpop.f32.mrb[0].mxu0
    %v4067 = vpop.f32.mrb[0].mxu0
    %v4068 = vadd.f32 %v3924, %v4067
    %v4069 = vpop.f32.mrb[0].mxu0
    %4070 = vmatprep.mubr.bf16.mxu0 %v3876
    %4071 = vmatmul.mubr.bf16.gmra.mrb[0].mxu0 %v3875
    %v4072 = vpop.f32.mrb[0].mxu0
    %v4073 = vadd.f32 %v3924, %v4072
    %v4074 = vpop.f32.mrb[0].mxu0
    %v4075 = vpop.f32.mrb[0].mxu0
    %v4076 = vadd.f32 %v3924, %v4075
    %v4077 = vpop.f32.mrb[0].mxu0
    %4078 = vmatprep.mubr.bf16.mxu0 %v3878
    %4079 = vmatmul.mubr.bf16.gmra.mrb[0].mxu0 %v3877
    %v4080 = vpop.f32.mrb[0].mxu0
    %v4081 = vadd.f32 %v3924, %v4080
    %v4082 = vpop.f32.mrb[0].mxu0
    %v4083 = vpop.f32.mrb[0].mxu0
    %v4084 = vadd.f32 %v3924, %v4083
    %v4085 = vpop.f32.mrb[0].mxu0
    %4086 = vmatprep.mubr.bf16.mxu0 %v3880
    %4087 = vmatmul.mubr.bf16.gmra.mrb[0].mxu0 %v3879
    %v4088 = vpop.f32.mrb[0].mxu0
    %v4089 = vadd.f32 %v3924, %v4088
    %v4090 = vpop.f32.mrb[0].mxu0
    %v4091 = vpop.f32.mrb[0].mxu0
    %v4092 = vadd.f32 %v3924, %v4091
    %v4093 = vpop.f32.mrb[0].mxu0
    %4094 = vmatprep.mubr.bf16.mxu0 %v3882
    %4095 = vmatmul.mubr.bf16.gmra.mrb[0].mxu0 %v3881
    %v4096 = vpop.f32.mrb[0].mxu0
    %v4097 = vadd.f32 %v3924, %v4096
    %v4098 = vpop.f32.mrb[0].mxu0
    %v4099 = vpop.f32.mrb[0].mxu0
    %v4100 = vadd.f32 %v3924, %v4099
    %v4101 = vpop.f32.mrb[0].mxu0
    %4102 = vmatprep.mubr.bf16.mxu0 %v3884
    %4103 = vmatmul.mubr.bf16.gmra.mrb[0].mxu0 %v3883
    %v4104 = vpop.f32.mrb[0].mxu0
    %v4105 = vadd.f32 %v3924, %v4104
    %v4106 = vpop.f32.mrb[0].mxu0
    %v4107 = vpop.f32.mrb[0].mxu0
    %v4108 = vadd.f32 %v3924, %v4107
    %v4109 = vpop.f32.mrb[0].mxu0
    %4110 = vmatprep.mubr.bf16.mxu0 %v3886
    %4111 = vmatmul.mubr.bf16.gmra.mrb[0].mxu0 %v3885
    %v4112 = vpop.f32.mrb[0].mxu0
    %v4113 = vadd.f32 %v3924, %v4112
    %v4114 = vpop.f32.mrb[0].mxu0
    %v4115 = vpop.f32.mrb[0].mxu0
    %v4116 = vadd.f32 %v3924, %v4115
    %v4117 = vpop.f32.mrb[0].mxu0
    %4118 = vdwg.mxu0
    %v4119 = vand.u32 2147483647, %v4057
    %v4120 = vand.u32 2147483647, %v4060
    %v4121 = vand.u32 2147483647, %v4065
    %v4122 = vand.u32 2147483647, %v4068
    %v4123 = vand.u32 2147483647, %v4073
    %v4124 = vand.u32 2147483647, %v4076
    %v4125 = vand.u32 2147483647, %v4081
    %v4126 = vand.u32 2147483647, %v4084
    %v4127 = vand.u32 2147483647, %v4089
    %v4128 = vand.u32 2147483647, %v4092
    %v4129 = vand.u32 2147483647, %v4097
    %v4130 = vand.u32 2147483647, %v4100
    %v4131 = vand.u32 2147483647, %v4105
    %v4132 = vand.u32 2147483647, %v4108
    %v4133 = vand.u32 2147483647, %v4113
    %v4134 = vand.u32 2147483647, %v4116
    %v4135 = vsub.f32 0.0, %v4119
    %v4136 = vsub.f32 0.0, %v4120
    %v4137 = vsub.f32 0.0, %v4121
    %v4138 = vsub.f32 0.0, %v4122
    %v4139 = vsub.f32 0.0, %v4123
    %v4140 = vsub.f32 0.0, %v4124
    %v4141 = vsub.f32 0.0, %v4125
    %v4142 = vsub.f32 0.0, %v4126
    %v4143 = vsub.f32 0.0, %v4127
    %v4144 = vsub.f32 0.0, %v4128
    %v4145 = vsub.f32 0.0, %v4129
    %v4146 = vsub.f32 0.0, %v4130
    %v4147 = vsub.f32 0.0, %v4131
    %v4148 = vsub.f32 0.0, %v4132
    %v4149 = vsub.f32 0.0, %v4133
    %v4150 = vsub.f32 0.0, %v4134
    %v4151 = vmul.f32 %v4135, 1.442695
    %v4152 = vpow.pop %v4151
    %v4153 = vmul.f32 %v4136, 1.442695
    %v4154 = vpow.pop %v4153
    %v4155 = vmul.f32 %v4137, 1.442695
    %v4156 = vpow.pop %v4155
    %v4157 = vmul.f32 %v4138, 1.442695
    %v4158 = vpow.pop %v4157
    %v4159 = vmul.f32 %v4139, 1.442695
    %v4160 = vpow.pop %v4159
    %v4161 = vmul.f32 %v4140, 1.442695
    %v4162 = vpow.pop %v4161
    %v4163 = vmul.f32 %v4141, 1.442695
    %v4164 = vpow.pop %v4163
    %v4165 = vmul.f32 %v4142, 1.442695
    %v4166 = vpow.pop %v4165
    %v4167 = vmul.f32 %v4143, 1.442695
    %v4168 = vpow.pop %v4167
    %v4169 = vmul.f32 %v4144, 1.442695
    %v4170 = vpow.pop %v4169
    %v4171 = vmul.f32 %v4145, 1.442695
    %v4172 = vpow.pop %v4171
    %v4173 = vmul.f32 %v4146, 1.442695
    %v4174 = vpow.pop %v4173
    %v4175 = vmul.f32 %v4147, 1.442695
    %v4176 = vpow.pop %v4175
    %v4177 = vmul.f32 %v4148, 1.442695
    %v4178 = vpow.pop %v4177
    %v4179 = vmul.f32 %v4149, 1.442695
    %v4180 = vpow.pop %v4179
    %v4181 = vmul.f32 %v4150, 1.442695
    %v4182 = vpow.pop %v4181
    %vm4183 = vcmp.ge.f32.partialorder %v4057, 0.0
    %vm4184 = vcmp.ge.f32.partialorder %v4060, 0.0
    %vm4185 = vcmp.ge.f32.partialorder %v4065, 0.0
    %vm4186 = vcmp.ge.f32.partialorder %v4068, 0.0
    %vm4187 = vcmp.ge.f32.partialorder %v4073, 0.0
    %vm4188 = vcmp.ge.f32.partialorder %v4076, 0.0
    %vm4189 = vcmp.ge.f32.partialorder %v4081, 0.0
    %vm4190 = vcmp.ge.f32.partialorder %v4084, 0.0
    %vm4191 = vcmp.ge.f32.partialorder %v4089, 0.0
    %vm4192 = vcmp.ge.f32.partialorder %v4092, 0.0
    %vm4193 = vcmp.ge.f32.partialorder %v4097, 0.0
    %vm4194 = vcmp.ge.f32.partialorder %v4100, 0.0
    %vm4195 = vcmp.ge.f32.partialorder %v4105, 0.0
    %vm4196 = vcmp.ge.f32.partialorder %v4108, 0.0
    %vm4197 = vcmp.ge.f32.partialorder %v4113, 0.0
    %vm4198 = vcmp.ge.f32.partialorder %v4116, 0.0
    %v4199 = vsel %vm4183, 1.0, %v4152
    %v4200 = vsel %vm4184, 1.0, %v4154
    %v4201 = vsel %vm4185, 1.0, %v4156
    %v4202 = vsel %vm4186, 1.0, %v4158
    %v4203 = vsel %vm4187, 1.0, %v4160
    %v4204 = vsel %vm4188, 1.0, %v4162
    %v4205 = vsel %vm4189, 1.0, %v4164
    %v4206 = vsel %vm4190, 1.0, %v4166
    %v4207 = vsel %vm4191, 1.0, %v4168
    %v4208 = vsel %vm4192, 1.0, %v4170
    %v4209 = vsel %vm4193, 1.0, %v4172
    %v4210 = vsel %vm4194, 1.0, %v4174
    %v4211 = vsel %vm4195, 1.0, %v4176
    %v4212 = vsel %vm4196, 1.0, %v4178
    %v4213 = vsel %vm4197, 1.0, %v4180
    %v4214 = vsel %vm4198, 1.0, %v4182
    %v4215 = vadd.f32 %v4152, 1.0
    %v4216 = vadd.f32 %v4154, 1.0
    %v4217 = vadd.f32 %v4156, 1.0
    %v4218 = vadd.f32 %v4158, 1.0
    %v4219 = vadd.f32 %v4160, 1.0
    %v4220 = vadd.f32 %v4162, 1.0
    %v4221 = vadd.f32 %v4164, 1.0
    %v4222 = vadd.f32 %v4166, 1.0
    %v4223 = vadd.f32 %v4168, 1.0
    %v4224 = vadd.f32 %v4170, 1.0
    %v4225 = vadd.f32 %v4172, 1.0
    %v4226 = vadd.f32 %v4174, 1.0
    %v4227 = vadd.f32 %v4176, 1.0
    %v4228 = vadd.f32 %v4178, 1.0
    %v4229 = vadd.f32 %v4180, 1.0
    %v4230 = vadd.f32 %v4182, 1.0
    %v4231 = vrcp.pop %v4215
    %v4232 = vmul.f32 %v4199, %v4231
    %v4233 = vrcp.pop %v4216
    %v4234 = vmul.f32 %v4200, %v4233
    %v4235 = vrcp.pop %v4217
    %v4236 = vmul.f32 %v4201, %v4235
    %v4237 = vrcp.pop %v4218
    %v4238 = vmul.f32 %v4202, %v4237
    %v4239 = vrcp.pop %v4219
    %v4240 = vmul.f32 %v4203, %v4239
    %v4241 = vrcp.pop %v4220
    %v4242 = vmul.f32 %v4204, %v4241
    %v4243 = vrcp.pop %v4221
    %v4244 = vmul.f32 %v4205, %v4243
    %v4245 = vrcp.pop %v4222
    %v4246 = vmul.f32 %v4206, %v4245
    %v4247 = vrcp.pop %v4223
    %v4248 = vmul.f32 %v4207, %v4247
    %v4249 = vrcp.pop %v4224
    %v4250 = vmul.f32 %v4208, %v4249
    %v4251 = vrcp.pop %v4225
    %v4252 = vmul.f32 %v4209, %v4251
    %v4253 = vrcp.pop %v4226
    %v4254 = vmul.f32 %v4210, %v4253
    %v4255 = vrcp.pop %v4227
    %v4256 = vmul.f32 %v4211, %v4255
    %v4257 = vrcp.pop %v4228
    %v4258 = vmul.f32 %v4212, %v4257
    %v4259 = vrcp.pop %v4229
    %v4260 = vmul.f32 %v4213, %v4259
    %v4261 = vrcp.pop %v4230
    %v4262 = vmul.f32 %v4214, %v4261
    %4263 = vst [vmem:[#allocation10] sm:$0xff] %v4232
    %4264 = vst [vmem:[#allocation10 + $0x8] sm:$0xff] %v4234
    %4265 = vst [vmem:[#allocation10 + $0x10] sm:$0xff] %v4236
    %4266 = vst [vmem:[#allocation10 + $0x18] sm:$0xff] %v4238
    %4267 = vst [vmem:[#allocation10 + $0x20] sm:$0xff] %v4240
    %4268 = vst [vmem:[#allocation10 + $0x28] sm:$0xff] %v4242
    %4269 = vst [vmem:[#allocation10 + $0x30] sm:$0xff] %v4244
    %4270 = vst [vmem:[#allocation10 + $0x38] sm:$0xff] %v4246
    %4271 = vst [vmem:[#allocation10 + $0x40] sm:$0xff] %v4248
    %4272 = vst [vmem:[#allocation10 + $0x48] sm:$0xff] %v4250
    %4273 = vst [vmem:[#allocation10 + $0x50] sm:$0xff] %v4252
    %4274 = vst [vmem:[#allocation10 + $0x58] sm:$0xff] %v4254
    %4275 = vst [vmem:[#allocation10 + $0x60] sm:$0xff] %v4256
    %4276 = vst [vmem:[#allocation10 + $0x68] sm:$0xff] %v4258
    %4277 = vst [vmem:[#allocation10 + $0x70] sm:$0xff] %v4260
    %4278 = vst [vmem:[#allocation10 + $0x78] sm:$0xff] %v4262
    // Predicated region
    $region46: #{tpu_custom_call.1} parent=1 // pred_check
      _
    $region47: #{tpu_custom_call.1} parent=1 // pred_check_branch
      %4280 = sbr.rel (0) target = $region49
    $region48: #{tpu_custom_call.1} parent=1 // pred_region
      %s4282 = ssub.s32 2048, 2048
      %4283 = vsyncadd [#allocation4], %s4282
      %s4284 = sshll.u32 [#allocation10], 4
      %s4285 = int_to_ptr.vmem [resolvable:$true] %s4284
      %4290 = dma.vmem_to_hbm [thread:$0]  %s4285, 2048, %s7, [#allocation4], 128, 128, 8
    $region49: #{tpu_custom_call.1} parent=1 // pred_fallthru
      _
    // Predicated region
    $region50: #{tpu_custom_call.1} parent=1 // pred_check
      _
    $region51: #{tpu_custom_call.1} parent=1 // pred_check_branch
      %4292 = sbr.rel (0) target = $region53
    $region52: #{tpu_custom_call.1} parent=1 // pred_region
      %4293 = dma.done [#allocation4], 2048
    $region53: #{tpu_custom_call.1} parent=1 // pred_fallthru
      _
    %4294 = vsyncpa [#allocation3], 1
    %4295 = vsyncpa [#allocation6], 1
    %4296 = vsyncpa [#allocation9], 1
    %4297 = vsyncpa [#allocation4], 1

</llo_original>
